<compile_context>
chip_gen: v6e
topology: v6e:2x2x1
jax: 0.10.0
libtpu: 0.0.40
codegen_flags: <defaults>
</compile_context>

<pallas_src>
import functools

import numpy as np
import jax
import jax.numpy as jnp
from jax.experimental import pallas as pl
from jax.experimental.pallas import tpu as pltpu


# ----------------------------------------------------------------------------
# Fused kernel
# ----------------------------------------------------------------------------
def _dot(a, b):
    return jnp.dot(a, b, preferred_element_type=jnp.float32)


def _fused_unet1_kernel(
    x_ref,                                   # (1, H, W*C1)  f32   input / skip
    re_ref, ro_ref, ce_ref, co_ref,          # maxpool row/col selects   bf16
    s8_ref, s16_ref,                         # row-shift matrices        bf16
    b11_ref, sc11_ref, sh11_ref,             # down1 conv1 band + BN affine
    b12_ref, sc12_ref, sh12_ref,             # down1 conv2
    tb_ref, ru_ref, bup_ref,                 # up4 transpose-conv band/scatter/bias
    bs_ref, bu_ref, sc41_ref, sh41_ref,      # up4 conv1 (split-K: skip / up)
    b42_ref, sc42_ref, sh42_ref,             # up4 conv2
    bo_ref, bob_ref,                         # outc 1x1 conv band + bias
    o_ref,                                   # (1, H, W*ncls) f32
):
    bf16 = jnp.bfloat16

    def conv3x3(act_f32, s_ref, band_ref, sc_ref, sh_ref):
        """3x3 conv (pad=1) + folded BN + ReLU on an (H, W*Cin) slab."""
        actb = act_f32.astype(bf16)
        acc = None
        for dy in range(3):                       # static unroll over kernel rows
            lhs = actb if dy == 1 else _dot(s_ref[dy], actb).astype(bf16)
            term = _dot(lhs, band_ref[dy])
            acc = term if acc is None else acc + term
        y = acc * sc_ref[...] + sh_ref[...]
        return jnp.maximum(y, 0.0)

    # ---------------- input (also the skip connection x1) ----------------
    x1 = x_ref[0]                                 # (H, W*C1)
    x1b = x1.astype(bf16)

    # ---------------- down1: MaxPool2d(2) ----------------
    rows_e = _dot(re_ref[...], x1b)               # even rows
    rows_o = _dot(ro_ref[...], x1b)               # odd rows
    rmax = jnp.maximum(rows_e, rows_o).astype(bf16)
    pooled = jnp.maximum(_dot(rmax, ce_ref[...]),
                         _dot(rmax, co_ref[...]))              # (H/2, W/2*C1)

    # ---------------- down1: DoubleConv(C1 -> Cd) ----------------
    d1 = conv3x3(pooled, s8_ref, b11_ref, sc11_ref, sh11_ref)
    d2 = conv3x3(d1, s8_ref, b12_ref, sc12_ref, sh12_ref)      # (H/2, W/2*Cd)

    # ---------------- up4: ConvTranspose2d(k=2, s=2) ----------------
    d2b = d2.astype(bf16)
    up = None
    for a in range(2):                            # output row parity
        rows = _dot(ru_ref[a], d2b).astype(bf16)  # scatter rows i -> 2i+a (exact)
        t = _dot(rows, tb_ref[a])
        up = t if up is None else up + t
    up = up + bup_ref[...]                        # (H, W*C1)

    # ------- up4: DoubleConv(2*C1 -> C1); skip concat fused as split-K -------
    upb = up.astype(bf16)
    acc = None
    for dy in range(3):
        lhs_s = x1b if dy == 1 else _dot(s16_ref[dy], x1b).astype(bf16)
        lhs_u = upb if dy == 1 else _dot(s16_ref[dy], upb).astype(bf16)
        term = _dot(lhs_s, bs_ref[dy]) + _dot(lhs_u, bu_ref[dy])
        acc = term if acc is None else acc + term
    u1 = jnp.maximum(acc * sc41_ref[...] + sh41_ref[...], 0.0)
    u2 = conv3x3(u1, s16_ref, b42_ref, sc42_ref, sh42_ref)     # (H, W*C1)

    # ---------------- outc: 1x1 conv ----------------
    out = _dot(u2.astype(bf16), bo_ref[...]) + bob_ref[...]    # (H, W*ncls)
    o_ref[0] = out.astype(o_ref.dtype)


# ----------------------------------------------------------------------------
# Parameter packing (done ONCE, outside jit): fold conv weights / BN / pooling /
# stride-2 interleave into band / selection / shift matrices for the kernel.
# ----------------------------------------------------------------------------
def _conv_band(w_hwio, width):
    """(3,3,Cin,Cout) conv weight -> (3, width*Cin, width*Cout) banded matrices."""
    _, _, cin, cout = w_hwio.shape
    wnp = np.asarray(w_hwio, np.float32)
    band = np.zeros((3, width * cin, width * cout), np.float32)
    for dy in range(3):
        for dx in range(3):
            for wo in range(width):
                wi = wo + dx - 1
                if 0 <= wi < width:
                    band[dy, wi * cin:(wi + 1) * cin,
                         wo * cout:(wo + 1) * cout] = wnp[dy, dx]
    return band


def _shift_mats(height):
    """S[dy] @ act == act shifted by dy-1 rows with zero padding."""
    s = np.zeros((3, height, height), np.float32)
    for dy in range(3):
        for ho in range(height):
            hi = ho + dy - 1
            if 0 <= hi < height:
                s[dy, ho, hi] = 1.0
    return s


def _pool_selects(height, width, c):
    re = np.zeros((height // 2, height), np.float32)
    ro = np.zeros_like(re)
    for i in range(height // 2):
        re[i, 2 * i] = 1.0
        ro[i, 2 * i + 1] = 1.0
    ce = np.zeros((width * c, (width // 2) * c), np.float32)
    co = np.zeros_like(ce)
    for j in range(width // 2):
        for ch in range(c):
            ce[(2 * j) * c + ch, j * c + ch] = 1.0
            co[(2 * j + 1) * c + ch, j * c + ch] = 1.0
    return re, ro, ce, co


def _deconv_mats(w_abio, h2, w2):
    """ConvTranspose2d(k=2,s=2) weight (2,2,Cd,Cout) -> per-parity band + row scatter."""
    _, _, cd, cout = w_abio.shape
    wnp = np.asarray(w_abio, np.float32)
    tb = np.zeros((2, w2 * cd, 2 * w2 * cout), np.float32)
    for a in range(2):
        for b in range(2):
            for j in range(w2):
                tb[a, j * cd:(j + 1) * cd,
                   (2 * j + b) * cout:(2 * j + b + 1) * cout] = wnp[a, b]
    ru = np.zeros((2, 2 * h2, h2), np.float32)
    for a in range(2):
        for i in range(h2):
            ru[a, 2 * i + a, i] = 1.0
    return tb, ru


def _outc_band(wo, width):
    cin, ncls = wo.shape
    wnp = np.asarray(wo, np.float32)
    bo = np.zeros((width * cin, width * ncls), np.float32)
    for j in range(width):
        bo[j * cin:(j + 1) * cin, j * ncls:(j + 1) * ncls] = wnp
    return bo


def _affine(conv_bn_params, width, eps=1e-5):
    """Fold eval-mode BN + conv bias into per-lane scale/shift, tiled over w."""
    w, b, gamma, beta, mean, var = (np.asarray(t, np.float32) for t in conv_bn_params)
    del w
    scale = gamma / np.sqrt(var + eps)
    shift = (b - mean) * scale + beta
    return np.tile(scale, width)[None, :], np.tile(shift, width)[None, :]


_PARAM_ORDER = ("re", "ro", "ce", "co", "s8", "s16",
                "b11", "sc11", "sh11", "b12", "sc12", "sh12",
                "tb", "ru", "bup",
                "bs", "bu", "sc41", "sh41",
                "b42", "sc42", "sh42",
                "bo", "bob")


def pack_params(raw, *, h=16, w=16, c_in=4):
    h2, w2 = h // 2, w // 2
    bf = lambda a: jnp.asarray(a, jnp.bfloat16)      # MXU operands
    f32 = lambda a: jnp.asarray(a, jnp.float32)      # epilogue affine / biases

    re, ro, ce, co = _pool_selects(h, w, c_in)
    sc11, sh11 = _affine(raw["down1_c1"], w2)
    sc12, sh12 = _affine(raw["down1_c2"], w2)
    sc41, sh41 = _affine(raw["up4_c1"], w)
    sc42, sh42 = _affine(raw["up4_c2"], w)
    w41 = np.asarray(raw["up4_c1"][0], np.float32)   # (3,3,2*c_in,c_in)
    tb, ru = _deconv_mats(np.asarray(raw["up4_upT_w"]), h2, w2)

    return {
        "re": bf(re), "ro": bf(ro), "ce": bf(ce), "co": bf(co),
        "s8": bf(_shift_mats(h2)), "s16": bf(_shift_mats(h)),
        "b11": bf(_conv_band(np.asarray(raw["down1_c1"][0]), w2)),
        "sc11": f32(sc11), "sh11": f32(sh11),
        "b12": bf(_conv_band(np.asarray(raw["down1_c2"][0]), w2)),
        "sc12": f32(sc12), "sh12": f32(sh12),
        "tb": bf(tb), "ru": bf(ru),
        "bup": f32(np.tile(np.asarray(raw["up4_upT_b"], np.float32), w)[None, :]),
        "bs": bf(_conv_band(w41[:, :, :c_in, :], w)),   # skip-channel half of K
        "bu": bf(_conv_band(w41[:, :, c_in:, :], w)),   # upsampled half of K
        "sc41": f32(sc41), "sh41": f32(sh41),
        "b42": bf(_conv_band(np.asarray(raw["up4_c2"][0]), w)),
        "sc42": f32(sc42), "sh42": f32(sh42),
        "bo": bf(_outc_band(np.asarray(raw["outc_w"]), w)),
        "bob": f32(np.tile(np.asarray(raw["outc_b"], np.float32), w)[None, :]),
    }


# ----------------------------------------------------------------------------
# Raw parameters (same deterministic synthetic init / shapes as the spec)
# ----------------------------------------------------------------------------
def init_params(key, c_in=4, c_down=8, n_classes=2):
    def conv_bn(k, cin, cout):
        kw, kb = jax.random.split(k)
        w = jax.random.normal(kw, (3, 3, cin, cout), jnp.float32) * 0.1
        b = jax.random.normal(kb, (cout,), jnp.float32) * 0.1
        gamma = jnp.full((cout,), 1.1, jnp.float32)
        beta = jnp.full((cout,), 0.05, jnp.float32)
        mean = jnp.full((cout,), 0.02, jnp.float32)
        var = jnp.full((cout,), 0.9, jnp.float32)
        return (w, b, gamma, beta, mean, var)

    ks = jax.random.split(key, 8)
    return {
        "down1_c1": conv_bn(ks[0], c_in, c_down),
        "down1_c2": conv_bn(ks[1], c_down, c_down),
        "up4_upT_w": jax.random.normal(ks[2], (2, 2, c_down, c_in), jnp.float32) * 0.1,
        "up4_upT_b": jax.random.normal(ks[3], (c_in,), jnp.float32) * 0.1,
        "up4_c1": conv_bn(ks[4], 2 * c_in, c_in),
        "up4_c2": conv_bn(ks[5], c_in, c_in),
        "outc_w": jax.random.normal(ks[6], (c_in, n_classes), jnp.float32) * 0.1,
        "outc_b": jax.random.normal(ks[7], (n_classes,), jnp.float32) * 0.1,
    }


# ----------------------------------------------------------------------------
# Forward: one pallas_call, gridded over batch (parallel for v7x's 2 TCs)
# ----------------------------------------------------------------------------
def _const_spec(shape):
    nd = len(shape)
    return pl.BlockSpec(shape, lambda i, _nd=nd: (0,) * _nd)


def net_convert1_forward(packed, x_nchw):
    n, c1, h, w = x_nchw.shape
    ncls = packed["bo"].shape[-1] // w
    x = jnp.transpose(x_nchw, (0, 2, 3, 1)).reshape(n, h, w * c1)   # (N, H, W*C1)
    params = [packed[k] for k in _PARAM_ORDER]

    out = pl.pallas_call(
        _fused_unet1_kernel,
        out_shape=jax.ShapeDtypeStruct((n, h, w * ncls), jnp.float32),
        grid=(n,),
        in_specs=[pl.BlockSpec((1, h, w * c1), lambda i: (i, 0, 0))]
        + [_const_spec(p.shape) for p in params],
        out_specs=pl.BlockSpec((1, h, w * ncls), lambda i: (i, 0, 0)),
        compiler_params=pltpu.CompilerParams(
            dimension_semantics=("parallel",)),
    )(x, *params)

    return jnp.transpose(out.reshape(n, h, w, ncls), (0, 3, 1, 2))  # NCHW


if __name__ == "__main__":
    key = jax.random.PRNGKey(0)
    kx, kp = jax.random.split(key)
    x = jax.random.normal(kx, (2, 4, 16, 16), jnp.float32)          # NCHW input
    raw = init_params(kp, c_in=4, c_down=8, n_classes=2)
    packed = pack_params(raw, h=16, w=16, c_in=4)

    fwd = jax.jit(functools.partial(net_convert1_forward, packed))
    out = fwd(x)
    jax.block_until_ready(out)
    assert out.shape == (2, 2, 16, 16), out.shape
    assert out.dtype == jnp.float32
    print("KERNEL_OK")
</pallas_src>

<mosaic_0001>
module attributes {stable_mosaic.version = 11 : i64} {
  func.func @_fused_unet1_kernel(%arg0: i32, %arg1: memref<1x16x64xf32, #tpu.memory_space<vmem>>, %arg2: memref<8x16xbf16, #tpu.memory_space<vmem>>, %arg3: memref<8x16xbf16, #tpu.memory_space<vmem>>, %arg4: memref<64x32xbf16, #tpu.memory_space<vmem>>, %arg5: memref<64x32xbf16, #tpu.memory_space<vmem>>, %arg6: memref<3x8x8xbf16, #tpu.memory_space<vmem>>, %arg7: memref<3x16x16xbf16, #tpu.memory_space<vmem>>, %arg8: memref<3x32x64xbf16, #tpu.memory_space<vmem>>, %arg9: memref<1x64xf32, #tpu.memory_space<vmem>>, %arg10: memref<1x64xf32, #tpu.memory_space<vmem>>, %arg11: memref<3x64x64xbf16, #tpu.memory_space<vmem>>, %arg12: memref<1x64xf32, #tpu.memory_space<vmem>>, %arg13: memref<1x64xf32, #tpu.memory_space<vmem>>, %arg14: memref<2x64x64xbf16, #tpu.memory_space<vmem>>, %arg15: memref<2x16x8xbf16, #tpu.memory_space<vmem>>, %arg16: memref<1x64xf32, #tpu.memory_space<vmem>>, %arg17: memref<3x64x64xbf16, #tpu.memory_space<vmem>>, %arg18: memref<3x64x64xbf16, #tpu.memory_space<vmem>>, %arg19: memref<1x64xf32, #tpu.memory_space<vmem>>, %arg20: memref<1x64xf32, #tpu.memory_space<vmem>>, %arg21: memref<3x64x64xbf16, #tpu.memory_space<vmem>>, %arg22: memref<1x64xf32, #tpu.memory_space<vmem>>, %arg23: memref<1x64xf32, #tpu.memory_space<vmem>>, %arg24: memref<64x32xbf16, #tpu.memory_space<vmem>>, %arg25: memref<1x32xf32, #tpu.memory_space<vmem>>, %arg26: memref<1x16x32xf32, #tpu.memory_space<vmem>>) attributes {dimension_semantics = [#tpu.dimension_semantics<parallel>], iteration_bounds = array<i64: 2>, scalar_prefetch = 0 : i64, scratch_operands = 0 : i64, tpu.core_type = #tpu.core_type<tc>, window_params = [{transform_indices = @transform_0, window_bounds = array<i64: 1, 16, 64>}, {pipeline_mode = #tpu.pipeline_mode<synchronous>, transform_indices = @transform_1, window_bounds = array<i64: 8, 16>}, {pipeline_mode = #tpu.pipeline_mode<synchronous>, transform_indices = @transform_2, window_bounds = array<i64: 8, 16>}, {pipeline_mode = #tpu.pipeline_mode<synchronous>, transform_indices = @transform_3, window_bounds = array<i64: 64, 32>}, {pipeline_mode = #tpu.pipeline_mode<synchronous>, transform_indices = @transform_4, window_bounds = array<i64: 64, 32>}, {pipeline_mode = #tpu.pipeline_mode<synchronous>, transform_indices = @transform_5, window_bounds = array<i64: 3, 8, 8>}, {pipeline_mode = #tpu.pipeline_mode<synchronous>, transform_indices = @transform_6, window_bounds = array<i64: 3, 16, 16>}, {pipeline_mode = #tpu.pipeline_mode<synchronous>, transform_indices = @transform_7, window_bounds = array<i64: 3, 32, 64>}, {pipeline_mode = #tpu.pipeline_mode<synchronous>, transform_indices = @transform_8, window_bounds = array<i64: 1, 64>}, {pipeline_mode = #tpu.pipeline_mode<synchronous>, transform_indices = @transform_9, window_bounds = array<i64: 1, 64>}, {pipeline_mode = #tpu.pipeline_mode<synchronous>, transform_indices = @transform_10, window_bounds = array<i64: 3, 64, 64>}, {pipeline_mode = #tpu.pipeline_mode<synchronous>, transform_indices = @transform_11, window_bounds = array<i64: 1, 64>}, {pipeline_mode = #tpu.pipeline_mode<synchronous>, transform_indices = @transform_12, window_bounds = array<i64: 1, 64>}, {pipeline_mode = #tpu.pipeline_mode<synchronous>, transform_indices = @transform_13, window_bounds = array<i64: 2, 64, 64>}, {pipeline_mode = #tpu.pipeline_mode<synchronous>, transform_indices = @transform_14, window_bounds = array<i64: 2, 16, 8>}, {pipeline_mode = #tpu.pipeline_mode<synchronous>, transform_indices = @transform_15, window_bounds = array<i64: 1, 64>}, {pipeline_mode = #tpu.pipeline_mode<synchronous>, transform_indices = @transform_16, window_bounds = array<i64: 3, 64, 64>}, {pipeline_mode = #tpu.pipeline_mode<synchronous>, transform_indices = @transform_17, window_bounds = array<i64: 3, 64, 64>}, {pipeline_mode = #tpu.pipeline_mode<synchronous>, transform_indices = @transform_18, window_bounds = array<i64: 1, 64>}, {pipeline_mode = #tpu.pipeline_mode<synchronous>, transform_indices = @transform_19, window_bounds = array<i64: 1, 64>}, {pipeline_mode = #tpu.pipeline_mode<synchronous>, transform_indices = @transform_20, window_bounds = array<i64: 3, 64, 64>}, {pipeline_mode = #tpu.pipeline_mode<synchronous>, transform_indices = @transform_21, window_bounds = array<i64: 1, 64>}, {pipeline_mode = #tpu.pipeline_mode<synchronous>, transform_indices = @transform_22, window_bounds = array<i64: 1, 64>}, {pipeline_mode = #tpu.pipeline_mode<synchronous>, transform_indices = @transform_23, window_bounds = array<i64: 64, 32>}, {pipeline_mode = #tpu.pipeline_mode<synchronous>, transform_indices = @transform_24, window_bounds = array<i64: 1, 32>}, {transform_indices = @transform_25, window_bounds = array<i64: 1, 16, 32>}]} {
    %c0 = arith.constant 0 : index
    %c0_0 = arith.constant 0 : index
    %c0_1 = arith.constant 0 : index
    %0 = vector.load %arg1[%c0, %c0_0, %c0_1] : memref<1x16x64xf32, #tpu.memory_space<vmem>>, vector<1x16x64xf32>
    %1 = vector.shape_cast %0 : vector<1x16x64xf32> to vector<16x64xf32>
    %2 = arith.truncf %1 : vector<16x64xf32> to vector<16x64xbf16>
    %c0_2 = arith.constant 0 : index
    %c0_3 = arith.constant 0 : index
    %3 = vector.load %arg2[%c0_2, %c0_3] : memref<8x16xbf16, #tpu.memory_space<vmem>>, vector<8x16xbf16>
    %cst = arith.constant dense<0.000000e+00> : vector<8x64xf32>
    %4 = tpu.matmul %3, %2, %cst {dimension_numbers = #tpu.dot_dimension_numbers<[1], [0], [0], [1], [0, 0, 1, 1], [], []>} : vector<8x16xbf16>, vector<16x64xbf16>, vector<8x64xf32> -> vector<8x64xf32>
    %c0_4 = arith.constant 0 : index
    %c0_5 = arith.constant 0 : index
    %5 = vector.load %arg3[%c0_4, %c0_5] : memref<8x16xbf16, #tpu.memory_space<vmem>>, vector<8x16xbf16>
    %cst_6 = arith.constant dense<0.000000e+00> : vector<8x64xf32>
    %6 = tpu.matmul %5, %2, %cst_6 {dimension_numbers = #tpu.dot_dimension_numbers<[1], [0], [0], [1], [0, 0, 1, 1], [], []>} : vector<8x16xbf16>, vector<16x64xbf16>, vector<8x64xf32> -> vector<8x64xf32>
    %7 = arith.maximumf %4, %6 : vector<8x64xf32>
    %8 = arith.truncf %7 : vector<8x64xf32> to vector<8x64xbf16>
    %c0_7 = arith.constant 0 : index
    %c0_8 = arith.constant 0 : index
    %9 = vector.load %arg4[%c0_7, %c0_8] : memref<64x32xbf16, #tpu.memory_space<vmem>>, vector<64x32xbf16>
    %cst_9 = arith.constant dense<0.000000e+00> : vector<8x32xf32>
    %10 = tpu.matmul %8, %9, %cst_9 {dimension_numbers = #tpu.dot_dimension_numbers<[1], [0], [0], [1], [0, 0, 1, 1], [], []>} : vector<8x64xbf16>, vector<64x32xbf16>, vector<8x32xf32> -> vector<8x32xf32>
    %c0_10 = arith.constant 0 : index
    %c0_11 = arith.constant 0 : index
    %11 = vector.load %arg5[%c0_10, %c0_11] : memref<64x32xbf16, #tpu.memory_space<vmem>>, vector<64x32xbf16>
    %cst_12 = arith.constant dense<0.000000e+00> : vector<8x32xf32>
    %12 = tpu.matmul %8, %11, %cst_12 {dimension_numbers = #tpu.dot_dimension_numbers<[1], [0], [0], [1], [0, 0, 1, 1], [], []>} : vector<8x64xbf16>, vector<64x32xbf16>, vector<8x32xf32> -> vector<8x32xf32>
    %13 = arith.maximumf %10, %12 : vector<8x32xf32>
    %14 = arith.truncf %13 : vector<8x32xf32> to vector<8x32xbf16>
    %c0_13 = arith.constant 0 : index
    %c0_14 = arith.constant 0 : index
    %c0_15 = arith.constant 0 : index
    %15 = vector.load %arg6[%c0_13, %c0_14, %c0_15] : memref<3x8x8xbf16, #tpu.memory_space<vmem>>, vector<1x8x8xbf16>
    %16 = vector.shape_cast %15 : vector<1x8x8xbf16> to vector<8x8xbf16>
    %cst_16 = arith.constant dense<0.000000e+00> : vector<8x32xf32>
    %17 = tpu.matmul %16, %14, %cst_16 {dimension_numbers = #tpu.dot_dimension_numbers<[1], [0], [0], [1], [0, 0, 1, 1], [], []>} : vector<8x8xbf16>, vector<8x32xbf16>, vector<8x32xf32> -> vector<8x32xf32>
    %18 = arith.truncf %17 : vector<8x32xf32> to vector<8x32xbf16>
    %c0_17 = arith.constant 0 : index
    %c0_18 = arith.constant 0 : index
    %c0_19 = arith.constant 0 : index
    %19 = vector.load %arg8[%c0_17, %c0_18, %c0_19] : memref<3x32x64xbf16, #tpu.memory_space<vmem>>, vector<1x32x64xbf16>
    %20 = vector.shape_cast %19 : vector<1x32x64xbf16> to vector<32x64xbf16>
    %cst_20 = arith.constant dense<0.000000e+00> : vector<8x64xf32>
    %21 = tpu.matmul %18, %20, %cst_20 {dimension_numbers = #tpu.dot_dimension_numbers<[1], [0], [0], [1], [0, 0, 1, 1], [], []>} : vector<8x32xbf16>, vector<32x64xbf16>, vector<8x64xf32> -> vector<8x64xf32>
    %c1 = arith.constant 1 : index
    %c0_21 = arith.constant 0 : index
    %c0_22 = arith.constant 0 : index
    %22 = vector.load %arg8[%c1, %c0_21, %c0_22] : memref<3x32x64xbf16, #tpu.memory_space<vmem>>, vector<1x32x64xbf16>
    %23 = vector.shape_cast %22 : vector<1x32x64xbf16> to vector<32x64xbf16>
    %cst_23 = arith.constant dense<0.000000e+00> : vector<8x64xf32>
    %24 = tpu.matmul %14, %23, %cst_23 {dimension_numbers = #tpu.dot_dimension_numbers<[1], [0], [0], [1], [0, 0, 1, 1], [], []>} : vector<8x32xbf16>, vector<32x64xbf16>, vector<8x64xf32> -> vector<8x64xf32>
    %25 = arith.addf %21, %24 : vector<8x64xf32>
    %c2 = arith.constant 2 : index
    %c0_24 = arith.constant 0 : index
    %c0_25 = arith.constant 0 : index
    %26 = vector.load %arg6[%c2, %c0_24, %c0_25] : memref<3x8x8xbf16, #tpu.memory_space<vmem>>, vector<1x8x8xbf16>
    %27 = vector.shape_cast %26 : vector<1x8x8xbf16> to vector<8x8xbf16>
    %cst_26 = arith.constant dense<0.000000e+00> : vector<8x32xf32>
    %28 = tpu.matmul %27, %14, %cst_26 {dimension_numbers = #tpu.dot_dimension_numbers<[1], [0], [0], [1], [0, 0, 1, 1], [], []>} : vector<8x8xbf16>, vector<8x32xbf16>, vector<8x32xf32> -> vector<8x32xf32>
    %29 = arith.truncf %28 : vector<8x32xf32> to vector<8x32xbf16>
    %c2_27 = arith.constant 2 : index
    %c0_28 = arith.constant 0 : index
    %c0_29 = arith.constant 0 : index
    %30 = vector.load %arg8[%c2_27, %c0_28, %c0_29] : memref<3x32x64xbf16, #tpu.memory_space<vmem>>, vector<1x32x64xbf16>
    %31 = vector.shape_cast %30 : vector<1x32x64xbf16> to vector<32x64xbf16>
    %cst_30 = arith.constant dense<0.000000e+00> : vector<8x64xf32>
    %32 = tpu.matmul %29, %31, %cst_30 {dimension_numbers = #tpu.dot_dimension_numbers<[1], [0], [0], [1], [0, 0, 1, 1], [], []>} : vector<8x32xbf16>, vector<32x64xbf16>, vector<8x64xf32> -> vector<8x64xf32>
    %33 = arith.addf %25, %32 : vector<8x64xf32>
    %c0_31 = arith.constant 0 : index
    %c0_32 = arith.constant 0 : index
    %34 = vector.load %arg9[%c0_31, %c0_32] : memref<1x64xf32, #tpu.memory_space<vmem>>, vector<1x64xf32>
    %35 = vector.broadcast %34 : vector<1x64xf32> to vector<8x64xf32>
    %36 = arith.mulf %33, %35 : vector<8x64xf32>
    %c0_33 = arith.constant 0 : index
    %c0_34 = arith.constant 0 : index
    %37 = vector.load %arg10[%c0_33, %c0_34] : memref<1x64xf32, #tpu.memory_space<vmem>>, vector<1x64xf32>
    %38 = vector.broadcast %37 : vector<1x64xf32> to vector<8x64xf32>
    %39 = arith.addf %36, %38 : vector<8x64xf32>
    %cst_35 = arith.constant 0.000000e+00 : f32
    %40 = vector.broadcast %cst_35 : f32 to vector<8x64xf32>
    %41 = arith.maximumf %39, %40 : vector<8x64xf32>
    %42 = arith.truncf %41 : vector<8x64xf32> to vector<8x64xbf16>
    %c0_36 = arith.constant 0 : index
    %c0_37 = arith.constant 0 : index
    %c0_38 = arith.constant 0 : index
    %43 = vector.load %arg6[%c0_36, %c0_37, %c0_38] : memref<3x8x8xbf16, #tpu.memory_space<vmem>>, vector<1x8x8xbf16>
    %44 = vector.shape_cast %43 : vector<1x8x8xbf16> to vector<8x8xbf16>
    %cst_39 = arith.constant dense<0.000000e+00> : vector<8x64xf32>
    %45 = tpu.matmul %44, %42, %cst_39 {dimension_numbers = #tpu.dot_dimension_numbers<[1], [0], [0], [1], [0, 0, 1, 1], [], []>} : vector<8x8xbf16>, vector<8x64xbf16>, vector<8x64xf32> -> vector<8x64xf32>
    %46 = arith.truncf %45 : vector<8x64xf32> to vector<8x64xbf16>
    %c0_40 = arith.constant 0 : index
    %c0_41 = arith.constant 0 : index
    %c0_42 = arith.constant 0 : index
    %47 = vector.load %arg11[%c0_40, %c0_41, %c0_42] : memref<3x64x64xbf16, #tpu.memory_space<vmem>>, vector<1x64x64xbf16>
    %48 = vector.shape_cast %47 : vector<1x64x64xbf16> to vector<64x64xbf16>
    %cst_43 = arith.constant dense<0.000000e+00> : vector<8x64xf32>
    %49 = tpu.matmul %46, %48, %cst_43 {dimension_numbers = #tpu.dot_dimension_numbers<[1], [0], [0], [1], [0, 0, 1, 1], [], []>} : vector<8x64xbf16>, vector<64x64xbf16>, vector<8x64xf32> -> vector<8x64xf32>
    %c1_44 = arith.constant 1 : index
    %c0_45 = arith.constant 0 : index
    %c0_46 = arith.constant 0 : index
    %50 = vector.load %arg11[%c1_44, %c0_45, %c0_46] : memref<3x64x64xbf16, #tpu.memory_space<vmem>>, vector<1x64x64xbf16>
    %51 = vector.shape_cast %50 : vector<1x64x64xbf16> to vector<64x64xbf16>
    %cst_47 = arith.constant dense<0.000000e+00> : vector<8x64xf32>
    %52 = tpu.matmul %42, %51, %cst_47 {dimension_numbers = #tpu.dot_dimension_numbers<[1], [0], [0], [1], [0, 0, 1, 1], [], []>} : vector<8x64xbf16>, vector<64x64xbf16>, vector<8x64xf32> -> vector<8x64xf32>
    %53 = arith.addf %49, %52 : vector<8x64xf32>
    %c2_48 = arith.constant 2 : index
    %c0_49 = arith.constant 0 : index
    %c0_50 = arith.constant 0 : index
    %54 = vector.load %arg6[%c2_48, %c0_49, %c0_50] : memref<3x8x8xbf16, #tpu.memory_space<vmem>>, vector<1x8x8xbf16>
    %55 = vector.shape_cast %54 : vector<1x8x8xbf16> to vector<8x8xbf16>
    %cst_51 = arith.constant dense<0.000000e+00> : vector<8x64xf32>
    %56 = tpu.matmul %55, %42, %cst_51 {dimension_numbers = #tpu.dot_dimension_numbers<[1], [0], [0], [1], [0, 0, 1, 1], [], []>} : vector<8x8xbf16>, vector<8x64xbf16>, vector<8x64xf32> -> vector<8x64xf32>
    %57 = arith.truncf %56 : vector<8x64xf32> to vector<8x64xbf16>
    %c2_52 = arith.constant 2 : index
    %c0_53 = arith.constant 0 : index
    %c0_54 = arith.constant 0 : index
    %58 = vector.load %arg11[%c2_52, %c0_53, %c0_54] : memref<3x64x64xbf16, #tpu.memory_space<vmem>>, vector<1x64x64xbf16>
    %59 = vector.shape_cast %58 : vector<1x64x64xbf16> to vector<64x64xbf16>
    %cst_55 = arith.constant dense<0.000000e+00> : vector<8x64xf32>
    %60 = tpu.matmul %57, %59, %cst_55 {dimension_numbers = #tpu.dot_dimension_numbers<[1], [0], [0], [1], [0, 0, 1, 1], [], []>} : vector<8x64xbf16>, vector<64x64xbf16>, vector<8x64xf32> -> vector<8x64xf32>
    %61 = arith.addf %53, %60 : vector<8x64xf32>
    %c0_56 = arith.constant 0 : index
    %c0_57 = arith.constant 0 : index
    %62 = vector.load %arg12[%c0_56, %c0_57] : memref<1x64xf32, #tpu.memory_space<vmem>>, vector<1x64xf32>
    %63 = vector.broadcast %62 : vector<1x64xf32> to vector<8x64xf32>
    %64 = arith.mulf %61, %63 : vector<8x64xf32>
    %c0_58 = arith.constant 0 : index
    %c0_59 = arith.constant 0 : index
    %65 = vector.load %arg13[%c0_58, %c0_59] : memref<1x64xf32, #tpu.memory_space<vmem>>, vector<1x64xf32>
    %66 = vector.broadcast %65 : vector<1x64xf32> to vector<8x64xf32>
    %67 = arith.addf %64, %66 : vector<8x64xf32>
    %cst_60 = arith.constant 0.000000e+00 : f32
    %68 = vector.broadcast %cst_60 : f32 to vector<8x64xf32>
    %69 = arith.maximumf %67, %68 : vector<8x64xf32>
    %70 = arith.truncf %69 : vector<8x64xf32> to vector<8x64xbf16>
    %c0_61 = arith.constant 0 : index
    %c0_62 = arith.constant 0 : index
    %c0_63 = arith.constant 0 : index
    %71 = vector.load %arg15[%c0_61, %c0_62, %c0_63] : memref<2x16x8xbf16, #tpu.memory_space<vmem>>, vector<1x16x8xbf16>
    %72 = vector.shape_cast %71 : vector<1x16x8xbf16> to vector<16x8xbf16>
    %cst_64 = arith.constant dense<0.000000e+00> : vector<16x64xf32>
    %73 = tpu.matmul %72, %70, %cst_64 {dimension_numbers = #tpu.dot_dimension_numbers<[1], [0], [0], [1], [0, 0, 1, 1], [], []>} : vector<16x8xbf16>, vector<8x64xbf16>, vector<16x64xf32> -> vector<16x64xf32>
    %74 = arith.truncf %73 : vector<16x64xf32> to vector<16x64xbf16>
    %c0_65 = arith.constant 0 : index
    %c0_66 = arith.constant 0 : index
    %c0_67 = arith.constant 0 : index
    %75 = vector.load %arg14[%c0_65, %c0_66, %c0_67] : memref<2x64x64xbf16, #tpu.memory_space<vmem>>, vector<1x64x64xbf16>
    %76 = vector.shape_cast %75 : vector<1x64x64xbf16> to vector<64x64xbf16>
    %cst_68 = arith.constant dense<0.000000e+00> : vector<16x64xf32>
    %77 = tpu.matmul %74, %76, %cst_68 {dimension_numbers = #tpu.dot_dimension_numbers<[1], [0], [0], [1], [0, 0, 1, 1], [], []>} : vector<16x64xbf16>, vector<64x64xbf16>, vector<16x64xf32> -> vector<16x64xf32>
    %c1_69 = arith.constant 1 : index
    %c0_70 = arith.constant 0 : index
    %c0_71 = arith.constant 0 : index
    %78 = vector.load %arg15[%c1_69, %c0_70, %c0_71] : memref<2x16x8xbf16, #tpu.memory_space<vmem>>, vector<1x16x8xbf16>
    %79 = vector.shape_cast %78 : vector<1x16x8xbf16> to vector<16x8xbf16>
    %cst_72 = arith.constant dense<0.000000e+00> : vector<16x64xf32>
    %80 = tpu.matmul %79, %70, %cst_72 {dimension_numbers = #tpu.dot_dimension_numbers<[1], [0], [0], [1], [0, 0, 1, 1], [], []>} : vector<16x8xbf16>, vector<8x64xbf16>, vector<16x64xf32> -> vector<16x64xf32>
    %81 = arith.truncf %80 : vector<16x64xf32> to vector<16x64xbf16>
    %c1_73 = arith.constant 1 : index
    %c0_74 = arith.constant 0 : index
    %c0_75 = arith.constant 0 : index
    %82 = vector.load %arg14[%c1_73, %c0_74, %c0_75] : memref<2x64x64xbf16, #tpu.memory_space<vmem>>, vector<1x64x64xbf16>
    %83 = vector.shape_cast %82 : vector<1x64x64xbf16> to vector<64x64xbf16>
    %cst_76 = arith.constant dense<0.000000e+00> : vector<16x64xf32>
    %84 = tpu.matmul %81, %83, %cst_76 {dimension_numbers = #tpu.dot_dimension_numbers<[1], [0], [0], [1], [0, 0, 1, 1], [], []>} : vector<16x64xbf16>, vector<64x64xbf16>, vector<16x64xf32> -> vector<16x64xf32>
    %85 = arith.addf %77, %84 : vector<16x64xf32>
    %c0_77 = arith.constant 0 : index
    %c0_78 = arith.constant 0 : index
    %86 = vector.load %arg16[%c0_77, %c0_78] : memref<1x64xf32, #tpu.memory_space<vmem>>, vector<1x64xf32>
    %87 = vector.broadcast %86 : vector<1x64xf32> to vector<16x64xf32>
    %88 = arith.addf %85, %87 : vector<16x64xf32>
    %89 = arith.truncf %88 : vector<16x64xf32> to vector<16x64xbf16>
    %c0_79 = arith.constant 0 : index
    %c0_80 = arith.constant 0 : index
    %c0_81 = arith.constant 0 : index
    %90 = vector.load %arg7[%c0_79, %c0_80, %c0_81] : memref<3x16x16xbf16, #tpu.memory_space<vmem>>, vector<1x16x16xbf16>
    %91 = vector.shape_cast %90 : vector<1x16x16xbf16> to vector<16x16xbf16>
    %cst_82 = arith.constant dense<0.000000e+00> : vector<16x64xf32>
    %92 = tpu.matmul %91, %2, %cst_82 {dimension_numbers = #tpu.dot_dimension_numbers<[1], [0], [0], [1], [0, 0, 1, 1], [], []>} : vector<16x16xbf16>, vector<16x64xbf16>, vector<16x64xf32> -> vector<16x64xf32>
    %93 = arith.truncf %92 : vector<16x64xf32> to vector<16x64xbf16>
    %c0_83 = arith.constant 0 : index
    %c0_84 = arith.constant 0 : index
    %c0_85 = arith.constant 0 : index
    %94 = vector.load %arg7[%c0_83, %c0_84, %c0_85] : memref<3x16x16xbf16, #tpu.memory_space<vmem>>, vector<1x16x16xbf16>
    %95 = vector.shape_cast %94 : vector<1x16x16xbf16> to vector<16x16xbf16>
    %cst_86 = arith.constant dense<0.000000e+00> : vector<16x64xf32>
    %96 = tpu.matmul %95, %89, %cst_86 {dimension_numbers = #tpu.dot_dimension_numbers<[1], [0], [0], [1], [0, 0, 1, 1], [], []>} : vector<16x16xbf16>, vector<16x64xbf16>, vector<16x64xf32> -> vector<16x64xf32>
    %97 = arith.truncf %96 : vector<16x64xf32> to vector<16x64xbf16>
    %c0_87 = arith.constant 0 : index
    %c0_88 = arith.constant 0 : index
    %c0_89 = arith.constant 0 : index
    %98 = vector.load %arg17[%c0_87, %c0_88, %c0_89] : memref<3x64x64xbf16, #tpu.memory_space<vmem>>, vector<1x64x64xbf16>
    %99 = vector.shape_cast %98 : vector<1x64x64xbf16> to vector<64x64xbf16>
    %cst_90 = arith.constant dense<0.000000e+00> : vector<16x64xf32>
    %100 = tpu.matmul %93, %99, %cst_90 {dimension_numbers = #tpu.dot_dimension_numbers<[1], [0], [0], [1], [0, 0, 1, 1], [], []>} : vector<16x64xbf16>, vector<64x64xbf16>, vector<16x64xf32> -> vector<16x64xf32>
    %c0_91 = arith.constant 0 : index
    %c0_92 = arith.constant 0 : index
    %c0_93 = arith.constant 0 : index
    %101 = vector.load %arg18[%c0_91, %c0_92, %c0_93] : memref<3x64x64xbf16, #tpu.memory_space<vmem>>, vector<1x64x64xbf16>
    %102 = vector.shape_cast %101 : vector<1x64x64xbf16> to vector<64x64xbf16>
    %cst_94 = arith.constant dense<0.000000e+00> : vector<16x64xf32>
    %103 = tpu.matmul %97, %102, %cst_94 {dimension_numbers = #tpu.dot_dimension_numbers<[1], [0], [0], [1], [0, 0, 1, 1], [], []>} : vector<16x64xbf16>, vector<64x64xbf16>, vector<16x64xf32> -> vector<16x64xf32>
    %104 = arith.addf %100, %103 : vector<16x64xf32>
    %c1_95 = arith.constant 1 : index
    %c0_96 = arith.constant 0 : index
    %c0_97 = arith.constant 0 : index
    %105 = vector.load %arg17[%c1_95, %c0_96, %c0_97] : memref<3x64x64xbf16, #tpu.memory_space<vmem>>, vector<1x64x64xbf16>
    %106 = vector.shape_cast %105 : vector<1x64x64xbf16> to vector<64x64xbf16>
    %cst_98 = arith.constant dense<0.000000e+00> : vector<16x64xf32>
    %107 = tpu.matmul %2, %106, %cst_98 {dimension_numbers = #tpu.dot_dimension_numbers<[1], [0], [0], [1], [0, 0, 1, 1], [], []>} : vector<16x64xbf16>, vector<64x64xbf16>, vector<16x64xf32> -> vector<16x64xf32>
    %c1_99 = arith.constant 1 : index
    %c0_100 = arith.constant 0 : index
    %c0_101 = arith.constant 0 : index
    %108 = vector.load %arg18[%c1_99, %c0_100, %c0_101] : memref<3x64x64xbf16, #tpu.memory_space<vmem>>, vector<1x64x64xbf16>
    %109 = vector.shape_cast %108 : vector<1x64x64xbf16> to vector<64x64xbf16>
    %cst_102 = arith.constant dense<0.000000e+00> : vector<16x64xf32>
    %110 = tpu.matmul %89, %109, %cst_102 {dimension_numbers = #tpu.dot_dimension_numbers<[1], [0], [0], [1], [0, 0, 1, 1], [], []>} : vector<16x64xbf16>, vector<64x64xbf16>, vector<16x64xf32> -> vector<16x64xf32>
    %111 = arith.addf %107, %110 : vector<16x64xf32>
    %112 = arith.addf %104, %111 : vector<16x64xf32>
    %c2_103 = arith.constant 2 : index
    %c0_104 = arith.constant 0 : index
    %c0_105 = arith.constant 0 : index
    %113 = vector.load %arg7[%c2_103, %c0_104, %c0_105] : memref<3x16x16xbf16, #tpu.memory_space<vmem>>, vector<1x16x16xbf16>
    %114 = vector.shape_cast %113 : vector<1x16x16xbf16> to vector<16x16xbf16>
    %cst_106 = arith.constant dense<0.000000e+00> : vector<16x64xf32>
    %115 = tpu.matmul %114, %2, %cst_106 {dimension_numbers = #tpu.dot_dimension_numbers<[1], [0], [0], [1], [0, 0, 1, 1], [], []>} : vector<16x16xbf16>, vector<16x64xbf16>, vector<16x64xf32> -> vector<16x64xf32>
    %116 = arith.truncf %115 : vector<16x64xf32> to vector<16x64xbf16>
    %c2_107 = arith.constant 2 : index
    %c0_108 = arith.constant 0 : index
    %c0_109 = arith.constant 0 : index
    %117 = vector.load %arg7[%c2_107, %c0_108, %c0_109] : memref<3x16x16xbf16, #tpu.memory_space<vmem>>, vector<1x16x16xbf16>
    %118 = vector.shape_cast %117 : vector<1x16x16xbf16> to vector<16x16xbf16>
    %cst_110 = arith.constant dense<0.000000e+00> : vector<16x64xf32>
    %119 = tpu.matmul %118, %89, %cst_110 {dimension_numbers = #tpu.dot_dimension_numbers<[1], [0], [0], [1], [0, 0, 1, 1], [], []>} : vector<16x16xbf16>, vector<16x64xbf16>, vector<16x64xf32> -> vector<16x64xf32>
    %120 = arith.truncf %119 : vector<16x64xf32> to vector<16x64xbf16>
    %c2_111 = arith.constant 2 : index
    %c0_112 = arith.constant 0 : index
    %c0_113 = arith.constant 0 : index
    %121 = vector.load %arg17[%c2_111, %c0_112, %c0_113] : memref<3x64x64xbf16, #tpu.memory_space<vmem>>, vector<1x64x64xbf16>
    %122 = vector.shape_cast %121 : vector<1x64x64xbf16> to vector<64x64xbf16>
    %cst_114 = arith.constant dense<0.000000e+00> : vector<16x64xf32>
    %123 = tpu.matmul %116, %122, %cst_114 {dimension_numbers = #tpu.dot_dimension_numbers<[1], [0], [0], [1], [0, 0, 1, 1], [], []>} : vector<16x64xbf16>, vector<64x64xbf16>, vector<16x64xf32> -> vector<16x64xf32>
    %c2_115 = arith.constant 2 : index
    %c0_116 = arith.constant 0 : index
    %c0_117 = arith.constant 0 : index
    %124 = vector.load %arg18[%c2_115, %c0_116, %c0_117] : memref<3x64x64xbf16, #tpu.memory_space<vmem>>, vector<1x64x64xbf16>
    %125 = vector.shape_cast %124 : vector<1x64x64xbf16> to vector<64x64xbf16>
    %cst_118 = arith.constant dense<0.000000e+00> : vector<16x64xf32>
    %126 = tpu.matmul %120, %125, %cst_118 {dimension_numbers = #tpu.dot_dimension_numbers<[1], [0], [0], [1], [0, 0, 1, 1], [], []>} : vector<16x64xbf16>, vector<64x64xbf16>, vector<16x64xf32> -> vector<16x64xf32>
    %127 = arith.addf %123, %126 : vector<16x64xf32>
    %128 = arith.addf %112, %127 : vector<16x64xf32>
    %c0_119 = arith.constant 0 : index
    %c0_120 = arith.constant 0 : index
    %129 = vector.load %arg19[%c0_119, %c0_120] : memref<1x64xf32, #tpu.memory_space<vmem>>, vector<1x64xf32>
    %130 = vector.broadcast %129 : vector<1x64xf32> to vector<16x64xf32>
    %131 = arith.mulf %128, %130 : vector<16x64xf32>
    %c0_121 = arith.constant 0 : index
    %c0_122 = arith.constant 0 : index
    %132 = vector.load %arg20[%c0_121, %c0_122] : memref<1x64xf32, #tpu.memory_space<vmem>>, vector<1x64xf32>
    %133 = vector.broadcast %132 : vector<1x64xf32> to vector<16x64xf32>
    %134 = arith.addf %131, %133 : vector<16x64xf32>
    %cst_123 = arith.constant 0.000000e+00 : f32
    %135 = vector.broadcast %cst_123 : f32 to vector<16x64xf32>
    %136 = arith.maximumf %134, %135 : vector<16x64xf32>
    %137 = arith.truncf %136 : vector<16x64xf32> to vector<16x64xbf16>
    %c0_124 = arith.constant 0 : index
    %c0_125 = arith.constant 0 : index
    %c0_126 = arith.constant 0 : index
    %138 = vector.load %arg7[%c0_124, %c0_125, %c0_126] : memref<3x16x16xbf16, #tpu.memory_space<vmem>>, vector<1x16x16xbf16>
    %139 = vector.shape_cast %138 : vector<1x16x16xbf16> to vector<16x16xbf16>
    %cst_127 = arith.constant dense<0.000000e+00> : vector<16x64xf32>
    %140 = tpu.matmul %139, %137, %cst_127 {dimension_numbers = #tpu.dot_dimension_numbers<[1], [0], [0], [1], [0, 0, 1, 1], [], []>} : vector<16x16xbf16>, vector<16x64xbf16>, vector<16x64xf32> -> vector<16x64xf32>
    %141 = arith.truncf %140 : vector<16x64xf32> to vector<16x64xbf16>
    %c0_128 = arith.constant 0 : index
    %c0_129 = arith.constant 0 : index
    %c0_130 = arith.constant 0 : index
    %142 = vector.load %arg21[%c0_128, %c0_129, %c0_130] : memref<3x64x64xbf16, #tpu.memory_space<vmem>>, vector<1x64x64xbf16>
    %143 = vector.shape_cast %142 : vector<1x64x64xbf16> to vector<64x64xbf16>
    %cst_131 = arith.constant dense<0.000000e+00> : vector<16x64xf32>
    %144 = tpu.matmul %141, %143, %cst_131 {dimension_numbers = #tpu.dot_dimension_numbers<[1], [0], [0], [1], [0, 0, 1, 1], [], []>} : vector<16x64xbf16>, vector<64x64xbf16>, vector<16x64xf32> -> vector<16x64xf32>
    %c1_132 = arith.constant 1 : index
    %c0_133 = arith.constant 0 : index
    %c0_134 = arith.constant 0 : index
    %145 = vector.load %arg21[%c1_132, %c0_133, %c0_134] : memref<3x64x64xbf16, #tpu.memory_space<vmem>>, vector<1x64x64xbf16>
    %146 = vector.shape_cast %145 : vector<1x64x64xbf16> to vector<64x64xbf16>
    %cst_135 = arith.constant dense<0.000000e+00> : vector<16x64xf32>
    %147 = tpu.matmul %137, %146, %cst_135 {dimension_numbers = #tpu.dot_dimension_numbers<[1], [0], [0], [1], [0, 0, 1, 1], [], []>} : vector<16x64xbf16>, vector<64x64xbf16>, vector<16x64xf32> -> vector<16x64xf32>
    %148 = arith.addf %144, %147 : vector<16x64xf32>
    %c2_136 = arith.constant 2 : index
    %c0_137 = arith.constant 0 : index
    %c0_138 = arith.constant 0 : index
    %149 = vector.load %arg7[%c2_136, %c0_137, %c0_138] : memref<3x16x16xbf16, #tpu.memory_space<vmem>>, vector<1x16x16xbf16>
    %150 = vector.shape_cast %149 : vector<1x16x16xbf16> to vector<16x16xbf16>
    %cst_139 = arith.constant dense<0.000000e+00> : vector<16x64xf32>
    %151 = tpu.matmul %150, %137, %cst_139 {dimension_numbers = #tpu.dot_dimension_numbers<[1], [0], [0], [1], [0, 0, 1, 1], [], []>} : vector<16x16xbf16>, vector<16x64xbf16>, vector<16x64xf32> -> vector<16x64xf32>
    %152 = arith.truncf %151 : vector<16x64xf32> to vector<16x64xbf16>
    %c2_140 = arith.constant 2 : index
    %c0_141 = arith.constant 0 : index
    %c0_142 = arith.constant 0 : index
    %153 = vector.load %arg21[%c2_140, %c0_141, %c0_142] : memref<3x64x64xbf16, #tpu.memory_space<vmem>>, vector<1x64x64xbf16>
    %154 = vector.shape_cast %153 : vector<1x64x64xbf16> to vector<64x64xbf16>
    %cst_143 = arith.constant dense<0.000000e+00> : vector<16x64xf32>
    %155 = tpu.matmul %152, %154, %cst_143 {dimension_numbers = #tpu.dot_dimension_numbers<[1], [0], [0], [1], [0, 0, 1, 1], [], []>} : vector<16x64xbf16>, vector<64x64xbf16>, vector<16x64xf32> -> vector<16x64xf32>
    %156 = arith.addf %148, %155 : vector<16x64xf32>
    %c0_144 = arith.constant 0 : index
    %c0_145 = arith.constant 0 : index
    %157 = vector.load %arg22[%c0_144, %c0_145] : memref<1x64xf32, #tpu.memory_space<vmem>>, vector<1x64xf32>
    %158 = vector.broadcast %157 : vector<1x64xf32> to vector<16x64xf32>
    %159 = arith.mulf %156, %158 : vector<16x64xf32>
    %c0_146 = arith.constant 0 : index
    %c0_147 = arith.constant 0 : index
    %160 = vector.load %arg23[%c0_146, %c0_147] : memref<1x64xf32, #tpu.memory_space<vmem>>, vector<1x64xf32>
    %161 = vector.broadcast %160 : vector<1x64xf32> to vector<16x64xf32>
    %162 = arith.addf %159, %161 : vector<16x64xf32>
    %cst_148 = arith.constant 0.000000e+00 : f32
    %163 = vector.broadcast %cst_148 : f32 to vector<16x64xf32>
    %164 = arith.maximumf %162, %163 : vector<16x64xf32>
    %165 = arith.truncf %164 : vector<16x64xf32> to vector<16x64xbf16>
    %c0_149 = arith.constant 0 : index
    %c0_150 = arith.constant 0 : index
    %166 = vector.load %arg24[%c0_149, %c0_150] : memref<64x32xbf16, #tpu.memory_space<vmem>>, vector<64x32xbf16>
    %cst_151 = arith.constant dense<0.000000e+00> : vector<16x32xf32>
    %167 = tpu.matmul %165, %166, %cst_151 {dimension_numbers = #tpu.dot_dimension_numbers<[1], [0], [0], [1], [0, 0, 1, 1], [], []>} : vector<16x64xbf16>, vector<64x32xbf16>, vector<16x32xf32> -> vector<16x32xf32>
    %c0_152 = arith.constant 0 : index
    %c0_153 = arith.constant 0 : index
    %168 = vector.load %arg25[%c0_152, %c0_153] : memref<1x32xf32, #tpu.memory_space<vmem>>, vector<1x32xf32>
    %169 = vector.broadcast %168 : vector<1x32xf32> to vector<16x32xf32>
    %170 = arith.addf %167, %169 : vector<16x32xf32>
    %c0_154 = arith.constant 0 : index
    %c0_155 = arith.constant 0 : index
    %c0_156 = arith.constant 0 : index
    %171 = vector.load %arg26[%c0_154, %c0_155, %c0_156] : memref<1x16x32xf32, #tpu.memory_space<vmem>>, vector<1x16x32xf32>
    %172 = vector.shape_cast %171 : vector<1x16x32xf32> to vector<16x32xf32>
    %173 = vector.shape_cast %170 : vector<16x32xf32> to vector<1x16x32xf32>
    tpu.vector_store %arg26[%c0_154, %c0_155, %c0_156], %173 {strides = array<i32>} : memref<1x16x32xf32, #tpu.memory_space<vmem>>, vector<1x16x32xf32>,
    return
  }
  func.func @transform_0(%arg0: i32) -> (i32, i32, i32) {
    %c0_i32 = arith.constant 0 : i32
    %c0_i32_0 = arith.constant 0 : i32
    %c0_i32_1 = arith.constant 0 : i32
    return %arg0, %c0_i32, %c0_i32_0 : i32, i32, i32
  }
  func.func @transform_1(%arg0: i32) -> (i32, i32) {
    %c0_i32 = arith.constant 0 : i32
    %c0_i32_0 = arith.constant 0 : i32
    %c0_i32_1 = arith.constant 0 : i32
    return %c0_i32, %c0_i32_0 : i32, i32
  }
  func.func @transform_2(%arg0: i32) -> (i32, i32) {
    %c0_i32 = arith.constant 0 : i32
    %c0_i32_0 = arith.constant 0 : i32
    %c0_i32_1 = arith.constant 0 : i32
    return %c0_i32, %c0_i32_0 : i32, i32
  }
  func.func @transform_3(%arg0: i32) -> (i32, i32) {
    %c0_i32 = arith.constant 0 : i32
    %c0_i32_0 = arith.constant 0 : i32
    %c0_i32_1 = arith.constant 0 : i32
    return %c0_i32, %c0_i32_0 : i32, i32
  }
  func.func @transform_4(%arg0: i32) -> (i32, i32) {
    %c0_i32 = arith.constant 0 : i32
    %c0_i32_0 = arith.constant 0 : i32
    %c0_i32_1 = arith.constant 0 : i32
    return %c0_i32, %c0_i32_0 : i32, i32
  }
  func.func @transform_5(%arg0: i32) -> (i32, i32, i32) {
    %c0_i32 = arith.constant 0 : i32
    %c0_i32_0 = arith.constant 0 : i32
    %c0_i32_1 = arith.constant 0 : i32
    %c0_i32_2 = arith.constant 0 : i32
    return %c0_i32, %c0_i32_0, %c0_i32_1 : i32, i32, i32
  }
  func.func @transform_6(%arg0: i32) -> (i32, i32, i32) {
    %c0_i32 = arith.constant 0 : i32
    %c0_i32_0 = arith.constant 0 : i32
    %c0_i32_1 = arith.constant 0 : i32
    %c0_i32_2 = arith.constant 0 : i32
    return %c0_i32, %c0_i32_0, %c0_i32_1 : i32, i32, i32
  }
  func.func @transform_7(%arg0: i32) -> (i32, i32, i32) {
    %c0_i32 = arith.constant 0 : i32
    %c0_i32_0 = arith.constant 0 : i32
    %c0_i32_1 = arith.constant 0 : i32
    %c0_i32_2 = arith.constant 0 : i32
    return %c0_i32, %c0_i32_0, %c0_i32_1 : i32, i32, i32
  }
  func.func @transform_8(%arg0: i32) -> (i32, i32) {
    %c0_i32 = arith.constant 0 : i32
    %c0_i32_0 = arith.constant 0 : i32
    %c0_i32_1 = arith.constant 0 : i32
    return %c0_i32, %c0_i32_0 : i32, i32
  }
  func.func @transform_9(%arg0: i32) -> (i32, i32) {
    %c0_i32 = arith.constant 0 : i32
    %c0_i32_0 = arith.constant 0 : i32
    %c0_i32_1 = arith.constant 0 : i32
    return %c0_i32, %c0_i32_0 : i32, i32
  }
  func.func @transform_10(%arg0: i32) -> (i32, i32, i32) {
    %c0_i32 = arith.constant 0 : i32
    %c0_i32_0 = arith.constant 0 : i32
    %c0_i32_1 = arith.constant 0 : i32
    %c0_i32_2 = arith.constant 0 : i32
    return %c0_i32, %c0_i32_0, %c0_i32_1 : i32, i32, i32
  }
  func.func @transform_11(%arg0: i32) -> (i32, i32) {
    %c0_i32 = arith.constant 0 : i32
    %c0_i32_0 = arith.constant 0 : i32
    %c0_i32_1 = arith.constant 0 : i32
    return %c0_i32, %c0_i32_0 : i32, i32
  }
  func.func @transform_12(%arg0: i32) -> (i32, i32) {
    %c0_i32 = arith.constant 0 : i32
    %c0_i32_0 = arith.constant 0 : i32
    %c0_i32_1 = arith.constant 0 : i32
    return %c0_i32, %c0_i32_0 : i32, i32
  }
  func.func @transform_13(%arg0: i32) -> (i32, i32, i32) {
    %c0_i32 = arith.constant 0 : i32
    %c0_i32_0 = arith.constant 0 : i32
    %c0_i32_1 = arith.constant 0 : i32
    %c0_i32_2 = arith.constant 0 : i32
    return %c0_i32, %c0_i32_0, %c0_i32_1 : i32, i32, i32
  }
  func.func @transform_14(%arg0: i32) -> (i32, i32, i32) {
    %c0_i32 = arith.constant 0 : i32
    %c0_i32_0 = arith.constant 0 : i32
    %c0_i32_1 = arith.constant 0 : i32
    %c0_i32_2 = arith.constant 0 : i32
    return %c0_i32, %c0_i32_0, %c0_i32_1 : i32, i32, i32
  }
  func.func @transform_15(%arg0: i32) -> (i32, i32) {
    %c0_i32 = arith.constant 0 : i32
    %c0_i32_0 = arith.constant 0 : i32
    %c0_i32_1 = arith.constant 0 : i32
    return %c0_i32, %c0_i32_0 : i32, i32
  }
  func.func @transform_16(%arg0: i32) -> (i32, i32, i32) {
    %c0_i32 = arith.constant 0 : i32
    %c0_i32_0 = arith.constant 0 : i32
    %c0_i32_1 = arith.constant 0 : i32
    %c0_i32_2 = arith.constant 0 : i32
    return %c0_i32, %c0_i32_0, %c0_i32_1 : i32, i32, i32
  }
  func.func @transform_17(%arg0: i32) -> (i32, i32, i32) {
    %c0_i32 = arith.constant 0 : i32
    %c0_i32_0 = arith.constant 0 : i32
    %c0_i32_1 = arith.constant 0 : i32
    %c0_i32_2 = arith.constant 0 : i32
    return %c0_i32, %c0_i32_0, %c0_i32_1 : i32, i32, i32
  }
  func.func @transform_18(%arg0: i32) -> (i32, i32) {
    %c0_i32 = arith.constant 0 : i32
    %c0_i32_0 = arith.constant 0 : i32
    %c0_i32_1 = arith.constant 0 : i32
    return %c0_i32, %c0_i32_0 : i32, i32
  }
  func.func @transform_19(%arg0: i32) -> (i32, i32) {
    %c0_i32 = arith.constant 0 : i32
    %c0_i32_0 = arith.constant 0 : i32
    %c0_i32_1 = arith.constant 0 : i32
    return %c0_i32, %c0_i32_0 : i32, i32
  }
  func.func @transform_20(%arg0: i32) -> (i32, i32, i32) {
    %c0_i32 = arith.constant 0 : i32
    %c0_i32_0 = arith.constant 0 : i32
    %c0_i32_1 = arith.constant 0 : i32
    %c0_i32_2 = arith.constant 0 : i32
    return %c0_i32, %c0_i32_0, %c0_i32_1 : i32, i32, i32
  }
  func.func @transform_21(%arg0: i32) -> (i32, i32) {
    %c0_i32 = arith.constant 0 : i32
    %c0_i32_0 = arith.constant 0 : i32
    %c0_i32_1 = arith.constant 0 : i32
    return %c0_i32, %c0_i32_0 : i32, i32
  }
  func.func @transform_22(%arg0: i32) -> (i32, i32) {
    %c0_i32 = arith.constant 0 : i32
    %c0_i32_0 = arith.constant 0 : i32
    %c0_i32_1 = arith.constant 0 : i32
    return %c0_i32, %c0_i32_0 : i32, i32
  }
  func.func @transform_23(%arg0: i32) -> (i32, i32) {
    %c0_i32 = arith.constant 0 : i32
    %c0_i32_0 = arith.constant 0 : i32
    %c0_i32_1 = arith.constant 0 : i32
    return %c0_i32, %c0_i32_0 : i32, i32
  }
  func.func @transform_24(%arg0: i32) -> (i32, i32) {
    %c0_i32 = arith.constant 0 : i32
    %c0_i32_0 = arith.constant 0 : i32
    %c0_i32_1 = arith.constant 0 : i32
    return %c0_i32, %c0_i32_0 : i32, i32
  }
  func.func @transform_25(%arg0: i32) -> (i32, i32, i32) {
    %c0_i32 = arith.constant 0 : i32
    %c0_i32_0 = arith.constant 0 : i32
    %c0_i32_1 = arith.constant 0 : i32
    return %arg0, %c0_i32, %c0_i32_0 : i32, i32, i32
  }
}

</mosaic_0001>

<llo_original>
// kernel: net_convert1_forward.1
$region0: #{net_convert1_forward.1}
  #allocation0 [shape = 'u32[]', space=smem, size = 0x4, offset = 0x4, fixed_abs, tag = 'smem constant byte address 0x4 - core index']
  #allocation1 [shape = 'u32[144,128]{1,0:T(1,128)}', space=vmem, size = 0x12000, scoped, tag = 'internal scratch']
  %s0 = inlined_call_operand.vmem [shape: f32[2,16,64], index: 0, kind: input, shape index: {}]
  %s1 = inlined_call_operand.vmem [shape: bf16[8,16], index: 1, kind: input, shape index: {}]
  %s2 = inlined_call_operand.vmem [shape: bf16[8,16], index: 2, kind: input, shape index: {}]
  %s3 = inlined_call_operand.hbm [shape: bf16[64,32], index: 3, kind: input, shape index: {}]
  %s4 = inlined_call_operand.hbm [shape: bf16[64,32], index: 4, kind: input, shape index: {}]
  %s5 = inlined_call_operand.vmem [shape: bf16[3,8,8], index: 5, kind: input, shape index: {}]
  %s6 = inlined_call_operand.hbm [shape: bf16[3,16,16], index: 6, kind: input, shape index: {}]
  %s7 = inlined_call_operand.vmem [shape: bf16[3,32,64], index: 7, kind: input, shape index: {}]
  %s8 = inlined_call_operand.vmem [shape: f32[1,64], index: 8, kind: input, shape index: {}, may-alias: {8,11,18,21}]
  %s9 = inlined_call_operand.hbm [shape: f32[1,64], index: 9, kind: input, shape index: {}]
  %s10 = inlined_call_operand.vmem [shape: bf16[3,64,64], index: 10, kind: input, shape index: {}]
  %s11 = inlined_call_operand.vmem [shape: f32[1,64], index: 11, kind: input, shape index: {}, may-alias: {8,11,18,21}]
  %s12 = inlined_call_operand.hbm [shape: f32[1,64], index: 12, kind: input, shape index: {}]
  %s13 = inlined_call_operand.hbm [shape: bf16[2,64,64], index: 13, kind: input, shape index: {}]
  %s14 = inlined_call_operand.hbm [shape: bf16[2,16,8], index: 14, kind: input, shape index: {}]
  %s15 = inlined_call_operand.hbm [shape: f32[1,64], index: 15, kind: input, shape index: {}]
  %s16 = inlined_call_operand.vmem [shape: bf16[3,64,64], index: 16, kind: input, shape index: {}]
  %s17 = inlined_call_operand.vmem [shape: bf16[3,64,64], index: 17, kind: input, shape index: {}]
  %s18 = inlined_call_operand.vmem [shape: f32[1,64], index: 18, kind: input, shape index: {}, may-alias: {8,11,18,21}]
  %s19 = inlined_call_operand.hbm [shape: f32[1,64], index: 19, kind: input, shape index: {}]
  %s20 = inlined_call_operand.vmem [shape: bf16[3,64,64], index: 20, kind: input, shape index: {}]
  %s21 = inlined_call_operand.vmem [shape: f32[1,64], index: 21, kind: input, shape index: {}, may-alias: {8,11,18,21}]
  %s22 = inlined_call_operand.hbm [shape: f32[1,64], index: 22, kind: input, shape index: {}]
  %s23 = inlined_call_operand.hbm [shape: bf16[64,32], index: 23, kind: input, shape index: {}]
  %s24 = inlined_call_operand.hbm [shape: f32[1,32], index: 24, kind: input, shape index: {}]
  %s25 = inlined_call_operand.vmem [shape: f32[2,16,32], index: 25, kind: output, shape index: {}]
  %s26 = sld [smem:[#allocation0]]
  $region181: #{net_convert1_forward.1} parent=0
    _
  %s28 = ssub.s32 1, %s26
  %s29 = scalar_select 0, %s28, %s26
  $region1: #{net_convert1_forward.1} parent=0
    #allocation2 [shape = 'u8[16384]{0}', space=vmem, size = 0x4000, scoped, tag = 'input window, operand 3, single buffered']
    #allocation3 [shape = 's32[2]{0}', space=sflag, size = 0x8, scoped, tag = 'scoped memory for net_convert1_forward.1']
    #allocation4 [shape = 'u8[16384]{0}', space=vmem, size = 0x4000, scoped, tag = 'input window, operand 4, single buffered']
    #allocation5 [shape = 's32[1]{0}', space=sflag, size = 0x4, scoped, tag = 'scoped memory for net_convert1_forward.1']
    #allocation6 [shape = 'u8[12288]{0}', space=vmem, size = 0x3000, scoped, tag = 'input window, operand 6, single buffered']
    #allocation7 [shape = 'u8[512]{0}', space=vmem, size = 0x400, scoped, tag = 'input window, operand 9, single buffered']
    #allocation8 [shape = 's32[1]{0}', space=sflag, size = 0x4, scoped, tag = 'scoped memory for net_convert1_forward.1']
    #allocation9 [shape = 'u8[512]{0}', space=vmem, size = 0x400, scoped, tag = 'input window, operand 12, single buffered']
    #allocation10 [shape = 'u8[32768]{0}', space=vmem, size = 0x8000, scoped, tag = 'input window, operand 13, single buffered']
    #allocation11 [shape = 's32[1]{0}', space=sflag, size = 0x4, scoped, tag = 'scoped memory for net_convert1_forward.1']
    #allocation12 [shape = 'u8[8192]{0}', space=vmem, size = 0x2000, scoped, tag = 'input window, operand 14, single buffered']
    #allocation13 [shape = 'u8[512]{0}', space=vmem, size = 0x400, scoped, tag = 'input window, operand 15, single buffered']
    #allocation14 [shape = 's32[1]{0}', space=sflag, size = 0x4, scoped, tag = 'scoped memory for net_convert1_forward.1']
    #allocation15 [shape = 'u8[512]{0}', space=vmem, size = 0x400, scoped, tag = 'input window, operand 19, single buffered']
    #allocation16 [shape = 'u8[512]{0}', space=vmem, size = 0x400, scoped, tag = 'input window, operand 22, single buffered']
    #allocation17 [shape = 's32[1]{0}', space=sflag, size = 0x4, scoped, tag = 'scoped memory for net_convert1_forward.1']
    #allocation18 [shape = 'u8[16384]{0}', space=vmem, size = 0x4000, scoped, tag = 'input window, operand 23, single buffered']
    #allocation19 [shape = 'u8[512]{0}', space=vmem, size = 0x400, scoped, tag = 'input window, operand 24, single buffered']
    #allocation20 [shape = 's32[1]{0}', space=sflag, size = 0x4, scoped, tag = 'scoped memory for net_convert1_forward.1']
    %30 = vsyncpa [#allocation3], 0
    %31 = vsyncpa [#allocation5], 0
    %32 = vsyncpa [#allocation8], 0
    %33 = vsyncpa [#allocation11], 0
    %34 = vsyncpa [#allocation14], 0
    %35 = vsyncpa [#allocation17], 0
    %36 = vsyncpa [#allocation20], 0
    loop: start=0, step=1, limit=4
    $region2: #{net_convert1_forward.1} parent=1 // loop_pre_header
      _
    $region3: #{net_convert1_forward.1} parent=1 // loop_header
      %s38 = sphi 0, %s42
      %p39 = scmp.ge.s32.totalorder %s38, 4
      %s48 = sphi 0, %s50
      %s51 = sphi 0, %s48
      %s52 = sphi 0, %s51
      %s68 = sphi 0, %s52
      %s72 = sphi 0, %s72
      %s74 = sphi 0, %s72
      %s75 = sphi 0, %s74
      %s89 = sphi 0, %s75
      %s93 = sphi 0, %s93
      %s95 = sphi 0, %s93
      %s96 = sphi 0, %s95
      %s110 = sphi 0, %s96
      %s114 = sphi 0, %s114
      %s116 = sphi 0, %s114
      %s117 = sphi 0, %s116
      %s131 = sphi 0, %s117
      %s135 = sphi 0, %s135
      %s137 = sphi 0, %s135
      %s138 = sphi 0, %s137
      %s152 = sphi 0, %s138
      %s156 = sphi 0, %s156
      %s158 = sphi 0, %s156
      %s159 = sphi 0, %s158
      %s173 = sphi 0, %s159
      %s177 = sphi 0, %s177
      %s179 = sphi 0, %s177
      %s180 = sphi 0, %s179
      %s194 = sphi 0, %s180
      %s198 = sphi 0, %s198
      %s200 = sphi 0, %s198
      %s201 = sphi 0, %s200
      %s215 = sphi 0, %s201
      %s219 = sphi 0, %s219
      %s221 = sphi 0, %s219
      %s222 = sphi 0, %s221
      %s236 = sphi 0, %s222
      %s240 = sphi 0, %s240
      %s242 = sphi 0, %s240
      %s243 = sphi 0, %s242
      %s257 = sphi 0, %s243
      %s261 = sphi 0, %s261
      %s263 = sphi 0, %s261
      %s264 = sphi 0, %s263
      %s278 = sphi 0, %s264
      %s282 = sphi 0, %s282
      %s284 = sphi 0, %s282
      %s285 = sphi 0, %s284
      %s299 = sphi 0, %s285
      %s303 = sphi 0, %s303
      %s305 = sphi 0, %s303
      %s306 = sphi 0, %s305
      %s320 = sphi 0, %s306
      %s324 = sphi 0, %s324
      %s326 = sphi 0, %s324
      %s327 = sphi 0, %s326
      %s341 = sphi 0, %s327
      %s345 = sphi 0, %s345
      %s347 = sphi 0, %s345
      %s348 = sphi 0, %s347
      %s362 = sphi 0, %s348
      %s366 = sphi 0, %s366
      %s368 = sphi 0, %s366
      %s369 = sphi 0, %s368
      %s383 = sphi 0, %s369
      %s387 = sphi 0, %s387
      %s389 = sphi 0, %s387
      %s390 = sphi 0, %s389
      %s404 = sphi 0, %s390
      %s408 = sphi 0, %s408
      %s410 = sphi 0, %s408
      %s411 = sphi 0, %s410
      %s425 = sphi 0, %s411
      %s429 = sphi 0, %s429
      %s431 = sphi 0, %s429
      %s432 = sphi 0, %s431
      %s446 = sphi 0, %s432
      %s450 = sphi 0, %s450
      %s452 = sphi 0, %s450
      %s453 = sphi 0, %s452
      %s467 = sphi 0, %s453
      %s471 = sphi 0, %s471
      %s473 = sphi 0, %s471
      %s474 = sphi 0, %s473
      %s488 = sphi 0, %s474
      %s492 = sphi 0, %s492
      %s494 = sphi 0, %s492
      %s495 = sphi 0, %s494
      %s509 = sphi 0, %s495
      %s513 = sphi 0, %s513
      %s515 = sphi 0, %s513
      %s516 = sphi 0, %s515
      %s530 = sphi 0, %s516
      %s534 = sphi 0, %s534
      %s536 = sphi 0, %s534
      %s537 = sphi 0, %s536
      %s551 = sphi 0, %s537
      %s555 = sphi 0, %s555
      %s557 = sphi 0, %s555
      %s558 = sphi 0, %s557
      %s572 = sphi 0, %s558
      %s578 = sphi 0, %s580
      %s581 = sphi 0, %s578
      %s582 = sphi 0, %s581
      %s598 = sphi 0, %s582
    $region4: #{net_convert1_forward.1} parent=1 // loop_header_branch
      %41 = sbr.rel (%p39) target = $region8
    $region5: #{net_convert1_forward.1} parent=1 // loop_body
      %s43 = ssub.s32 %s38, 1
      %s44 = ssub.s32 %s38, 2
      %s45 = sadd.s32 %s38, 1
      %s46 = ssub.s32 %s38, %s45
      %p47 = scmp.eq.s32.totalorder %s46, 0
      %s49 = sadd.s32 %s48, 1
      %s50 = scalar_select %p47, %s48, %s49
      %p53 = pneg %p47
      %p54 = scmp.eq.s32.totalorder %s38, 1
      %p55 = por %p53, %p54
      %p56 = scmp.ne.s32.totalorder %s48, %s51
      %p57 = scmp.eq.s32.totalorder %s38, 0
      %p58 = por %p56, %p57
      %p59 = scmp.ne.s32.totalorder %s48, %s51
      %p60 = scmp.eq.s32.totalorder %s43, 1
      %p61 = por %p59, %p60
      %p62 = scmp.ne.s32.totalorder %s51, %s52
      %p63 = scmp.eq.s32.totalorder %s43, 0
      %p64 = por %p62, %p63
      %p65 = scmp.ne.s32.totalorder %s51, %s52
      %p66 = scmp.eq.s32.totalorder %s44, 1
      %p67 = por %p65, %p66
      %p69 = scmp.ne.s32.totalorder %s52, %s68
      %p70 = scmp.eq.s32.totalorder %s44, 0
      %p71 = por %p69, %p70
      %s73 = sadd.s32 %s72, 1
      %p76 = scmp.eq.s32.totalorder %s38, 1
      %p77 = scmp.ne.s32.totalorder %s72, %s74
      %p78 = scmp.eq.s32.totalorder %s38, 0
      %p79 = por %p77, %p78
      %p80 = scmp.ne.s32.totalorder %s72, %s74
      %p81 = scmp.eq.s32.totalorder %s43, 1
      %p82 = por %p80, %p81
      %p83 = scmp.ne.s32.totalorder %s74, %s75
      %p84 = scmp.eq.s32.totalorder %s43, 0
      %p85 = por %p83, %p84
      %p86 = scmp.ne.s32.totalorder %s74, %s75
      %p87 = scmp.eq.s32.totalorder %s44, 1
      %p88 = por %p86, %p87
      %p90 = scmp.ne.s32.totalorder %s75, %s89
      %p91 = scmp.eq.s32.totalorder %s44, 0
      %p92 = por %p90, %p91
      %s94 = sadd.s32 %s93, 1
      %p97 = scmp.eq.s32.totalorder %s38, 1
      %p98 = scmp.ne.s32.totalorder %s93, %s95
      %p99 = scmp.eq.s32.totalorder %s38, 0
      %p100 = por %p98, %p99
      %p101 = scmp.ne.s32.totalorder %s93, %s95
      %p102 = scmp.eq.s32.totalorder %s43, 1
      %p103 = por %p101, %p102
      %p104 = scmp.ne.s32.totalorder %s95, %s96
      %p105 = scmp.eq.s32.totalorder %s43, 0
      %p106 = por %p104, %p105
      %p107 = scmp.ne.s32.totalorder %s95, %s96
      %p108 = scmp.eq.s32.totalorder %s44, 1
      %p109 = por %p107, %p108
      %p111 = scmp.ne.s32.totalorder %s96, %s110
      %p112 = scmp.eq.s32.totalorder %s44, 0
      %p113 = por %p111, %p112
      %s115 = sadd.s32 %s114, 1
      %p118 = scmp.eq.s32.totalorder %s38, 1
      %p119 = scmp.ne.s32.totalorder %s114, %s116
      %p120 = scmp.eq.s32.totalorder %s38, 0
      %p121 = por %p119, %p120
      %p122 = scmp.ne.s32.totalorder %s114, %s116
      %p123 = scmp.eq.s32.totalorder %s43, 1
      %p124 = por %p122, %p123
      %p125 = scmp.ne.s32.totalorder %s116, %s117
      %p126 = scmp.eq.s32.totalorder %s43, 0
      %p127 = por %p125, %p126
      %p128 = scmp.ne.s32.totalorder %s116, %s117
      %p129 = scmp.eq.s32.totalorder %s44, 1
      %p130 = por %p128, %p129
      %p132 = scmp.ne.s32.totalorder %s117, %s131
      %p133 = scmp.eq.s32.totalorder %s44, 0
      %p134 = por %p132, %p133
      %s136 = sadd.s32 %s135, 1
      %p139 = scmp.eq.s32.totalorder %s38, 1
      %p140 = scmp.ne.s32.totalorder %s135, %s137
      %p141 = scmp.eq.s32.totalorder %s38, 0
      %p142 = por %p140, %p141
      %p143 = scmp.ne.s32.totalorder %s135, %s137
      %p144 = scmp.eq.s32.totalorder %s43, 1
      %p145 = por %p143, %p144
      %p146 = scmp.ne.s32.totalorder %s137, %s138
      %p147 = scmp.eq.s32.totalorder %s43, 0
      %p148 = por %p146, %p147
      %p149 = scmp.ne.s32.totalorder %s137, %s138
      %p150 = scmp.eq.s32.totalorder %s44, 1
      %p151 = por %p149, %p150
      %p153 = scmp.ne.s32.totalorder %s138, %s152
      %p154 = scmp.eq.s32.totalorder %s44, 0
      %p155 = por %p153, %p154
      %s157 = sadd.s32 %s156, 1
      %p160 = scmp.eq.s32.totalorder %s38, 1
      %p161 = scmp.ne.s32.totalorder %s156, %s158
      %p162 = scmp.eq.s32.totalorder %s38, 0
      %p163 = por %p161, %p162
      %p164 = scmp.ne.s32.totalorder %s156, %s158
      %p165 = scmp.eq.s32.totalorder %s43, 1
      %p166 = por %p164, %p165
      %p167 = scmp.ne.s32.totalorder %s158, %s159
      %p168 = scmp.eq.s32.totalorder %s43, 0
      %p169 = por %p167, %p168
      %p170 = scmp.ne.s32.totalorder %s158, %s159
      %p171 = scmp.eq.s32.totalorder %s44, 1
      %p172 = por %p170, %p171
      %p174 = scmp.ne.s32.totalorder %s159, %s173
      %p175 = scmp.eq.s32.totalorder %s44, 0
      %p176 = por %p174, %p175
      %s178 = sadd.s32 %s177, 1
      %p181 = scmp.eq.s32.totalorder %s38, 1
      %p182 = scmp.ne.s32.totalorder %s177, %s179
      %p183 = scmp.eq.s32.totalorder %s38, 0
      %p184 = por %p182, %p183
      %p185 = scmp.ne.s32.totalorder %s177, %s179
      %p186 = scmp.eq.s32.totalorder %s43, 1
      %p187 = por %p185, %p186
      %p188 = scmp.ne.s32.totalorder %s179, %s180
      %p189 = scmp.eq.s32.totalorder %s43, 0
      %p190 = por %p188, %p189
      %p191 = scmp.ne.s32.totalorder %s179, %s180
      %p192 = scmp.eq.s32.totalorder %s44, 1
      %p193 = por %p191, %p192
      %p195 = scmp.ne.s32.totalorder %s180, %s194
      %p196 = scmp.eq.s32.totalorder %s44, 0
      %p197 = por %p195, %p196
      %s199 = sadd.s32 %s198, 1
      %p202 = scmp.eq.s32.totalorder %s38, 1
      %p203 = scmp.ne.s32.totalorder %s198, %s200
      %p204 = scmp.eq.s32.totalorder %s38, 0
      %p205 = por %p203, %p204
      %p206 = scmp.ne.s32.totalorder %s198, %s200
      %p207 = scmp.eq.s32.totalorder %s43, 1
      %p208 = por %p206, %p207
      %p209 = scmp.ne.s32.totalorder %s200, %s201
      %p210 = scmp.eq.s32.totalorder %s43, 0
      %p211 = por %p209, %p210
      %p212 = scmp.ne.s32.totalorder %s200, %s201
      %p213 = scmp.eq.s32.totalorder %s44, 1
      %p214 = por %p212, %p213
      %p216 = scmp.ne.s32.totalorder %s201, %s215
      %p217 = scmp.eq.s32.totalorder %s44, 0
      %p218 = por %p216, %p217
      %s220 = sadd.s32 %s219, 1
      %p223 = scmp.eq.s32.totalorder %s38, 1
      %p224 = scmp.ne.s32.totalorder %s219, %s221
      %p225 = scmp.eq.s32.totalorder %s38, 0
      %p226 = por %p224, %p225
      %p227 = scmp.ne.s32.totalorder %s219, %s221
      %p228 = scmp.eq.s32.totalorder %s43, 1
      %p229 = por %p227, %p228
      %p230 = scmp.ne.s32.totalorder %s221, %s222
      %p231 = scmp.eq.s32.totalorder %s43, 0
      %p232 = por %p230, %p231
      %p233 = scmp.ne.s32.totalorder %s221, %s222
      %p234 = scmp.eq.s32.totalorder %s44, 1
      %p235 = por %p233, %p234
      %p237 = scmp.ne.s32.totalorder %s222, %s236
      %p238 = scmp.eq.s32.totalorder %s44, 0
      %p239 = por %p237, %p238
      %s241 = sadd.s32 %s240, 1
      %p244 = scmp.eq.s32.totalorder %s38, 1
      %p245 = scmp.ne.s32.totalorder %s240, %s242
      %p246 = scmp.eq.s32.totalorder %s38, 0
      %p247 = por %p245, %p246
      %p248 = scmp.ne.s32.totalorder %s240, %s242
      %p249 = scmp.eq.s32.totalorder %s43, 1
      %p250 = por %p248, %p249
      %p251 = scmp.ne.s32.totalorder %s242, %s243
      %p252 = scmp.eq.s32.totalorder %s43, 0
      %p253 = por %p251, %p252
      %p254 = scmp.ne.s32.totalorder %s242, %s243
      %p255 = scmp.eq.s32.totalorder %s44, 1
      %p256 = por %p254, %p255
      %p258 = scmp.ne.s32.totalorder %s243, %s257
      %p259 = scmp.eq.s32.totalorder %s44, 0
      %p260 = por %p258, %p259
      %s262 = sadd.s32 %s261, 1
      %p265 = scmp.eq.s32.totalorder %s38, 1
      %p266 = scmp.ne.s32.totalorder %s261, %s263
      %p267 = scmp.eq.s32.totalorder %s38, 0
      %p268 = por %p266, %p267
      %p269 = scmp.ne.s32.totalorder %s261, %s263
      %p270 = scmp.eq.s32.totalorder %s43, 1
      %p271 = por %p269, %p270
      %p272 = scmp.ne.s32.totalorder %s263, %s264
      %p273 = scmp.eq.s32.totalorder %s43, 0
      %p274 = por %p272, %p273
      %p275 = scmp.ne.s32.totalorder %s263, %s264
      %p276 = scmp.eq.s32.totalorder %s44, 1
      %p277 = por %p275, %p276
      %p279 = scmp.ne.s32.totalorder %s264, %s278
      %p280 = scmp.eq.s32.totalorder %s44, 0
      %p281 = por %p279, %p280
      %s283 = sadd.s32 %s282, 1
      %p286 = scmp.eq.s32.totalorder %s38, 1
      %p287 = scmp.ne.s32.totalorder %s282, %s284
      %p288 = scmp.eq.s32.totalorder %s38, 0
      %p289 = por %p287, %p288
      %p290 = scmp.ne.s32.totalorder %s282, %s284
      %p291 = scmp.eq.s32.totalorder %s43, 1
      %p292 = por %p290, %p291
      %p293 = scmp.ne.s32.totalorder %s284, %s285
      %p294 = scmp.eq.s32.totalorder %s43, 0
      %p295 = por %p293, %p294
      %p296 = scmp.ne.s32.totalorder %s284, %s285
      %p297 = scmp.eq.s32.totalorder %s44, 1
      %p298 = por %p296, %p297
      %p300 = scmp.ne.s32.totalorder %s285, %s299
      %p301 = scmp.eq.s32.totalorder %s44, 0
      %p302 = por %p300, %p301
      %s304 = sadd.s32 %s303, 1
      %p307 = scmp.eq.s32.totalorder %s38, 1
      %p308 = scmp.ne.s32.totalorder %s303, %s305
      %p309 = scmp.eq.s32.totalorder %s38, 0
      %p310 = por %p308, %p309
      %p311 = scmp.ne.s32.totalorder %s303, %s305
      %p312 = scmp.eq.s32.totalorder %s43, 1
      %p313 = por %p311, %p312
      %p314 = scmp.ne.s32.totalorder %s305, %s306
      %p315 = scmp.eq.s32.totalorder %s43, 0
      %p316 = por %p314, %p315
      %p317 = scmp.ne.s32.totalorder %s305, %s306
      %p318 = scmp.eq.s32.totalorder %s44, 1
      %p319 = por %p317, %p318
      %p321 = scmp.ne.s32.totalorder %s306, %s320
      %p322 = scmp.eq.s32.totalorder %s44, 0
      %p323 = por %p321, %p322
      %s325 = sadd.s32 %s324, 1
      %p328 = scmp.eq.s32.totalorder %s38, 1
      %p329 = scmp.ne.s32.totalorder %s324, %s326
      %p330 = scmp.eq.s32.totalorder %s38, 0
      %p331 = por %p329, %p330
      %p332 = scmp.ne.s32.totalorder %s324, %s326
      %p333 = scmp.eq.s32.totalorder %s43, 1
      %p334 = por %p332, %p333
      %p335 = scmp.ne.s32.totalorder %s326, %s327
      %p336 = scmp.eq.s32.totalorder %s43, 0
      %p337 = por %p335, %p336
      %p338 = scmp.ne.s32.totalorder %s326, %s327
      %p339 = scmp.eq.s32.totalorder %s44, 1
      %p340 = por %p338, %p339
      %p342 = scmp.ne.s32.totalorder %s327, %s341
      %p343 = scmp.eq.s32.totalorder %s44, 0
      %p344 = por %p342, %p343
      %s346 = sadd.s32 %s345, 1
      %p349 = scmp.eq.s32.totalorder %s38, 1
      %p350 = scmp.ne.s32.totalorder %s345, %s347
      %p351 = scmp.eq.s32.totalorder %s38, 0
      %p352 = por %p350, %p351
      %p353 = scmp.ne.s32.totalorder %s345, %s347
      %p354 = scmp.eq.s32.totalorder %s43, 1
      %p355 = por %p353, %p354
      %p356 = scmp.ne.s32.totalorder %s347, %s348
      %p357 = scmp.eq.s32.totalorder %s43, 0
      %p358 = por %p356, %p357
      %p359 = scmp.ne.s32.totalorder %s347, %s348
      %p360 = scmp.eq.s32.totalorder %s44, 1
      %p361 = por %p359, %p360
      %p363 = scmp.ne.s32.totalorder %s348, %s362
      %p364 = scmp.eq.s32.totalorder %s44, 0
      %p365 = por %p363, %p364
      %s367 = sadd.s32 %s366, 1
      %p370 = scmp.eq.s32.totalorder %s38, 1
      %p371 = scmp.ne.s32.totalorder %s366, %s368
      %p372 = scmp.eq.s32.totalorder %s38, 0
      %p373 = por %p371, %p372
      %p374 = scmp.ne.s32.totalorder %s366, %s368
      %p375 = scmp.eq.s32.totalorder %s43, 1
      %p376 = por %p374, %p375
      %p377 = scmp.ne.s32.totalorder %s368, %s369
      %p378 = scmp.eq.s32.totalorder %s43, 0
      %p379 = por %p377, %p378
      %p380 = scmp.ne.s32.totalorder %s368, %s369
      %p381 = scmp.eq.s32.totalorder %s44, 1
      %p382 = por %p380, %p381
      %p384 = scmp.ne.s32.totalorder %s369, %s383
      %p385 = scmp.eq.s32.totalorder %s44, 0
      %p386 = por %p384, %p385
      %s388 = sadd.s32 %s387, 1
      %p391 = scmp.eq.s32.totalorder %s38, 1
      %p392 = scmp.ne.s32.totalorder %s387, %s389
      %p393 = scmp.eq.s32.totalorder %s38, 0
      %p394 = por %p392, %p393
      %p395 = scmp.ne.s32.totalorder %s387, %s389
      %p396 = scmp.eq.s32.totalorder %s43, 1
      %p397 = por %p395, %p396
      %p398 = scmp.ne.s32.totalorder %s389, %s390
      %p399 = scmp.eq.s32.totalorder %s43, 0
      %p400 = por %p398, %p399
      %p401 = scmp.ne.s32.totalorder %s389, %s390
      %p402 = scmp.eq.s32.totalorder %s44, 1
      %p403 = por %p401, %p402
      %p405 = scmp.ne.s32.totalorder %s390, %s404
      %p406 = scmp.eq.s32.totalorder %s44, 0
      %p407 = por %p405, %p406
      %s409 = sadd.s32 %s408, 1
      %p412 = scmp.eq.s32.totalorder %s38, 1
      %p413 = scmp.ne.s32.totalorder %s408, %s410
      %p414 = scmp.eq.s32.totalorder %s38, 0
      %p415 = por %p413, %p414
      %p416 = scmp.ne.s32.totalorder %s408, %s410
      %p417 = scmp.eq.s32.totalorder %s43, 1
      %p418 = por %p416, %p417
      %p419 = scmp.ne.s32.totalorder %s410, %s411
      %p420 = scmp.eq.s32.totalorder %s43, 0
      %p421 = por %p419, %p420
      %p422 = scmp.ne.s32.totalorder %s410, %s411
      %p423 = scmp.eq.s32.totalorder %s44, 1
      %p424 = por %p422, %p423
      %p426 = scmp.ne.s32.totalorder %s411, %s425
      %p427 = scmp.eq.s32.totalorder %s44, 0
      %p428 = por %p426, %p427
      %s430 = sadd.s32 %s429, 1
      %p433 = scmp.eq.s32.totalorder %s38, 1
      %p434 = scmp.ne.s32.totalorder %s429, %s431
      %p435 = scmp.eq.s32.totalorder %s38, 0
      %p436 = por %p434, %p435
      %p437 = scmp.ne.s32.totalorder %s429, %s431
      %p438 = scmp.eq.s32.totalorder %s43, 1
      %p439 = por %p437, %p438
      %p440 = scmp.ne.s32.totalorder %s431, %s432
      %p441 = scmp.eq.s32.totalorder %s43, 0
      %p442 = por %p440, %p441
      %p443 = scmp.ne.s32.totalorder %s431, %s432
      %p444 = scmp.eq.s32.totalorder %s44, 1
      %p445 = por %p443, %p444
      %p447 = scmp.ne.s32.totalorder %s432, %s446
      %p448 = scmp.eq.s32.totalorder %s44, 0
      %p449 = por %p447, %p448
      %s451 = sadd.s32 %s450, 1
      %p454 = scmp.eq.s32.totalorder %s38, 1
      %p455 = scmp.ne.s32.totalorder %s450, %s452
      %p456 = scmp.eq.s32.totalorder %s38, 0
      %p457 = por %p455, %p456
      %p458 = scmp.ne.s32.totalorder %s450, %s452
      %p459 = scmp.eq.s32.totalorder %s43, 1
      %p460 = por %p458, %p459
      %p461 = scmp.ne.s32.totalorder %s452, %s453
      %p462 = scmp.eq.s32.totalorder %s43, 0
      %p463 = por %p461, %p462
      %p464 = scmp.ne.s32.totalorder %s452, %s453
      %p465 = scmp.eq.s32.totalorder %s44, 1
      %p466 = por %p464, %p465
      %p468 = scmp.ne.s32.totalorder %s453, %s467
      %p469 = scmp.eq.s32.totalorder %s44, 0
      %p470 = por %p468, %p469
      %s472 = sadd.s32 %s471, 1
      %p475 = scmp.eq.s32.totalorder %s38, 1
      %p476 = scmp.ne.s32.totalorder %s471, %s473
      %p477 = scmp.eq.s32.totalorder %s38, 0
      %p478 = por %p476, %p477
      %p479 = scmp.ne.s32.totalorder %s471, %s473
      %p480 = scmp.eq.s32.totalorder %s43, 1
      %p481 = por %p479, %p480
      %p482 = scmp.ne.s32.totalorder %s473, %s474
      %p483 = scmp.eq.s32.totalorder %s43, 0
      %p484 = por %p482, %p483
      %p485 = scmp.ne.s32.totalorder %s473, %s474
      %p486 = scmp.eq.s32.totalorder %s44, 1
      %p487 = por %p485, %p486
      %p489 = scmp.ne.s32.totalorder %s474, %s488
      %p490 = scmp.eq.s32.totalorder %s44, 0
      %p491 = por %p489, %p490
      %s493 = sadd.s32 %s492, 1
      %p496 = scmp.eq.s32.totalorder %s38, 1
      %p497 = scmp.ne.s32.totalorder %s492, %s494
      %p498 = scmp.eq.s32.totalorder %s38, 0
      %p499 = por %p497, %p498
      %p500 = scmp.ne.s32.totalorder %s492, %s494
      %p501 = scmp.eq.s32.totalorder %s43, 1
      %p502 = por %p500, %p501
      %p503 = scmp.ne.s32.totalorder %s494, %s495
      %p504 = scmp.eq.s32.totalorder %s43, 0
      %p505 = por %p503, %p504
      %p506 = scmp.ne.s32.totalorder %s494, %s495
      %p507 = scmp.eq.s32.totalorder %s44, 1
      %p508 = por %p506, %p507
      %p510 = scmp.ne.s32.totalorder %s495, %s509
      %p511 = scmp.eq.s32.totalorder %s44, 0
      %p512 = por %p510, %p511
      %s514 = sadd.s32 %s513, 1
      %p517 = scmp.eq.s32.totalorder %s38, 1
      %p518 = scmp.ne.s32.totalorder %s513, %s515
      %p519 = scmp.eq.s32.totalorder %s38, 0
      %p520 = por %p518, %p519
      %p521 = scmp.ne.s32.totalorder %s513, %s515
      %p522 = scmp.eq.s32.totalorder %s43, 1
      %p523 = por %p521, %p522
      %p524 = scmp.ne.s32.totalorder %s515, %s516
      %p525 = scmp.eq.s32.totalorder %s43, 0
      %p526 = por %p524, %p525
      %p527 = scmp.ne.s32.totalorder %s515, %s516
      %p528 = scmp.eq.s32.totalorder %s44, 1
      %p529 = por %p527, %p528
      %p531 = scmp.ne.s32.totalorder %s516, %s530
      %p532 = scmp.eq.s32.totalorder %s44, 0
      %p533 = por %p531, %p532
      %s535 = sadd.s32 %s534, 1
      %p538 = scmp.eq.s32.totalorder %s38, 1
      %p539 = scmp.ne.s32.totalorder %s534, %s536
      %p540 = scmp.eq.s32.totalorder %s38, 0
      %p541 = por %p539, %p540
      %p542 = scmp.ne.s32.totalorder %s534, %s536
      %p543 = scmp.eq.s32.totalorder %s43, 1
      %p544 = por %p542, %p543
      %p545 = scmp.ne.s32.totalorder %s536, %s537
      %p546 = scmp.eq.s32.totalorder %s43, 0
      %p547 = por %p545, %p546
      %p548 = scmp.ne.s32.totalorder %s536, %s537
      %p549 = scmp.eq.s32.totalorder %s44, 1
      %p550 = por %p548, %p549
      %p552 = scmp.ne.s32.totalorder %s537, %s551
      %p553 = scmp.eq.s32.totalorder %s44, 0
      %p554 = por %p552, %p553
      %s556 = sadd.s32 %s555, 1
      %p559 = scmp.eq.s32.totalorder %s38, 1
      %p560 = scmp.ne.s32.totalorder %s555, %s557
      %p561 = scmp.eq.s32.totalorder %s38, 0
      %p562 = por %p560, %p561
      %p563 = scmp.ne.s32.totalorder %s555, %s557
      %p564 = scmp.eq.s32.totalorder %s43, 1
      %p565 = por %p563, %p564
      %p566 = scmp.ne.s32.totalorder %s557, %s558
      %p567 = scmp.eq.s32.totalorder %s43, 0
      %p568 = por %p566, %p567
      %p569 = scmp.ne.s32.totalorder %s557, %s558
      %p570 = scmp.eq.s32.totalorder %s44, 1
      %p571 = por %p569, %p570
      %p573 = scmp.ne.s32.totalorder %s558, %s572
      %p574 = scmp.eq.s32.totalorder %s44, 0
      %p575 = por %p573, %p574
      %s576 = ssub.s32 %s38, %s45
      %p577 = scmp.eq.s32.totalorder %s576, 0
      %s579 = sadd.s32 %s578, 1
      %s580 = scalar_select %p577, %s578, %s579
      %p583 = pneg %p577
      %p584 = scmp.eq.s32.totalorder %s38, 1
      %p585 = por %p583, %p584
      %p586 = scmp.ne.s32.totalorder %s578, %s581
      %p587 = scmp.eq.s32.totalorder %s38, 0
      %p588 = por %p586, %p587
      %p589 = scmp.ne.s32.totalorder %s578, %s581
      %p590 = scmp.eq.s32.totalorder %s43, 1
      %p591 = por %p589, %p590
      %p592 = scmp.ne.s32.totalorder %s581, %s582
      %p593 = scmp.eq.s32.totalorder %s43, 0
      %p594 = por %p592, %p593
      %p595 = scmp.ne.s32.totalorder %s581, %s582
      %p596 = scmp.eq.s32.totalorder %s44, 1
      %p597 = por %p595, %p596
      %p599 = scmp.ne.s32.totalorder %s582, %s598
      %p600 = scmp.eq.s32.totalorder %s44, 0
      %p601 = por %p599, %p600
      %p602 = scmp.le.s32.totalorder 1, %s38
      %p603 = scmp.lt.s32.totalorder %s38, 3
      %p604 = pnand %p602, %p603
      %p605 = pneg %p604
      // Predicated region
      $region9: #{net_convert1_forward.1} parent=5 // pred_check
        _
      $region10: #{net_convert1_forward.1} parent=5 // pred_check_branch
        %607 = sbr.rel (%p604) target = $region12
      $region11: #{net_convert1_forward.1} parent=5 // pred_region
        %s608 = ssub.s32 %s38, 1
        // Predicated region
        $region13: #{net_convert1_forward.1} parent=11 // pred_check
          %p609 = pneg %p85
        $region14: #{net_convert1_forward.1} parent=11 // pred_check_branch
          %611 = sbr.rel (%p609) target = $region16
        $region15: #{net_convert1_forward.1} parent=11 // pred_region
          _
        $region16: #{net_convert1_forward.1} parent=11 // pred_fallthru
          _
        // Predicated region
        $region17: #{net_convert1_forward.1} parent=11 // pred_check
          %p612 = pneg %p106
        $region18: #{net_convert1_forward.1} parent=11 // pred_check_branch
          %614 = sbr.rel (%p612) target = $region20
        $region19: #{net_convert1_forward.1} parent=11 // pred_region
          _
        $region20: #{net_convert1_forward.1} parent=11 // pred_fallthru
          _
        // Predicated region
        $region21: #{net_convert1_forward.1} parent=11 // pred_check
          %p615 = pneg %p127
        $region22: #{net_convert1_forward.1} parent=11 // pred_check_branch
          %617 = sbr.rel (%p615) target = $region24
        $region23: #{net_convert1_forward.1} parent=11 // pred_region
          %s619 = ssub.s32 512, 512
          %620 = vsyncadd [#allocation3], %s619
          %s621 = sshll.u32 [#allocation2], 4
          %s622 = int_to_ptr.vmem [resolvable:$true] %s621
          %627 = dma.hbm_to_vmem [thread:$0]  %s3, 512, %s622, [#allocation3], 64, 64, 4
        $region24: #{net_convert1_forward.1} parent=11 // pred_fallthru
          _
        // Predicated region
        $region25: #{net_convert1_forward.1} parent=11 // pred_check
          %p628 = pneg %p148
        $region26: #{net_convert1_forward.1} parent=11 // pred_check_branch
          %630 = sbr.rel (%p628) target = $region28
        $region27: #{net_convert1_forward.1} parent=11 // pred_region
          %s632 = ssub.s32 512, 512
          %633 = vsyncadd [#allocation5], %s632
          %s634 = sshll.u32 [#allocation4], 4
          %s635 = int_to_ptr.vmem [resolvable:$true] %s634
          %640 = dma.hbm_to_vmem [thread:$0]  %s4, 512, %s635, [#allocation5], 64, 64, 4
        $region28: #{net_convert1_forward.1} parent=11 // pred_fallthru
          _
        // Predicated region
        $region29: #{net_convert1_forward.1} parent=11 // pred_check
          %p641 = pneg %p169
        $region30: #{net_convert1_forward.1} parent=11 // pred_check_branch
          %643 = sbr.rel (%p641) target = $region32
        $region31: #{net_convert1_forward.1} parent=11 // pred_region
          _
        $region32: #{net_convert1_forward.1} parent=11 // pred_fallthru
          _
        // Predicated region
        $region33: #{net_convert1_forward.1} parent=11 // pred_check
          %p644 = pneg %p190
        $region34: #{net_convert1_forward.1} parent=11 // pred_check_branch
          %646 = sbr.rel (%p644) target = $region36
        $region35: #{net_convert1_forward.1} parent=11 // pred_region
          %s648 = ssub.s32 384, 384
          %649 = vsyncadd [#allocation5], %s648
          %s650 = sshll.u32 [#allocation6], 4
          %s651 = int_to_ptr.vmem [resolvable:$true] %s650
          %656 = dma.hbm_to_vmem [thread:$0]  %s6, 384, %s651, [#allocation5], 64, 64, 4
        $region36: #{net_convert1_forward.1} parent=11 // pred_fallthru
          _
        // Predicated region
        $region37: #{net_convert1_forward.1} parent=11 // pred_check
          %p657 = pneg %p211
        $region38: #{net_convert1_forward.1} parent=11 // pred_check_branch
          %659 = sbr.rel (%p657) target = $region40
        $region39: #{net_convert1_forward.1} parent=11 // pred_region
          _
        $region40: #{net_convert1_forward.1} parent=11 // pred_fallthru
          _
        // Predicated region
        $region41: #{net_convert1_forward.1} parent=11 // pred_check
          %p660 = pneg %p232
        $region42: #{net_convert1_forward.1} parent=11 // pred_check_branch
          %662 = sbr.rel (%p660) target = $region44
        $region43: #{net_convert1_forward.1} parent=11 // pred_region
          _
        $region44: #{net_convert1_forward.1} parent=11 // pred_fallthru
          _
        // Predicated region
        $region45: #{net_convert1_forward.1} parent=11 // pred_check
          %p663 = pneg %p253
        $region46: #{net_convert1_forward.1} parent=11 // pred_check_branch
          %665 = sbr.rel (%p663) target = $region48
        $region47: #{net_convert1_forward.1} parent=11 // pred_region
          %s667 = ssub.s32 16, 16
          %668 = vsyncadd [#allocation8], %s667
          %s670 = sshll.u32 [#allocation7], 4
          %s671 = int_to_ptr.vmem [resolvable:$true] %s670
          %673 = dma.hbm_to_vmem [thread:$0]  %s9, 16, %s671, [#allocation8]
        $region48: #{net_convert1_forward.1} parent=11 // pred_fallthru
          _
        // Predicated region
        $region49: #{net_convert1_forward.1} parent=11 // pred_check
          %p674 = pneg %p274
        $region50: #{net_convert1_forward.1} parent=11 // pred_check_branch
          %676 = sbr.rel (%p674) target = $region52
        $region51: #{net_convert1_forward.1} parent=11 // pred_region
          _
        $region52: #{net_convert1_forward.1} parent=11 // pred_fallthru
          _
        // Predicated region
        $region53: #{net_convert1_forward.1} parent=11 // pred_check
          %p677 = pneg %p295
        $region54: #{net_convert1_forward.1} parent=11 // pred_check_branch
          %679 = sbr.rel (%p677) target = $region56
        $region55: #{net_convert1_forward.1} parent=11 // pred_region
          _
        $region56: #{net_convert1_forward.1} parent=11 // pred_fallthru
          _
        // Predicated region
        $region57: #{net_convert1_forward.1} parent=11 // pred_check
          %p680 = pneg %p316
        $region58: #{net_convert1_forward.1} parent=11 // pred_check_branch
          %682 = sbr.rel (%p680) target = $region60
        $region59: #{net_convert1_forward.1} parent=11 // pred_region
          %s684 = ssub.s32 16, 16
          %685 = vsyncadd [#allocation8], %s684
          %s687 = sshll.u32 [#allocation9], 4
          %s688 = int_to_ptr.vmem [resolvable:$true] %s687
          %690 = dma.hbm_to_vmem [thread:$0]  %s12, 16, %s688, [#allocation8]
        $region60: #{net_convert1_forward.1} parent=11 // pred_fallthru
          _
        // Predicated region
        $region61: #{net_convert1_forward.1} parent=11 // pred_check
          %p691 = pneg %p337
        $region62: #{net_convert1_forward.1} parent=11 // pred_check_branch
          %693 = sbr.rel (%p691) target = $region64
        $region63: #{net_convert1_forward.1} parent=11 // pred_region
          %s695 = ssub.s32 1024, 1024
          %696 = vsyncadd [#allocation11], %s695
          %s697 = sshll.u32 [#allocation10], 4
          %s698 = int_to_ptr.vmem [resolvable:$true] %s697
          %703 = dma.hbm_to_vmem [thread:$0]  %s13, 1024, %s698, [#allocation11], 64, 64, 4
        $region64: #{net_convert1_forward.1} parent=11 // pred_fallthru
          _
        // Predicated region
        $region65: #{net_convert1_forward.1} parent=11 // pred_check
          %p704 = pneg %p358
        $region66: #{net_convert1_forward.1} parent=11 // pred_check_branch
          %706 = sbr.rel (%p704) target = $region68
        $region67: #{net_convert1_forward.1} parent=11 // pred_region
          %s708 = ssub.s32 256, 256
          %709 = vsyncadd [#allocation11], %s708
          %s710 = sshll.u32 [#allocation12], 4
          %s711 = int_to_ptr.vmem [resolvable:$true] %s710
          %716 = dma.hbm_to_vmem [thread:$0]  %s14, 256, %s711, [#allocation11], 64, 64, 4
        $region68: #{net_convert1_forward.1} parent=11 // pred_fallthru
          _
        // Predicated region
        $region69: #{net_convert1_forward.1} parent=11 // pred_check
          %p717 = pneg %p379
        $region70: #{net_convert1_forward.1} parent=11 // pred_check_branch
          %719 = sbr.rel (%p717) target = $region72
        $region71: #{net_convert1_forward.1} parent=11 // pred_region
          %s721 = ssub.s32 16, 16
          %722 = vsyncadd [#allocation14], %s721
          %s724 = sshll.u32 [#allocation13], 4
          %s725 = int_to_ptr.vmem [resolvable:$true] %s724
          %727 = dma.hbm_to_vmem [thread:$0]  %s15, 16, %s725, [#allocation14]
        $region72: #{net_convert1_forward.1} parent=11 // pred_fallthru
          _
        // Predicated region
        $region73: #{net_convert1_forward.1} parent=11 // pred_check
          %p728 = pneg %p400
        $region74: #{net_convert1_forward.1} parent=11 // pred_check_branch
          %730 = sbr.rel (%p728) target = $region76
        $region75: #{net_convert1_forward.1} parent=11 // pred_region
          _
        $region76: #{net_convert1_forward.1} parent=11 // pred_fallthru
          _
        // Predicated region
        $region77: #{net_convert1_forward.1} parent=11 // pred_check
          %p731 = pneg %p421
        $region78: #{net_convert1_forward.1} parent=11 // pred_check_branch
          %733 = sbr.rel (%p731) target = $region80
        $region79: #{net_convert1_forward.1} parent=11 // pred_region
          _
        $region80: #{net_convert1_forward.1} parent=11 // pred_fallthru
          _
        // Predicated region
        $region81: #{net_convert1_forward.1} parent=11 // pred_check
          %p734 = pneg %p442
        $region82: #{net_convert1_forward.1} parent=11 // pred_check_branch
          %736 = sbr.rel (%p734) target = $region84
        $region83: #{net_convert1_forward.1} parent=11 // pred_region
          _
        $region84: #{net_convert1_forward.1} parent=11 // pred_fallthru
          _
        // Predicated region
        $region85: #{net_convert1_forward.1} parent=11 // pred_check
          %p737 = pneg %p463
        $region86: #{net_convert1_forward.1} parent=11 // pred_check_branch
          %739 = sbr.rel (%p737) target = $region88
        $region87: #{net_convert1_forward.1} parent=11 // pred_region
          %s741 = ssub.s32 16, 16
          %742 = vsyncadd [#allocation14], %s741
          %s744 = sshll.u32 [#allocation15], 4
          %s745 = int_to_ptr.vmem [resolvable:$true] %s744
          %747 = dma.hbm_to_vmem [thread:$0]  %s19, 16, %s745, [#allocation14]
        $region88: #{net_convert1_forward.1} parent=11 // pred_fallthru
          _
        // Predicated region
        $region89: #{net_convert1_forward.1} parent=11 // pred_check
          %p748 = pneg %p484
        $region90: #{net_convert1_forward.1} parent=11 // pred_check_branch
          %750 = sbr.rel (%p748) target = $region92
        $region91: #{net_convert1_forward.1} parent=11 // pred_region
          _
        $region92: #{net_convert1_forward.1} parent=11 // pred_fallthru
          _
        // Predicated region
        $region93: #{net_convert1_forward.1} parent=11 // pred_check
          %p751 = pneg %p505
        $region94: #{net_convert1_forward.1} parent=11 // pred_check_branch
          %753 = sbr.rel (%p751) target = $region96
        $region95: #{net_convert1_forward.1} parent=11 // pred_region
          _
        $region96: #{net_convert1_forward.1} parent=11 // pred_fallthru
          _
        // Predicated region
        $region97: #{net_convert1_forward.1} parent=11 // pred_check
          %p754 = pneg %p526
        $region98: #{net_convert1_forward.1} parent=11 // pred_check_branch
          %756 = sbr.rel (%p754) target = $region100
        $region99: #{net_convert1_forward.1} parent=11 // pred_region
          %s758 = ssub.s32 16, 16
          %759 = vsyncadd [#allocation17], %s758
          %s761 = sshll.u32 [#allocation16], 4
          %s762 = int_to_ptr.vmem [resolvable:$true] %s761
          %764 = dma.hbm_to_vmem [thread:$0]  %s22, 16, %s762, [#allocation17]
        $region100: #{net_convert1_forward.1} parent=11 // pred_fallthru
          _
        // Predicated region
        $region101: #{net_convert1_forward.1} parent=11 // pred_check
          %p765 = pneg %p547
        $region102: #{net_convert1_forward.1} parent=11 // pred_check_branch
          %767 = sbr.rel (%p765) target = $region104
        $region103: #{net_convert1_forward.1} parent=11 // pred_region
          %s769 = ssub.s32 512, 512
          %770 = vsyncadd [#allocation17], %s769
          %s771 = sshll.u32 [#allocation18], 4
          %s772 = int_to_ptr.vmem [resolvable:$true] %s771
          %777 = dma.hbm_to_vmem [thread:$0]  %s23, 512, %s772, [#allocation17], 64, 64, 4
        $region104: #{net_convert1_forward.1} parent=11 // pred_fallthru
          _
        // Predicated region
        $region105: #{net_convert1_forward.1} parent=11 // pred_check
          %p778 = pneg %p568
        $region106: #{net_convert1_forward.1} parent=11 // pred_check_branch
          %780 = sbr.rel (%p778) target = $region108
        $region107: #{net_convert1_forward.1} parent=11 // pred_region
          %s782 = ssub.s32 16, 16
          %783 = vsyncadd [#allocation20], %s782
          %s785 = sshll.u32 [#allocation19], 4
          %s786 = int_to_ptr.vmem [resolvable:$true] %s785
          %788 = dma.hbm_to_vmem [thread:$0]  %s24, 16, %s786, [#allocation20]
        $region108: #{net_convert1_forward.1} parent=11 // pred_fallthru
          _
      $region12: #{net_convert1_forward.1} parent=5 // pred_fallthru
        _
      %p789 = scmp.lt.s32.totalorder %s38, 2
      // Predicated region
      $region109: #{net_convert1_forward.1} parent=5 // pred_check
        %p790 = pneg %p789
      $region110: #{net_convert1_forward.1} parent=5 // pred_check_branch
        %792 = sbr.rel (%p790) target = $region112
      $region111: #{net_convert1_forward.1} parent=5 // pred_region
        // Predicated region
        $region113: #{net_convert1_forward.1} parent=111 // pred_check
          %p793 = pneg %p58
        $region114: #{net_convert1_forward.1} parent=111 // pred_check_branch
          %795 = sbr.rel (%p793) target = $region116
        $region115: #{net_convert1_forward.1} parent=111 // pred_region
          %p796 = scmp.lt.s32.totalorder %s38, 1
          %s797 = scalar_select %p796, %s38, 1
          %s798 = smul.addr %s797, 2
          %s799 = smul.addr %s798, 8
          %s800 = scalar_lea.vmem %s0, %s799
        $region116: #{net_convert1_forward.1} parent=111 // pred_fallthru
          _
      $region112: #{net_convert1_forward.1} parent=5 // pred_fallthru
        _
      %p801 = scmp.le.s32.totalorder 1, %s38
      %p802 = scmp.lt.s32.totalorder %s38, 3
      %p803 = pnand %p801, %p802
      %p804 = pneg %p803
      // Predicated region
      $region117: #{net_convert1_forward.1} parent=5 // pred_check
        _
      $region118: #{net_convert1_forward.1} parent=5 // pred_check_branch
        %806 = sbr.rel (%p803) target = $region120
      $region119: #{net_convert1_forward.1} parent=5 // pred_region
        %s807 = ssub.s32 %s38, 1
        // Predicated region
        $region121: #{net_convert1_forward.1} parent=119 // pred_check
          %p808 = pneg %p127
        $region122: #{net_convert1_forward.1} parent=119 // pred_check_branch
          %810 = sbr.rel (%p808) target = $region124
        $region123: #{net_convert1_forward.1} parent=119 // pred_region
          %811 = dma.done [#allocation3], 512
        $region124: #{net_convert1_forward.1} parent=119 // pred_fallthru
          _
        // Predicated region
        $region125: #{net_convert1_forward.1} parent=119 // pred_check
          %p812 = pneg %p148
        $region126: #{net_convert1_forward.1} parent=119 // pred_check_branch
          %814 = sbr.rel (%p812) target = $region128
        $region127: #{net_convert1_forward.1} parent=119 // pred_region
          %815 = dma.done [#allocation5], 512
        $region128: #{net_convert1_forward.1} parent=119 // pred_fallthru
          _
        // Predicated region
        $region129: #{net_convert1_forward.1} parent=119 // pred_check
          %p816 = pneg %p190
        $region130: #{net_convert1_forward.1} parent=119 // pred_check_branch
          %818 = sbr.rel (%p816) target = $region132
        $region131: #{net_convert1_forward.1} parent=119 // pred_region
          %819 = dma.done [#allocation5], 384
        $region132: #{net_convert1_forward.1} parent=119 // pred_fallthru
          _
        // Predicated region
        $region133: #{net_convert1_forward.1} parent=119 // pred_check
          %p820 = pneg %p253
        $region134: #{net_convert1_forward.1} parent=119 // pred_check_branch
          %822 = sbr.rel (%p820) target = $region136
        $region135: #{net_convert1_forward.1} parent=119 // pred_region
          %823 = dma.done [#allocation8], 16
        $region136: #{net_convert1_forward.1} parent=119 // pred_fallthru
          _
        // Predicated region
        $region137: #{net_convert1_forward.1} parent=119 // pred_check
          %p824 = pneg %p316
        $region138: #{net_convert1_forward.1} parent=119 // pred_check_branch
          %826 = sbr.rel (%p824) target = $region140
        $region139: #{net_convert1_forward.1} parent=119 // pred_region
          %827 = dma.done [#allocation8], 16
        $region140: #{net_convert1_forward.1} parent=119 // pred_fallthru
          _
        // Predicated region
        $region141: #{net_convert1_forward.1} parent=119 // pred_check
          %p828 = pneg %p337
        $region142: #{net_convert1_forward.1} parent=119 // pred_check_branch
          %830 = sbr.rel (%p828) target = $region144
        $region143: #{net_convert1_forward.1} parent=119 // pred_region
          %831 = dma.done [#allocation11], 1024
        $region144: #{net_convert1_forward.1} parent=119 // pred_fallthru
          _
        // Predicated region
        $region145: #{net_convert1_forward.1} parent=119 // pred_check
          %p832 = pneg %p358
        $region146: #{net_convert1_forward.1} parent=119 // pred_check_branch
          %834 = sbr.rel (%p832) target = $region148
        $region147: #{net_convert1_forward.1} parent=119 // pred_region
          %835 = dma.done [#allocation11], 256
        $region148: #{net_convert1_forward.1} parent=119 // pred_fallthru
          _
        // Predicated region
        $region149: #{net_convert1_forward.1} parent=119 // pred_check
          %p836 = pneg %p379
        $region150: #{net_convert1_forward.1} parent=119 // pred_check_branch
          %838 = sbr.rel (%p836) target = $region152
        $region151: #{net_convert1_forward.1} parent=119 // pred_region
          %839 = dma.done [#allocation14], 16
        $region152: #{net_convert1_forward.1} parent=119 // pred_fallthru
          _
        // Predicated region
        $region153: #{net_convert1_forward.1} parent=119 // pred_check
          %p840 = pneg %p463
        $region154: #{net_convert1_forward.1} parent=119 // pred_check_branch
          %842 = sbr.rel (%p840) target = $region156
        $region155: #{net_convert1_forward.1} parent=119 // pred_region
          %843 = dma.done [#allocation14], 16
        $region156: #{net_convert1_forward.1} parent=119 // pred_fallthru
          _
        // Predicated region
        $region157: #{net_convert1_forward.1} parent=119 // pred_check
          %p844 = pneg %p526
        $region158: #{net_convert1_forward.1} parent=119 // pred_check_branch
          %846 = sbr.rel (%p844) target = $region160
        $region159: #{net_convert1_forward.1} parent=119 // pred_region
          %847 = dma.done [#allocation17], 16
        $region160: #{net_convert1_forward.1} parent=119 // pred_fallthru
          _
        // Predicated region
        $region161: #{net_convert1_forward.1} parent=119 // pred_check
          %p848 = pneg %p547
        $region162: #{net_convert1_forward.1} parent=119 // pred_check_branch
          %850 = sbr.rel (%p848) target = $region164
        $region163: #{net_convert1_forward.1} parent=119 // pred_region
          %851 = dma.done [#allocation17], 512
        $region164: #{net_convert1_forward.1} parent=119 // pred_fallthru
          _
        // Predicated region
        $region165: #{net_convert1_forward.1} parent=119 // pred_check
          %p852 = pneg %p568
        $region166: #{net_convert1_forward.1} parent=119 // pred_check_branch
          %854 = sbr.rel (%p852) target = $region168
        $region167: #{net_convert1_forward.1} parent=119 // pred_region
          %855 = dma.done [#allocation20], 16
        $region168: #{net_convert1_forward.1} parent=119 // pred_fallthru
          _
        %p856 = scmp.lt.s32.totalorder %s43, 1
        %s857 = scalar_select %p856, %s43, 1
        %s858 = smul.addr %s857, 2
        %s859 = smul.addr %s858, 8
        %s860 = scalar_lea.vmem %s0, %s859
        %p861 = pneg %p64
        %p862 = pneg %p61
        %p863 = pneg %p85
        %p864 = pneg %p82
        %p865 = pneg %p106
        %p866 = pneg %p103
        %p867 = pneg %p127
        %p868 = pneg %p124
        %p869 = pneg %p148
        %p870 = pneg %p145
        %p871 = pneg %p169
        %p872 = pneg %p166
        %p873 = pneg %p190
        %p874 = pneg %p187
        %p875 = pneg %p211
        %p876 = pneg %p208
        %p877 = pneg %p232
        %p878 = pneg %p229
        %p879 = pneg %p253
        %p880 = pneg %p250
        %p881 = pneg %p274
        %p882 = pneg %p271
        %p883 = pneg %p295
        %p884 = pneg %p292
        %p885 = pneg %p316
        %p886 = pneg %p313
        %p887 = pneg %p337
        %p888 = pneg %p334
        %p889 = pneg %p358
        %p890 = pneg %p355
        %p891 = pneg %p379
        %p892 = pneg %p376
        %p893 = pneg %p400
        %p894 = pneg %p397
        %p895 = pneg %p421
        %p896 = pneg %p418
        %p897 = pneg %p442
        %p898 = pneg %p439
        %p899 = pneg %p463
        %p900 = pneg %p460
        %p901 = pneg %p484
        %p902 = pneg %p481
        %p903 = pneg %p505
        %p904 = pneg %p502
        %p905 = pneg %p526
        %p906 = pneg %p523
        %p907 = pneg %p547
        %p908 = pneg %p544
        %p909 = pneg %p568
        %p910 = pneg %p565
        %p911 = pneg %p594
        %p912 = pneg %p591
        %p913 = scmp.lt.s32.totalorder %s43, 1
        %s914 = scalar_select %p913, %s43, 1
        %s915 = smul.addr %s914, 2
        %s916 = smul.addr %s915, 8
        %s917 = scalar_lea.vmem %s25, %s916
        %p918 = scmp.lt.s32.totalorder %s43, 1
        %s919 = scalar_select %p918, %s43, 1
        %s920 = smul.addr %s919, 2
        %s921 = smul.addr %s920, 8
        %s922 = scalar_lea.vmem %s0, %s921
        %p923 = scmp.lt.s32.totalorder %s43, 1
        %s924 = scalar_select %p923, %s43, 1
        %s925 = smul.addr %s924, 2
        %s926 = smul.addr %s925, 8
        %s927 = scalar_lea.vmem %s25, %s926
        %v929 = vld [vmem:[%s922] sm:$0xff]
        %v930 = vld [vmem:[%s922 + $0x8] sm:$0xff]
        %v931 = vpack.c.bf16 %v930, %v929
        %v932 = vld [vmem:[%s1] sm:$0xf]
        %vm933 = vcmask 130048
        %v935 = vsel %vm933, %v932, 0
        %937 = vmatprep.subr.bf16.mxu0 0
        %938 = vmatpush1.bf16.msra.mxu0 0
        %939 = vmatprep.subr.bf16.mxu0 0
        %940 = vmatpush1.bf16.msra.mxu0 0
        %941 = vmatprep.subr.bf16.mxu0 0
        %942 = vmatpush1.bf16.msra.mxu0 0
        %943 = vmatprep.subr.bf16.mxu0 0
        %944 = vmatpush1.bf16.msra.mxu0 0
        %945 = vmatprep.subr.bf16.mxu0 0
        %946 = vmatpush1.bf16.msra.mxu0 0
        %947 = vmatprep.subr.bf16.mxu0 0
        %948 = vmatpush1.bf16.msra.mxu0 0
        %949 = vmatprep.subr.bf16.mxu0 0
        %950 = vmatpush1.bf16.msra.mxu0 0
        %951 = vmatprep.subr.bf16.mxu0 0
        %952 = vmatpush1.bf16.msra.mxu0 %v931
        %953 = vmatprep.subr.bf16.mxu0 0
        %954 = vmatpush2.bf16.msra.mxu0 0
        %955 = vmatprep.subr.bf16.mxu0 0
        %956 = vmatpush2.bf16.msra.mxu0 0
        %957 = vmatprep.subr.bf16.mxu0 0
        %958 = vmatpush2.bf16.msra.mxu0 0
        %959 = vmatprep.subr.bf16.mxu0 0
        %960 = vmatpush2.bf16.msra.mxu0 0
        %961 = vmatprep.subr.bf16.mxu0 0
        %962 = vmatpush2.bf16.msra.mxu0 0
        %963 = vmatprep.subr.bf16.mxu0 0
        %964 = vmatpush2.bf16.msra.mxu0 0
        %965 = vmatprep.subr.bf16.mxu0 0
        %966 = vmatpush2.bf16.msra.mxu0 0
        %967 = vmatprep.subr.bf16.mxu0 0
        %968 = vmatpush2.bf16.msra.mxu0 0
        %969 = vmatprep.mubr.bf16.mxu0 0
        %970 = vmatmul.mubr.bf16.gmra.mxu0 %v935
        %v971 = vpop.f32.mrf.mxu0
        %v972 = vadd.f32 0.0, %v971
        %v973 = vpop.f32.mrf.mxu0
        %v974 = vpop.f32.mrf.mxu0
        %v975 = vpop.f32.mrf.mxu0
        %976 = vdwg.mxu0
        %v977 = vld [vmem:[%s2] sm:$0xf]
        %v979 = vsel %vm933, %v977, 0
        %981 = vmatprep.subr.bf16.mxu0 0
        %982 = vmatpush1.bf16.msra.mxu0 0
        %983 = vmatprep.subr.bf16.mxu0 0
        %984 = vmatpush1.bf16.msra.mxu0 0
        %985 = vmatprep.subr.bf16.mxu0 0
        %986 = vmatpush1.bf16.msra.mxu0 0
        %987 = vmatprep.subr.bf16.mxu0 0
        %988 = vmatpush1.bf16.msra.mxu0 0
        %989 = vmatprep.subr.bf16.mxu0 0
        %990 = vmatpush1.bf16.msra.mxu0 0
        %991 = vmatprep.subr.bf16.mxu0 0
        %992 = vmatpush1.bf16.msra.mxu0 0
        %993 = vmatprep.subr.bf16.mxu0 0
        %994 = vmatpush1.bf16.msra.mxu0 0
        %995 = vmatprep.subr.bf16.mxu0 0
        %996 = vmatpush1.bf16.msra.mxu0 %v931
        %997 = vmatprep.subr.bf16.mxu0 0
        %998 = vmatpush2.bf16.msra.mxu0 0
        %999 = vmatprep.subr.bf16.mxu0 0
        %1000 = vmatpush2.bf16.msra.mxu0 0
        %1001 = vmatprep.subr.bf16.mxu0 0
        %1002 = vmatpush2.bf16.msra.mxu0 0
        %1003 = vmatprep.subr.bf16.mxu0 0
        %1004 = vmatpush2.bf16.msra.mxu0 0
        %1005 = vmatprep.subr.bf16.mxu0 0
        %1006 = vmatpush2.bf16.msra.mxu0 0
        %1007 = vmatprep.subr.bf16.mxu0 0
        %1008 = vmatpush2.bf16.msra.mxu0 0
        %1009 = vmatprep.subr.bf16.mxu0 0
        %1010 = vmatpush2.bf16.msra.mxu0 0
        %1011 = vmatprep.subr.bf16.mxu0 0
        %1012 = vmatpush2.bf16.msra.mxu0 0
        %1013 = vmatprep.mubr.bf16.mxu0 0
        %1014 = vmatmul.mubr.bf16.gmra.mxu0 %v979
        %v1015 = vpop.f32.mrf.mxu0
        %v1016 = vadd.f32 0.0, %v1015
        %v1017 = vpop.f32.mrf.mxu0
        %v1018 = vpop.f32.mrf.mxu0
        %v1019 = vpop.f32.mrf.mxu0
        %1020 = vdwg.mxu0
        %v1021 = vmax.f32 %v972, %v1016
        %v1022 = vpack.c.bf16 %v1021, %v1021
        %v1023 = vld [vmem:[#allocation2] sm:$0xf]
        %v1024 = vld [vmem:[#allocation2 + $0x4] sm:$0xf]
        %v1025 = vld [vmem:[#allocation2 + $0x8] sm:$0xf]
        %v1026 = vld [vmem:[#allocation2 + $0xc] sm:$0xf]
        %v1027 = vld [vmem:[#allocation2 + $0x10] sm:$0xf]
        %v1028 = vld [vmem:[#allocation2 + $0x14] sm:$0xf]
        %v1029 = vld [vmem:[#allocation2 + $0x18] sm:$0xf]
        %v1030 = vld [vmem:[#allocation2 + $0x1c] sm:$0xf]
        %v1039 = vunpack.c.l.b16 %v1023
        %v1040 = vunpack.c.l.b16 %v1024
        %v1041 = vunpack.c.l.b16 %v1025
        %v1042 = vunpack.c.l.b16 %v1026
        %v1043 = vunpack.c.l.b16 %v1027
        %v1044 = vunpack.c.l.b16 %v1028
        %v1045 = vunpack.c.l.b16 %v1029
        %v1046 = vunpack.c.l.b16 %v1030
        %v1047 = vpack.c.b16 %v1040, %v1039
        %v1048 = vpack.c.b16 %v1042, %v1041
        %v1049 = vpack.c.b16 %v1044, %v1043
        %v1050 = vpack.c.b16 %v1046, %v1045
        %vm1055 = vcmask 523264
        %v1057 = vsel %vm1055, %v1022, 0
        %1059 = vmatprep.subr.bf16.mxu0 0
        %1060 = vmatpush1.bf16.msra.mxu0 0
        %1061 = vmatprep.subr.bf16.mxu0 0
        %1062 = vmatpush1.bf16.msra.mxu0 0
        %1063 = vmatprep.subr.bf16.mxu0 0
        %1064 = vmatpush1.bf16.msra.mxu0 0
        %1065 = vmatprep.subr.bf16.mxu0 0
        %1066 = vmatpush1.bf16.msra.mxu0 0
        %1067 = vmatprep.subr.bf16.mxu0 0
        %1068 = vmatpush1.bf16.msra.mxu0 %v1050
        %1069 = vmatprep.subr.bf16.mxu0 0
        %1070 = vmatpush1.bf16.msra.mxu0 %v1049
        %1071 = vmatprep.subr.bf16.mxu0 0
        %1072 = vmatpush1.bf16.msra.mxu0 %v1048
        %1073 = vmatprep.subr.bf16.mxu0 0
        %1074 = vmatpush1.bf16.msra.mxu0 %v1047
        %1075 = vmatprep.subr.bf16.mxu0 0
        %1076 = vmatpush2.bf16.msra.mxu0 0
        %1077 = vmatprep.subr.bf16.mxu0 0
        %1078 = vmatpush2.bf16.msra.mxu0 0
        %1079 = vmatprep.subr.bf16.mxu0 0
        %1080 = vmatpush2.bf16.msra.mxu0 0
        %1081 = vmatprep.subr.bf16.mxu0 0
        %1082 = vmatpush2.bf16.msra.mxu0 0
        %1083 = vmatprep.subr.bf16.mxu0 0
        %1084 = vmatpush2.bf16.msra.mxu0 0
        %1085 = vmatprep.subr.bf16.mxu0 0
        %1086 = vmatpush2.bf16.msra.mxu0 0
        %1087 = vmatprep.subr.bf16.mxu0 0
        %1088 = vmatpush2.bf16.msra.mxu0 0
        %1089 = vmatprep.subr.bf16.mxu0 0
        %1090 = vmatpush2.bf16.msra.mxu0 0
        %1091 = vmatprep.mubr.bf16.mxu0 0
        %1092 = vmatmul.mubr.bf16.gmra.mxu0 %v1057
        %v1093 = vpop.f32.mrf.mxu0
        %v1094 = vadd.f32 0.0, %v1093
        %v1095 = vpop.f32.mrf.mxu0
        %v1096 = vpop.f32.mrf.mxu0
        %v1097 = vpop.f32.mrf.mxu0
        %1098 = vdwg.mxu0
        %v1099 = vld [vmem:[#allocation4] sm:$0xf]
        %v1100 = vld [vmem:[#allocation4 + $0x4] sm:$0xf]
        %v1101 = vld [vmem:[#allocation4 + $0x8] sm:$0xf]
        %v1102 = vld [vmem:[#allocation4 + $0xc] sm:$0xf]
        %v1103 = vld [vmem:[#allocation4 + $0x10] sm:$0xf]
        %v1104 = vld [vmem:[#allocation4 + $0x14] sm:$0xf]
        %v1105 = vld [vmem:[#allocation4 + $0x18] sm:$0xf]
        %v1106 = vld [vmem:[#allocation4 + $0x1c] sm:$0xf]
        %v1115 = vunpack.c.l.b16 %v1099
        %v1116 = vunpack.c.l.b16 %v1100
        %v1117 = vunpack.c.l.b16 %v1101
        %v1118 = vunpack.c.l.b16 %v1102
        %v1119 = vunpack.c.l.b16 %v1103
        %v1120 = vunpack.c.l.b16 %v1104
        %v1121 = vunpack.c.l.b16 %v1105
        %v1122 = vunpack.c.l.b16 %v1106
        %v1123 = vpack.c.b16 %v1116, %v1115
        %v1124 = vpack.c.b16 %v1118, %v1117
        %v1125 = vpack.c.b16 %v1120, %v1119
        %v1126 = vpack.c.b16 %v1122, %v1121
        %1131 = vmatprep.subr.bf16.mxu0 0
        %1132 = vmatpush1.bf16.msra.mxu0 0
        %1133 = vmatprep.subr.bf16.mxu0 0
        %1134 = vmatpush1.bf16.msra.mxu0 0
        %1135 = vmatprep.subr.bf16.mxu0 0
        %1136 = vmatpush1.bf16.msra.mxu0 0
        %1137 = vmatprep.subr.bf16.mxu0 0
        %1138 = vmatpush1.bf16.msra.mxu0 0
        %1139 = vmatprep.subr.bf16.mxu0 0
        %1140 = vmatpush1.bf16.msra.mxu0 %v1126
        %1141 = vmatprep.subr.bf16.mxu0 0
        %1142 = vmatpush1.bf16.msra.mxu0 %v1125
        %1143 = vmatprep.subr.bf16.mxu0 0
        %1144 = vmatpush1.bf16.msra.mxu0 %v1124
        %1145 = vmatprep.subr.bf16.mxu0 0
        %1146 = vmatpush1.bf16.msra.mxu0 %v1123
        %1147 = vmatprep.subr.bf16.mxu0 0
        %1148 = vmatpush2.bf16.msra.mxu0 0
        %1149 = vmatprep.subr.bf16.mxu0 0
        %1150 = vmatpush2.bf16.msra.mxu0 0
        %1151 = vmatprep.subr.bf16.mxu0 0
        %1152 = vmatpush2.bf16.msra.mxu0 0
        %1153 = vmatprep.subr.bf16.mxu0 0
        %1154 = vmatpush2.bf16.msra.mxu0 0
        %1155 = vmatprep.subr.bf16.mxu0 0
        %1156 = vmatpush2.bf16.msra.mxu0 0
        %1157 = vmatprep.subr.bf16.mxu0 0
        %1158 = vmatpush2.bf16.msra.mxu0 0
        %1159 = vmatprep.subr.bf16.mxu0 0
        %1160 = vmatpush2.bf16.msra.mxu0 0
        %1161 = vmatprep.subr.bf16.mxu0 0
        %1162 = vmatpush2.bf16.msra.mxu0 0
        %1163 = vmatprep.mubr.bf16.mxu0 0
        %1164 = vmatmul.mubr.bf16.gmra.mxu0 %v1057
        %v1165 = vpop.f32.mrf.mxu0
        %v1166 = vadd.f32 0.0, %v1165
        %v1167 = vpop.f32.mrf.mxu0
        %v1168 = vpop.f32.mrf.mxu0
        %v1169 = vpop.f32.mrf.mxu0
        %1170 = vdwg.mxu0
        %v1171 = vmax.f32 %v1094, %v1166
        %v1172 = vpack.c.bf16 %v1171, %v1171
        %v1173 = vld [vmem:[%s5] sm:$0xf]
        %vm1174 = vcmask 64512
        %v1176 = vsel %vm1174, %v1173, 0
        %vm1178 = vcmask 1043456
        %v1180 = vsel %vm1178, %v1172, 0
        %1182 = vmatprep.subr.bf16.mxu0 0
        %1183 = vmatpush1.bf16.msra.mxu0 0
        %1184 = vmatprep.subr.bf16.mxu0 0
        %1185 = vmatpush1.bf16.msra.mxu0 0
        %1186 = vmatprep.subr.bf16.mxu0 0
        %1187 = vmatpush1.bf16.msra.mxu0 0
        %1188 = vmatprep.subr.bf16.mxu0 0
        %1189 = vmatpush1.bf16.msra.mxu0 0
        %1190 = vmatprep.subr.bf16.mxu0 0
        %1191 = vmatpush1.bf16.msra.mxu0 0
        %1192 = vmatprep.subr.bf16.mxu0 0
        %1193 = vmatpush1.bf16.msra.mxu0 0
        %1194 = vmatprep.subr.bf16.mxu0 0
        %1195 = vmatpush1.bf16.msra.mxu0 0
        %1196 = vmatprep.subr.bf16.mxu0 0
        %1197 = vmatpush1.bf16.msra.mxu0 %v1180
        %1198 = vmatprep.subr.bf16.mxu0 0
        %1199 = vmatpush2.bf16.msra.mxu0 0
        %1200 = vmatprep.subr.bf16.mxu0 0
        %1201 = vmatpush2.bf16.msra.mxu0 0
        %1202 = vmatprep.subr.bf16.mxu0 0
        %1203 = vmatpush2.bf16.msra.mxu0 0
        %1204 = vmatprep.subr.bf16.mxu0 0
        %1205 = vmatpush2.bf16.msra.mxu0 0
        %1206 = vmatprep.subr.bf16.mxu0 0
        %1207 = vmatpush2.bf16.msra.mxu0 0
        %1208 = vmatprep.subr.bf16.mxu0 0
        %1209 = vmatpush2.bf16.msra.mxu0 0
        %1210 = vmatprep.subr.bf16.mxu0 0
        %1211 = vmatpush2.bf16.msra.mxu0 0
        %1212 = vmatprep.subr.bf16.mxu0 0
        %1213 = vmatpush2.bf16.msra.mxu0 0
        %1214 = vmatprep.mubr.bf16.mxu0 0
        %1215 = vmatmul.mubr.bf16.gmra.mxu0 %v1176
        %v1216 = vpop.f32.mrf.mxu0
        %v1217 = vadd.f32 0.0, %v1216
        %v1218 = vpop.f32.mrf.mxu0
        %v1219 = vpop.f32.mrf.mxu0
        %v1220 = vpop.f32.mrf.mxu0
        %1221 = vdwg.mxu0
        %v1222 = vpack.c.bf16 %v1217, %v1217
        %v1223 = vld [vmem:[%s7] sm:$0xf]
        %v1224 = vld [vmem:[%s7 + $0x4] sm:$0xf]
        %v1225 = vld [vmem:[%s7 + $0x8] sm:$0xf]
        %v1226 = vld [vmem:[%s7 + $0xc] sm:$0xf]
        %s1227 = scalar_lea.vmem %s7, 16
        %v1228 = vld [vmem:[%s1227] sm:$0xf]
        %v1229 = vld [vmem:[%s1227 + $0x4] sm:$0xf]
        %v1230 = vld [vmem:[%s1227 + $0x8] sm:$0xf]
        %v1231 = vld [vmem:[%s1227 + $0xc] sm:$0xf]
        %v1236 = vunpack.c.l.b16 %v1228
        %v1237 = vunpack.c.l.b16 %v1229
        %v1238 = vunpack.c.l.b16 %v1230
        %v1239 = vunpack.c.l.b16 %v1231
        %v1240 = vpack.c.b16 %v1237, %v1236
        %v1241 = vpack.c.b16 %v1239, %v1238
        %vm1244 = vcmask 261120
        %v1245 = vsel %vm1244, %v1172, 0
        %1247 = vmatprep.subr.bf16.mxu0 0
        %1248 = vmatpush1.bf16.msra.mxu0 0
        %1249 = vmatprep.subr.bf16.mxu0 0
        %1250 = vmatpush1.bf16.msra.mxu0 0
        %1251 = vmatprep.subr.bf16.mxu0 0
        %1252 = vmatpush1.bf16.msra.mxu0 0
        %1253 = vmatprep.subr.bf16.mxu0 0
        %1254 = vmatpush1.bf16.msra.mxu0 0
        %1255 = vmatprep.subr.bf16.mxu0 0
        %1256 = vmatpush1.bf16.msra.mxu0 0
        %1257 = vmatprep.subr.bf16.mxu0 0
        %1258 = vmatpush1.bf16.msra.mxu0 0
        %1259 = vmatprep.subr.bf16.mxu0 0
        %1260 = vmatpush1.bf16.msra.mxu0 %v1241
        %1261 = vmatprep.subr.bf16.mxu0 0
        %1262 = vmatpush1.bf16.msra.mxu0 %v1240
        %1263 = vmatprep.subr.bf16.mxu0 0
        %1264 = vmatpush2.bf16.msra.mxu0 0
        %1265 = vmatprep.subr.bf16.mxu0 0
        %1266 = vmatpush2.bf16.msra.mxu0 0
        %1267 = vmatprep.subr.bf16.mxu0 0
        %1268 = vmatpush2.bf16.msra.mxu0 0
        %1269 = vmatprep.subr.bf16.mxu0 0
        %1270 = vmatpush2.bf16.msra.mxu0 0
        %1271 = vmatprep.subr.bf16.mxu0 0
        %1272 = vmatpush2.bf16.msra.mxu0 0
        %1273 = vmatprep.subr.bf16.mxu0 0
        %1274 = vmatpush2.bf16.msra.mxu0 0
        %1275 = vmatprep.subr.bf16.mxu0 0
        %1276 = vmatpush2.bf16.msra.mxu0 0
        %1277 = vmatprep.subr.bf16.mxu0 0
        %1278 = vmatpush2.bf16.msra.mxu0 0
        %1279 = vmatprep.mubr.bf16.mxu0 0
        %1280 = vmatmul.mubr.bf16.gmra.mxu0 %v1245
        %v1281 = vpop.f32.mrf.mxu0
        %v1282 = vadd.f32 0.0, %v1281
        %v1283 = vpop.f32.mrf.mxu0
        %v1284 = vpop.f32.mrf.mxu0
        %v1285 = vpop.f32.mrf.mxu0
        %1286 = vdwg.mxu0
        %v1291 = vunpack.c.l.b16 %v1223
        %v1292 = vunpack.c.l.b16 %v1224
        %v1293 = vunpack.c.l.b16 %v1225
        %v1294 = vunpack.c.l.b16 %v1226
        %v1295 = vpack.c.b16 %v1292, %v1291
        %v1296 = vpack.c.b16 %v1294, %v1293
        %v1300 = vsel %vm1244, %v1222, 0
        %1302 = vmatprep.subr.bf16.mxu0 0
        %1303 = vmatpush1.bf16.msra.mxu0 0
        %1304 = vmatprep.subr.bf16.mxu0 0
        %1305 = vmatpush1.bf16.msra.mxu0 0
        %1306 = vmatprep.subr.bf16.mxu0 0
        %1307 = vmatpush1.bf16.msra.mxu0 0
        %1308 = vmatprep.subr.bf16.mxu0 0
        %1309 = vmatpush1.bf16.msra.mxu0 0
        %1310 = vmatprep.subr.bf16.mxu0 0
        %1311 = vmatpush1.bf16.msra.mxu0 0
        %1312 = vmatprep.subr.bf16.mxu0 0
        %1313 = vmatpush1.bf16.msra.mxu0 0
        %1314 = vmatprep.subr.bf16.mxu0 0
        %1315 = vmatpush1.bf16.msra.mxu0 %v1296
        %1316 = vmatprep.subr.bf16.mxu0 0
        %1317 = vmatpush1.bf16.msra.mxu0 %v1295
        %1318 = vmatprep.subr.bf16.mxu0 0
        %1319 = vmatpush2.bf16.msra.mxu0 0
        %1320 = vmatprep.subr.bf16.mxu0 0
        %1321 = vmatpush2.bf16.msra.mxu0 0
        %1322 = vmatprep.subr.bf16.mxu0 0
        %1323 = vmatpush2.bf16.msra.mxu0 0
        %1324 = vmatprep.subr.bf16.mxu0 0
        %1325 = vmatpush2.bf16.msra.mxu0 0
        %1326 = vmatprep.subr.bf16.mxu0 0
        %1327 = vmatpush2.bf16.msra.mxu0 0
        %1328 = vmatprep.subr.bf16.mxu0 0
        %1329 = vmatpush2.bf16.msra.mxu0 0
        %1330 = vmatprep.subr.bf16.mxu0 0
        %1331 = vmatpush2.bf16.msra.mxu0 0
        %1332 = vmatprep.subr.bf16.mxu0 0
        %1333 = vmatpush2.bf16.msra.mxu0 0
        %1334 = vmatprep.mubr.bf16.mxu0 0
        %1335 = vmatmul.mubr.bf16.gmra.mxu0 %v1300
        %v1336 = vpop.f32.mrf.mxu0
        %v1337 = vadd.f32 %v1282, %v1336
        %v1338 = vpop.f32.mrf.mxu0
        %v1339 = vpop.f32.mrf.mxu0
        %v1340 = vpop.f32.mrf.mxu0
        %1341 = vdwg.mxu0
        %s1342 = scalar_lea.vmem %s5, 8
        %v1343 = vld [vmem:[%s1342] sm:$0xf]
        %v1345 = vsel %vm1174, %v1343, 0
        %1347 = vmatprep.subr.bf16.mxu0 0
        %1348 = vmatpush1.bf16.msra.mxu0 0
        %1349 = vmatprep.subr.bf16.mxu0 0
        %1350 = vmatpush1.bf16.msra.mxu0 0
        %1351 = vmatprep.subr.bf16.mxu0 0
        %1352 = vmatpush1.bf16.msra.mxu0 0
        %1353 = vmatprep.subr.bf16.mxu0 0
        %1354 = vmatpush1.bf16.msra.mxu0 0
        %1355 = vmatprep.subr.bf16.mxu0 0
        %1356 = vmatpush1.bf16.msra.mxu0 0
        %1357 = vmatprep.subr.bf16.mxu0 0
        %1358 = vmatpush1.bf16.msra.mxu0 0
        %1359 = vmatprep.subr.bf16.mxu0 0
        %1360 = vmatpush1.bf16.msra.mxu0 0
        %1361 = vmatprep.subr.bf16.mxu0 0
        %1362 = vmatpush1.bf16.msra.mxu0 %v1180
        %1363 = vmatprep.subr.bf16.mxu0 0
        %1364 = vmatpush2.bf16.msra.mxu0 0
        %1365 = vmatprep.subr.bf16.mxu0 0
        %1366 = vmatpush2.bf16.msra.mxu0 0
        %1367 = vmatprep.subr.bf16.mxu0 0
        %1368 = vmatpush2.bf16.msra.mxu0 0
        %1369 = vmatprep.subr.bf16.mxu0 0
        %1370 = vmatpush2.bf16.msra.mxu0 0
        %1371 = vmatprep.subr.bf16.mxu0 0
        %1372 = vmatpush2.bf16.msra.mxu0 0
        %1373 = vmatprep.subr.bf16.mxu0 0
        %1374 = vmatpush2.bf16.msra.mxu0 0
        %1375 = vmatprep.subr.bf16.mxu0 0
        %1376 = vmatpush2.bf16.msra.mxu0 0
        %1377 = vmatprep.subr.bf16.mxu0 0
        %1378 = vmatpush2.bf16.msra.mxu0 0
        %1379 = vmatprep.mubr.bf16.mxu0 0
        %1380 = vmatmul.mubr.bf16.gmra.mxu0 %v1345
        %v1381 = vpop.f32.mrf.mxu0
        %v1382 = vadd.f32 0.0, %v1381
        %v1383 = vpop.f32.mrf.mxu0
        %v1384 = vpop.f32.mrf.mxu0
        %v1385 = vpop.f32.mrf.mxu0
        %1386 = vdwg.mxu0
        %v1387 = vpack.c.bf16 %v1382, %v1382
        %s1388 = scalar_lea.vmem %s7, 32
        %v1389 = vld [vmem:[%s1388] sm:$0xf]
        %v1390 = vld [vmem:[%s1388 + $0x4] sm:$0xf]
        %v1391 = vld [vmem:[%s1388 + $0x8] sm:$0xf]
        %v1392 = vld [vmem:[%s1388 + $0xc] sm:$0xf]
        %v1397 = vunpack.c.l.b16 %v1389
        %v1398 = vunpack.c.l.b16 %v1390
        %v1399 = vunpack.c.l.b16 %v1391
        %v1400 = vunpack.c.l.b16 %v1392
        %v1401 = vpack.c.b16 %v1398, %v1397
        %v1402 = vpack.c.b16 %v1400, %v1399
        %v1406 = vsel %vm1244, %v1387, 0
        %1408 = vmatprep.subr.bf16.mxu0 0
        %1409 = vmatpush1.bf16.msra.mxu0 0
        %1410 = vmatprep.subr.bf16.mxu0 0
        %1411 = vmatpush1.bf16.msra.mxu0 0
        %1412 = vmatprep.subr.bf16.mxu0 0
        %1413 = vmatpush1.bf16.msra.mxu0 0
        %1414 = vmatprep.subr.bf16.mxu0 0
        %1415 = vmatpush1.bf16.msra.mxu0 0
        %1416 = vmatprep.subr.bf16.mxu0 0
        %1417 = vmatpush1.bf16.msra.mxu0 0
        %1418 = vmatprep.subr.bf16.mxu0 0
        %1419 = vmatpush1.bf16.msra.mxu0 0
        %1420 = vmatprep.subr.bf16.mxu0 0
        %1421 = vmatpush1.bf16.msra.mxu0 %v1402
        %1422 = vmatprep.subr.bf16.mxu0 0
        %1423 = vmatpush1.bf16.msra.mxu0 %v1401
        %1424 = vmatprep.subr.bf16.mxu0 0
        %1425 = vmatpush2.bf16.msra.mxu0 0
        %1426 = vmatprep.subr.bf16.mxu0 0
        %1427 = vmatpush2.bf16.msra.mxu0 0
        %1428 = vmatprep.subr.bf16.mxu0 0
        %1429 = vmatpush2.bf16.msra.mxu0 0
        %1430 = vmatprep.subr.bf16.mxu0 0
        %1431 = vmatpush2.bf16.msra.mxu0 0
        %1432 = vmatprep.subr.bf16.mxu0 0
        %1433 = vmatpush2.bf16.msra.mxu0 0
        %1434 = vmatprep.subr.bf16.mxu0 0
        %1435 = vmatpush2.bf16.msra.mxu0 0
        %1436 = vmatprep.subr.bf16.mxu0 0
        %1437 = vmatpush2.bf16.msra.mxu0 0
        %1438 = vmatprep.subr.bf16.mxu0 0
        %1439 = vmatpush2.bf16.msra.mxu0 0
        %1440 = vmatprep.mubr.bf16.mxu0 0
        %1441 = vmatmul.mubr.bf16.gmra.mxu0 %v1406
        %v1442 = vpop.f32.mrf.mxu0
        %v1443 = vadd.f32 0.0, %v1442
        %v1444 = vpop.f32.mrf.mxu0
        %v1445 = vpop.f32.mrf.mxu0
        %v1446 = vpop.f32.mrf.mxu0
        %1447 = vdwg.mxu0
        %v1448 = vadd.f32 %v1337, %v1443
        %v1449 = vld [vmem:[%s8] sm:$0x1]
        %v1451 = vlaneseq
        %v1452 = vshrl.u32 %v1451, 7
        %v1453 = vsub.s32 0, %v1452
        %v1454 = vrot.slane %v1449, %v1453
        %v1456 = vmul.f32 %v1448, %v1454
        %v1457 = vld [vmem:[#allocation7] sm:$0x1]
        %v1459 = vlaneseq
        %v1460 = vshrl.u32 %v1459, 7
        %v1461 = vsub.s32 0, %v1460
        %v1462 = vrot.slane %v1457, %v1461
        %v1464 = vadd.f32 %v1456, %v1462
        %v1465 = vmax.f32 %v1464, 0.0
        %v1466 = vpack.c.bf16 %v1465, %v1465
        %v1468 = vsel %vm1178, %v1466, 0
        %1470 = vmatprep.subr.bf16.mxu0 0
        %1471 = vmatpush1.bf16.msra.mxu0 0
        %1472 = vmatprep.subr.bf16.mxu0 0
        %1473 = vmatpush1.bf16.msra.mxu0 0
        %1474 = vmatprep.subr.bf16.mxu0 0
        %1475 = vmatpush1.bf16.msra.mxu0 0
        %1476 = vmatprep.subr.bf16.mxu0 0
        %1477 = vmatpush1.bf16.msra.mxu0 0
        %1478 = vmatprep.subr.bf16.mxu0 0
        %1479 = vmatpush1.bf16.msra.mxu0 0
        %1480 = vmatprep.subr.bf16.mxu0 0
        %1481 = vmatpush1.bf16.msra.mxu0 0
        %1482 = vmatprep.subr.bf16.mxu0 0
        %1483 = vmatpush1.bf16.msra.mxu0 0
        %1484 = vmatprep.subr.bf16.mxu0 0
        %1485 = vmatpush1.bf16.msra.mxu0 %v1468
        %1486 = vmatprep.subr.bf16.mxu0 0
        %1487 = vmatpush2.bf16.msra.mxu0 0
        %1488 = vmatprep.subr.bf16.mxu0 0
        %1489 = vmatpush2.bf16.msra.mxu0 0
        %1490 = vmatprep.subr.bf16.mxu0 0
        %1491 = vmatpush2.bf16.msra.mxu0 0
        %1492 = vmatprep.subr.bf16.mxu0 0
        %1493 = vmatpush2.bf16.msra.mxu0 0
        %1494 = vmatprep.subr.bf16.mxu0 0
        %1495 = vmatpush2.bf16.msra.mxu0 0
        %1496 = vmatprep.subr.bf16.mxu0 0
        %1497 = vmatpush2.bf16.msra.mxu0 0
        %1498 = vmatprep.subr.bf16.mxu0 0
        %1499 = vmatpush2.bf16.msra.mxu0 0
        %1500 = vmatprep.subr.bf16.mxu0 0
        %1501 = vmatpush2.bf16.msra.mxu0 0
        %1502 = vmatprep.mubr.bf16.mxu0 0
        %1503 = vmatmul.mubr.bf16.gmra.mxu0 %v1176
        %v1504 = vpop.f32.mrf.mxu0
        %v1505 = vadd.f32 0.0, %v1504
        %v1506 = vpop.f32.mrf.mxu0
        %v1507 = vpop.f32.mrf.mxu0
        %v1508 = vpop.f32.mrf.mxu0
        %1509 = vdwg.mxu0
        %v1510 = vpack.c.bf16 %v1505, %v1505
        %v1511 = vld [vmem:[%s10] sm:$0xf]
        %v1512 = vld [vmem:[%s10 + $0x4] sm:$0xf]
        %v1513 = vld [vmem:[%s10 + $0x8] sm:$0xf]
        %v1514 = vld [vmem:[%s10 + $0xc] sm:$0xf]
        %v1515 = vld [vmem:[%s10 + $0x10] sm:$0xf]
        %v1516 = vld [vmem:[%s10 + $0x14] sm:$0xf]
        %v1517 = vld [vmem:[%s10 + $0x18] sm:$0xf]
        %v1518 = vld [vmem:[%s10 + $0x1c] sm:$0xf]
        %s1519 = scalar_lea.vmem %s10, 32
        %v1520 = vld [vmem:[%s1519] sm:$0xf]
        %v1521 = vld [vmem:[%s1519 + $0x4] sm:$0xf]
        %v1522 = vld [vmem:[%s1519 + $0x8] sm:$0xf]
        %v1523 = vld [vmem:[%s1519 + $0xc] sm:$0xf]
        %v1524 = vld [vmem:[%s1519 + $0x10] sm:$0xf]
        %v1525 = vld [vmem:[%s1519 + $0x14] sm:$0xf]
        %v1526 = vld [vmem:[%s1519 + $0x18] sm:$0xf]
        %v1527 = vld [vmem:[%s1519 + $0x1c] sm:$0xf]
        %v1536 = vunpack.c.l.b16 %v1520
        %v1537 = vunpack.c.l.b16 %v1521
        %v1538 = vunpack.c.l.b16 %v1522
        %v1539 = vunpack.c.l.b16 %v1523
        %v1540 = vunpack.c.l.b16 %v1524
        %v1541 = vunpack.c.l.b16 %v1525
        %v1542 = vunpack.c.l.b16 %v1526
        %v1543 = vunpack.c.l.b16 %v1527
        %v1544 = vpack.c.b16 %v1537, %v1536
        %v1545 = vpack.c.b16 %v1539, %v1538
        %v1546 = vpack.c.b16 %v1541, %v1540
        %v1547 = vpack.c.b16 %v1543, %v1542
        %v1552 = vsel %vm1055, %v1466, 0
        %1554 = vmatprep.subr.bf16.mxu0 0
        %1555 = vmatpush1.bf16.msra.mxu0 0
        %1556 = vmatprep.subr.bf16.mxu0 0
        %1557 = vmatpush1.bf16.msra.mxu0 0
        %1558 = vmatprep.subr.bf16.mxu0 0
        %1559 = vmatpush1.bf16.msra.mxu0 0
        %1560 = vmatprep.subr.bf16.mxu0 0
        %1561 = vmatpush1.bf16.msra.mxu0 0
        %1562 = vmatprep.subr.bf16.mxu0 0
        %1563 = vmatpush1.bf16.msra.mxu0 %v1547
        %1564 = vmatprep.subr.bf16.mxu0 0
        %1565 = vmatpush1.bf16.msra.mxu0 %v1546
        %1566 = vmatprep.subr.bf16.mxu0 0
        %1567 = vmatpush1.bf16.msra.mxu0 %v1545
        %1568 = vmatprep.subr.bf16.mxu0 0
        %1569 = vmatpush1.bf16.msra.mxu0 %v1544
        %1570 = vmatprep.subr.bf16.mxu0 0
        %1571 = vmatpush2.bf16.msra.mxu0 0
        %1572 = vmatprep.subr.bf16.mxu0 0
        %1573 = vmatpush2.bf16.msra.mxu0 0
        %1574 = vmatprep.subr.bf16.mxu0 0
        %1575 = vmatpush2.bf16.msra.mxu0 0
        %1576 = vmatprep.subr.bf16.mxu0 0
        %1577 = vmatpush2.bf16.msra.mxu0 0
        %1578 = vmatprep.subr.bf16.mxu0 0
        %1579 = vmatpush2.bf16.msra.mxu0 0
        %1580 = vmatprep.subr.bf16.mxu0 0
        %1581 = vmatpush2.bf16.msra.mxu0 0
        %1582 = vmatprep.subr.bf16.mxu0 0
        %1583 = vmatpush2.bf16.msra.mxu0 0
        %1584 = vmatprep.subr.bf16.mxu0 0
        %1585 = vmatpush2.bf16.msra.mxu0 0
        %1586 = vmatprep.mubr.bf16.mxu0 0
        %1587 = vmatmul.mubr.bf16.gmra.mxu0 %v1552
        %v1588 = vpop.f32.mrf.mxu0
        %v1589 = vadd.f32 0.0, %v1588
        %v1590 = vpop.f32.mrf.mxu0
        %v1591 = vpop.f32.mrf.mxu0
        %v1592 = vpop.f32.mrf.mxu0
        %1593 = vdwg.mxu0
        %v1602 = vunpack.c.l.b16 %v1511
        %v1603 = vunpack.c.l.b16 %v1512
        %v1604 = vunpack.c.l.b16 %v1513
        %v1605 = vunpack.c.l.b16 %v1514
        %v1606 = vunpack.c.l.b16 %v1515
        %v1607 = vunpack.c.l.b16 %v1516
        %v1608 = vunpack.c.l.b16 %v1517
        %v1609 = vunpack.c.l.b16 %v1518
        %v1610 = vpack.c.b16 %v1603, %v1602
        %v1611 = vpack.c.b16 %v1605, %v1604
        %v1612 = vpack.c.b16 %v1607, %v1606
        %v1613 = vpack.c.b16 %v1609, %v1608
        %v1619 = vsel %vm1055, %v1510, 0
        %1621 = vmatprep.subr.bf16.mxu0 0
        %1622 = vmatpush1.bf16.msra.mxu0 0
        %1623 = vmatprep.subr.bf16.mxu0 0
        %1624 = vmatpush1.bf16.msra.mxu0 0
        %1625 = vmatprep.subr.bf16.mxu0 0
        %1626 = vmatpush1.bf16.msra.mxu0 0
        %1627 = vmatprep.subr.bf16.mxu0 0
        %1628 = vmatpush1.bf16.msra.mxu0 0
        %1629 = vmatprep.subr.bf16.mxu0 0
        %1630 = vmatpush1.bf16.msra.mxu0 %v1613
        %1631 = vmatprep.subr.bf16.mxu0 0
        %1632 = vmatpush1.bf16.msra.mxu0 %v1612
        %1633 = vmatprep.subr.bf16.mxu0 0
        %1634 = vmatpush1.bf16.msra.mxu0 %v1611
        %1635 = vmatprep.subr.bf16.mxu0 0
        %1636 = vmatpush1.bf16.msra.mxu0 %v1610
        %1637 = vmatprep.subr.bf16.mxu0 0
        %1638 = vmatpush2.bf16.msra.mxu0 0
        %1639 = vmatprep.subr.bf16.mxu0 0
        %1640 = vmatpush2.bf16.msra.mxu0 0
        %1641 = vmatprep.subr.bf16.mxu0 0
        %1642 = vmatpush2.bf16.msra.mxu0 0
        %1643 = vmatprep.subr.bf16.mxu0 0
        %1644 = vmatpush2.bf16.msra.mxu0 0
        %1645 = vmatprep.subr.bf16.mxu0 0
        %1646 = vmatpush2.bf16.msra.mxu0 0
        %1647 = vmatprep.subr.bf16.mxu0 0
        %1648 = vmatpush2.bf16.msra.mxu0 0
        %1649 = vmatprep.subr.bf16.mxu0 0
        %1650 = vmatpush2.bf16.msra.mxu0 0
        %1651 = vmatprep.subr.bf16.mxu0 0
        %1652 = vmatpush2.bf16.msra.mxu0 0
        %1653 = vmatprep.mubr.bf16.mxu0 0
        %1654 = vmatmul.mubr.bf16.gmra.mxu0 %v1619
        %v1655 = vpop.f32.mrf.mxu0
        %v1656 = vadd.f32 %v1589, %v1655
        %v1657 = vpop.f32.mrf.mxu0
        %v1658 = vpop.f32.mrf.mxu0
        %v1659 = vpop.f32.mrf.mxu0
        %1660 = vdwg.mxu0
        %1661 = vmatprep.subr.bf16.mxu0 0
        %1662 = vmatpush1.bf16.msra.mxu0 0
        %1663 = vmatprep.subr.bf16.mxu0 0
        %1664 = vmatpush1.bf16.msra.mxu0 0
        %1665 = vmatprep.subr.bf16.mxu0 0
        %1666 = vmatpush1.bf16.msra.mxu0 0
        %1667 = vmatprep.subr.bf16.mxu0 0
        %1668 = vmatpush1.bf16.msra.mxu0 0
        %1669 = vmatprep.subr.bf16.mxu0 0
        %1670 = vmatpush1.bf16.msra.mxu0 0
        %1671 = vmatprep.subr.bf16.mxu0 0
        %1672 = vmatpush1.bf16.msra.mxu0 0
        %1673 = vmatprep.subr.bf16.mxu0 0
        %1674 = vmatpush1.bf16.msra.mxu0 0
        %1675 = vmatprep.subr.bf16.mxu0 0
        %1676 = vmatpush1.bf16.msra.mxu0 %v1468
        %1677 = vmatprep.subr.bf16.mxu0 0
        %1678 = vmatpush2.bf16.msra.mxu0 0
        %1679 = vmatprep.subr.bf16.mxu0 0
        %1680 = vmatpush2.bf16.msra.mxu0 0
        %1681 = vmatprep.subr.bf16.mxu0 0
        %1682 = vmatpush2.bf16.msra.mxu0 0
        %1683 = vmatprep.subr.bf16.mxu0 0
        %1684 = vmatpush2.bf16.msra.mxu0 0
        %1685 = vmatprep.subr.bf16.mxu0 0
        %1686 = vmatpush2.bf16.msra.mxu0 0
        %1687 = vmatprep.subr.bf16.mxu0 0
        %1688 = vmatpush2.bf16.msra.mxu0 0
        %1689 = vmatprep.subr.bf16.mxu0 0
        %1690 = vmatpush2.bf16.msra.mxu0 0
        %1691 = vmatprep.subr.bf16.mxu0 0
        %1692 = vmatpush2.bf16.msra.mxu0 0
        %1693 = vmatprep.mubr.bf16.mxu0 0
        %1694 = vmatmul.mubr.bf16.gmra.mxu0 %v1345
        %v1695 = vpop.f32.mrf.mxu0
        %v1696 = vadd.f32 0.0, %v1695
        %v1697 = vpop.f32.mrf.mxu0
        %v1698 = vpop.f32.mrf.mxu0
        %v1699 = vpop.f32.mrf.mxu0
        %1700 = vdwg.mxu0
        %v1701 = vpack.c.bf16 %v1696, %v1696
        %s1702 = scalar_lea.vmem %s10, 64
        %v1703 = vld [vmem:[%s1702] sm:$0xf]
        %v1704 = vld [vmem:[%s1702 + $0x4] sm:$0xf]
        %v1705 = vld [vmem:[%s1702 + $0x8] sm:$0xf]
        %v1706 = vld [vmem:[%s1702 + $0xc] sm:$0xf]
        %v1707 = vld [vmem:[%s1702 + $0x10] sm:$0xf]
        %v1708 = vld [vmem:[%s1702 + $0x14] sm:$0xf]
        %v1709 = vld [vmem:[%s1702 + $0x18] sm:$0xf]
        %v1710 = vld [vmem:[%s1702 + $0x1c] sm:$0xf]
        %v1719 = vunpack.c.l.b16 %v1703
        %v1720 = vunpack.c.l.b16 %v1704
        %v1721 = vunpack.c.l.b16 %v1705
        %v1722 = vunpack.c.l.b16 %v1706
        %v1723 = vunpack.c.l.b16 %v1707
        %v1724 = vunpack.c.l.b16 %v1708
        %v1725 = vunpack.c.l.b16 %v1709
        %v1726 = vunpack.c.l.b16 %v1710
        %v1727 = vpack.c.b16 %v1720, %v1719
        %v1728 = vpack.c.b16 %v1722, %v1721
        %v1729 = vpack.c.b16 %v1724, %v1723
        %v1730 = vpack.c.b16 %v1726, %v1725
        %v1736 = vsel %vm1055, %v1701, 0
        %1738 = vmatprep.subr.bf16.mxu0 0
        %1739 = vmatpush1.bf16.msra.mxu0 0
        %1740 = vmatprep.subr.bf16.mxu0 0
        %1741 = vmatpush1.bf16.msra.mxu0 0
        %1742 = vmatprep.subr.bf16.mxu0 0
        %1743 = vmatpush1.bf16.msra.mxu0 0
        %1744 = vmatprep.subr.bf16.mxu0 0
        %1745 = vmatpush1.bf16.msra.mxu0 0
        %1746 = vmatprep.subr.bf16.mxu0 0
        %1747 = vmatpush1.bf16.msra.mxu0 %v1730
        %1748 = vmatprep.subr.bf16.mxu0 0
        %1749 = vmatpush1.bf16.msra.mxu0 %v1729
        %1750 = vmatprep.subr.bf16.mxu0 0
        %1751 = vmatpush1.bf16.msra.mxu0 %v1728
        %1752 = vmatprep.subr.bf16.mxu0 0
        %1753 = vmatpush1.bf16.msra.mxu0 %v1727
        %1754 = vmatprep.subr.bf16.mxu0 0
        %1755 = vmatpush2.bf16.msra.mxu0 0
        %1756 = vmatprep.subr.bf16.mxu0 0
        %1757 = vmatpush2.bf16.msra.mxu0 0
        %1758 = vmatprep.subr.bf16.mxu0 0
        %1759 = vmatpush2.bf16.msra.mxu0 0
        %1760 = vmatprep.subr.bf16.mxu0 0
        %1761 = vmatpush2.bf16.msra.mxu0 0
        %1762 = vmatprep.subr.bf16.mxu0 0
        %1763 = vmatpush2.bf16.msra.mxu0 0
        %1764 = vmatprep.subr.bf16.mxu0 0
        %1765 = vmatpush2.bf16.msra.mxu0 0
        %1766 = vmatprep.subr.bf16.mxu0 0
        %1767 = vmatpush2.bf16.msra.mxu0 0
        %1768 = vmatprep.subr.bf16.mxu0 0
        %1769 = vmatpush2.bf16.msra.mxu0 0
        %1770 = vmatprep.mubr.bf16.mxu0 0
        %1771 = vmatmul.mubr.bf16.gmra.mxu0 %v1736
        %v1772 = vpop.f32.mrf.mxu0
        %v1773 = vadd.f32 0.0, %v1772
        %v1774 = vpop.f32.mrf.mxu0
        %v1775 = vpop.f32.mrf.mxu0
        %v1776 = vpop.f32.mrf.mxu0
        %1777 = vdwg.mxu0
        %v1778 = vadd.f32 %v1656, %v1773
        %v1779 = vld [vmem:[%s11] sm:$0x1]
        %v1781 = vlaneseq
        %v1782 = vshrl.u32 %v1781, 7
        %v1783 = vsub.s32 0, %v1782
        %v1784 = vrot.slane %v1779, %v1783
        %v1786 = vmul.f32 %v1778, %v1784
        %v1787 = vld [vmem:[#allocation9] sm:$0x1]
        %v1789 = vlaneseq
        %v1790 = vshrl.u32 %v1789, 7
        %v1791 = vsub.s32 0, %v1790
        %v1792 = vrot.slane %v1787, %v1791
        %v1794 = vadd.f32 %v1786, %v1792
        %v1795 = vmax.f32 %v1794, 0.0
        %v1796 = vpack.c.bf16 %v1795, %v1795
        %v1797 = vld [vmem:[#allocation12] sm:$0xf]
        %v1798 = vld [vmem:[#allocation12 + $0x4] sm:$0xf]
        %v1801 = vunpack.c.l.b16 %v1797
        %v1802 = vunpack.c.l.b16 %v1798
        %v1803 = vpack.c.b16 %v1802, %v1801
        %v1805 = vsel %vm1174, %v1803, 0
        %v1808 = vsel %vm1178, %v1796, 0
        %1810 = vmatprep.subr.bf16.mxu0 0
        %1811 = vmatpush1.bf16.msra.mxu0 0
        %1812 = vmatprep.subr.bf16.mxu0 0
        %1813 = vmatpush1.bf16.msra.mxu0 0
        %1814 = vmatprep.subr.bf16.mxu0 0
        %1815 = vmatpush1.bf16.msra.mxu0 0
        %1816 = vmatprep.subr.bf16.mxu0 0
        %1817 = vmatpush1.bf16.msra.mxu0 0
        %1818 = vmatprep.subr.bf16.mxu0 0
        %1819 = vmatpush1.bf16.msra.mxu0 0
        %1820 = vmatprep.subr.bf16.mxu0 0
        %1821 = vmatpush1.bf16.msra.mxu0 0
        %1822 = vmatprep.subr.bf16.mxu0 0
        %1823 = vmatpush1.bf16.msra.mxu0 0
        %1824 = vmatprep.subr.bf16.mxu0 0
        %1825 = vmatpush1.bf16.msra.mxu0 %v1808
        %1826 = vmatprep.subr.bf16.mxu0 0
        %1827 = vmatpush2.bf16.msra.mxu0 0
        %1828 = vmatprep.subr.bf16.mxu0 0
        %1829 = vmatpush2.bf16.msra.mxu0 0
        %1830 = vmatprep.subr.bf16.mxu0 0
        %1831 = vmatpush2.bf16.msra.mxu0 0
        %1832 = vmatprep.subr.bf16.mxu0 0
        %1833 = vmatpush2.bf16.msra.mxu0 0
        %1834 = vmatprep.subr.bf16.mxu0 0
        %1835 = vmatpush2.bf16.msra.mxu0 0
        %1836 = vmatprep.subr.bf16.mxu0 0
        %1837 = vmatpush2.bf16.msra.mxu0 0
        %1838 = vmatprep.subr.bf16.mxu0 0
        %1839 = vmatpush2.bf16.msra.mxu0 0
        %1840 = vmatprep.subr.bf16.mxu0 0
        %1841 = vmatpush2.bf16.msra.mxu0 0
        %1842 = vmatprep.mubr.bf16.mxu0 0
        %1843 = vmatmul.mubr.bf16.gmra.mxu0 %v1805
        %v1844 = vpop.f32.mrf.mxu0
        %v1845 = vadd.f32 0.0, %v1844
        %v1846 = vpop.f32.mrf.mxu0
        %v1847 = vpop.f32.mrf.mxu0
        %v1848 = vadd.f32 0.0, %v1847
        %v1849 = vpop.f32.mrf.mxu0
        %1850 = vdwg.mxu0
        %v1851 = vpack.c.bf16 %v1848, %v1845
        %v1852 = vld [vmem:[#allocation10] sm:$0xf]
        %v1853 = vld [vmem:[#allocation10 + $0x4] sm:$0xf]
        %v1854 = vld [vmem:[#allocation10 + $0x8] sm:$0xf]
        %v1855 = vld [vmem:[#allocation10 + $0xc] sm:$0xf]
        %v1856 = vld [vmem:[#allocation10 + $0x10] sm:$0xf]
        %v1857 = vld [vmem:[#allocation10 + $0x14] sm:$0xf]
        %v1858 = vld [vmem:[#allocation10 + $0x18] sm:$0xf]
        %v1859 = vld [vmem:[#allocation10 + $0x1c] sm:$0xf]
        %s1860 = scalar_lea.vmem [#allocation12], 8
        %v1861 = vld [vmem:[%s1860] sm:$0xf]
        %v1862 = vld [vmem:[%s1860 + $0x4] sm:$0xf]
        %v1865 = vunpack.c.l.b16 %v1861
        %v1866 = vunpack.c.l.b16 %v1862
        %v1867 = vpack.c.b16 %v1866, %v1865
        %v1869 = vsel %vm1174, %v1867, 0
        %1871 = vmatprep.subr.bf16.mxu0 0
        %1872 = vmatpush1.bf16.msra.mxu0 0
        %1873 = vmatprep.subr.bf16.mxu0 0
        %1874 = vmatpush1.bf16.msra.mxu0 0
        %1875 = vmatprep.subr.bf16.mxu0 0
        %1876 = vmatpush1.bf16.msra.mxu0 0
        %1877 = vmatprep.subr.bf16.mxu0 0
        %1878 = vmatpush1.bf16.msra.mxu0 0
        %1879 = vmatprep.subr.bf16.mxu0 0
        %1880 = vmatpush1.bf16.msra.mxu0 0
        %1881 = vmatprep.subr.bf16.mxu0 0
        %1882 = vmatpush1.bf16.msra.mxu0 0
        %1883 = vmatprep.subr.bf16.mxu0 0
        %1884 = vmatpush1.bf16.msra.mxu0 0
        %1885 = vmatprep.subr.bf16.mxu0 0
        %1886 = vmatpush1.bf16.msra.mxu0 %v1808
        %1887 = vmatprep.subr.bf16.mxu0 0
        %1888 = vmatpush2.bf16.msra.mxu0 0
        %1889 = vmatprep.subr.bf16.mxu0 0
        %1890 = vmatpush2.bf16.msra.mxu0 0
        %1891 = vmatprep.subr.bf16.mxu0 0
        %1892 = vmatpush2.bf16.msra.mxu0 0
        %1893 = vmatprep.subr.bf16.mxu0 0
        %1894 = vmatpush2.bf16.msra.mxu0 0
        %1895 = vmatprep.subr.bf16.mxu0 0
        %1896 = vmatpush2.bf16.msra.mxu0 0
        %1897 = vmatprep.subr.bf16.mxu0 0
        %1898 = vmatpush2.bf16.msra.mxu0 0
        %1899 = vmatprep.subr.bf16.mxu0 0
        %1900 = vmatpush2.bf16.msra.mxu0 0
        %1901 = vmatprep.subr.bf16.mxu0 0
        %1902 = vmatpush2.bf16.msra.mxu0 0
        %1903 = vmatprep.mubr.bf16.mxu0 0
        %1904 = vmatmul.mubr.bf16.gmra.mxu0 %v1869
        %v1905 = vpop.f32.mrf.mxu0
        %v1906 = vadd.f32 0.0, %v1905
        %v1907 = vpop.f32.mrf.mxu0
        %v1908 = vpop.f32.mrf.mxu0
        %v1909 = vadd.f32 0.0, %v1908
        %v1910 = vpop.f32.mrf.mxu0
        %1911 = vdwg.mxu0
        %v1912 = vpack.c.bf16 %v1909, %v1906
        %s1913 = scalar_lea.vmem [#allocation10], 32
        %v1914 = vld [vmem:[%s1913] sm:$0xf]
        %v1915 = vld [vmem:[%s1913 + $0x4] sm:$0xf]
        %v1916 = vld [vmem:[%s1913 + $0x8] sm:$0xf]
        %v1917 = vld [vmem:[%s1913 + $0xc] sm:$0xf]
        %v1918 = vld [vmem:[%s1913 + $0x10] sm:$0xf]
        %v1919 = vld [vmem:[%s1913 + $0x14] sm:$0xf]
        %v1920 = vld [vmem:[%s1913 + $0x18] sm:$0xf]
        %v1921 = vld [vmem:[%s1913 + $0x1c] sm:$0xf]
        %v1930 = vunpack.c.l.b16 %v1914
        %v1931 = vunpack.c.l.b16 %v1915
        %v1932 = vunpack.c.l.b16 %v1916
        %v1933 = vunpack.c.l.b16 %v1917
        %v1934 = vunpack.c.l.b16 %v1918
        %v1935 = vunpack.c.l.b16 %v1919
        %v1936 = vunpack.c.l.b16 %v1920
        %v1937 = vunpack.c.l.b16 %v1921
        %v1938 = vpack.c.b16 %v1931, %v1930
        %v1939 = vpack.c.b16 %v1933, %v1932
        %v1940 = vpack.c.b16 %v1935, %v1934
        %v1941 = vpack.c.b16 %v1937, %v1936
        %v1947 = vsel %vm1055, %v1912, 0
        %1949 = vmatprep.subr.bf16.mxu0 0
        %1950 = vmatpush1.bf16.msra.mxu0 0
        %1951 = vmatprep.subr.bf16.mxu0 0
        %1952 = vmatpush1.bf16.msra.mxu0 0
        %1953 = vmatprep.subr.bf16.mxu0 0
        %1954 = vmatpush1.bf16.msra.mxu0 0
        %1955 = vmatprep.subr.bf16.mxu0 0
        %1956 = vmatpush1.bf16.msra.mxu0 0
        %1957 = vmatprep.subr.bf16.mxu0 0
        %1958 = vmatpush1.bf16.msra.mxu0 %v1941
        %1959 = vmatprep.subr.bf16.mxu0 0
        %1960 = vmatpush1.bf16.msra.mxu0 %v1940
        %1961 = vmatprep.subr.bf16.mxu0 0
        %1962 = vmatpush1.bf16.msra.mxu0 %v1939
        %1963 = vmatprep.subr.bf16.mxu0 0
        %1964 = vmatpush1.bf16.msra.mxu0 %v1938
        %1965 = vmatprep.subr.bf16.mxu0 0
        %1966 = vmatpush2.bf16.msra.mxu0 0
        %1967 = vmatprep.subr.bf16.mxu0 0
        %1968 = vmatpush2.bf16.msra.mxu0 0
        %1969 = vmatprep.subr.bf16.mxu0 0
        %1970 = vmatpush2.bf16.msra.mxu0 0
        %1971 = vmatprep.subr.bf16.mxu0 0
        %1972 = vmatpush2.bf16.msra.mxu0 0
        %1973 = vmatprep.subr.bf16.mxu0 0
        %1974 = vmatpush2.bf16.msra.mxu0 0
        %1975 = vmatprep.subr.bf16.mxu0 0
        %1976 = vmatpush2.bf16.msra.mxu0 0
        %1977 = vmatprep.subr.bf16.mxu0 0
        %1978 = vmatpush2.bf16.msra.mxu0 0
        %1979 = vmatprep.subr.bf16.mxu0 0
        %1980 = vmatpush2.bf16.msra.mxu0 0
        %1981 = vmatprep.mubr.bf16.mxu0 0
        %1982 = vmatmul.mubr.bf16.gmra.mxu0 %v1947
        %v1983 = vpop.f32.mrf.mxu0
        %v1984 = vadd.f32 0.0, %v1983
        %v1985 = vpop.f32.mrf.mxu0
        %v1986 = vpop.f32.mrf.mxu0
        %v1987 = vadd.f32 0.0, %v1986
        %v1988 = vpop.f32.mrf.mxu0
        %1989 = vdwg.mxu0
        %v1998 = vunpack.c.l.b16 %v1852
        %v1999 = vunpack.c.l.b16 %v1853
        %v2000 = vunpack.c.l.b16 %v1854
        %v2001 = vunpack.c.l.b16 %v1855
        %v2002 = vunpack.c.l.b16 %v1856
        %v2003 = vunpack.c.l.b16 %v1857
        %v2004 = vunpack.c.l.b16 %v1858
        %v2005 = vunpack.c.l.b16 %v1859
        %v2006 = vpack.c.b16 %v1999, %v1998
        %v2007 = vpack.c.b16 %v2001, %v2000
        %v2008 = vpack.c.b16 %v2003, %v2002
        %v2009 = vpack.c.b16 %v2005, %v2004
        %v2015 = vsel %vm1055, %v1851, 0
        %2017 = vmatprep.subr.bf16.mxu0 0
        %2018 = vmatpush1.bf16.msra.mxu0 0
        %2019 = vmatprep.subr.bf16.mxu0 0
        %2020 = vmatpush1.bf16.msra.mxu0 0
        %2021 = vmatprep.subr.bf16.mxu0 0
        %2022 = vmatpush1.bf16.msra.mxu0 0
        %2023 = vmatprep.subr.bf16.mxu0 0
        %2024 = vmatpush1.bf16.msra.mxu0 0
        %2025 = vmatprep.subr.bf16.mxu0 0
        %2026 = vmatpush1.bf16.msra.mxu0 %v2009
        %2027 = vmatprep.subr.bf16.mxu0 0
        %2028 = vmatpush1.bf16.msra.mxu0 %v2008
        %2029 = vmatprep.subr.bf16.mxu0 0
        %2030 = vmatpush1.bf16.msra.mxu0 %v2007
        %2031 = vmatprep.subr.bf16.mxu0 0
        %2032 = vmatpush1.bf16.msra.mxu0 %v2006
        %2033 = vmatprep.subr.bf16.mxu0 0
        %2034 = vmatpush2.bf16.msra.mxu0 0
        %2035 = vmatprep.subr.bf16.mxu0 0
        %2036 = vmatpush2.bf16.msra.mxu0 0
        %2037 = vmatprep.subr.bf16.mxu0 0
        %2038 = vmatpush2.bf16.msra.mxu0 0
        %2039 = vmatprep.subr.bf16.mxu0 0
        %2040 = vmatpush2.bf16.msra.mxu0 0
        %2041 = vmatprep.subr.bf16.mxu0 0
        %2042 = vmatpush2.bf16.msra.mxu0 0
        %2043 = vmatprep.subr.bf16.mxu0 0
        %2044 = vmatpush2.bf16.msra.mxu0 0
        %2045 = vmatprep.subr.bf16.mxu0 0
        %2046 = vmatpush2.bf16.msra.mxu0 0
        %2047 = vmatprep.subr.bf16.mxu0 0
        %2048 = vmatpush2.bf16.msra.mxu0 0
        %2049 = vmatprep.mubr.bf16.mxu0 0
        %2050 = vmatmul.mubr.bf16.gmra.mxu0 %v2015
        %v2051 = vpop.f32.mrf.mxu0
        %v2052 = vadd.f32 %v1984, %v2051
        %v2053 = vpop.f32.mrf.mxu0
        %v2054 = vpop.f32.mrf.mxu0
        %v2055 = vadd.f32 %v1987, %v2054
        %v2056 = vpop.f32.mrf.mxu0
        %2057 = vdwg.mxu0
        %v2058 = vld [vmem:[#allocation13] sm:$0x1]
        %v2060 = vlaneseq
        %v2061 = vshrl.u32 %v2060, 7
        %v2062 = vsub.s32 0, %v2061
        %v2063 = vrot.slane %v2058, %v2062
        %v2065 = vadd.f32 %v2052, %v2063
        %v2066 = vadd.f32 %v2055, %v2063
        %v2067 = vpack.c.bf16 %v2066, %v2065
        %v2068 = vld [vmem:[#allocation6] sm:$0xf]
        %v2069 = vld [vmem:[#allocation6 + $0x4] sm:$0xf]
        %v2072 = vunpack.c.l.b16 %v2068
        %v2073 = vunpack.c.l.b16 %v2069
        %v2074 = vpack.c.b16 %v2073, %v2072
        %v2076 = vsel %vm933, %v2074, 0
        %2078 = vmatprep.subr.bf16.mxu0 0
        %2079 = vmatpush1.bf16.msra.mxu0 0
        %2080 = vmatprep.subr.bf16.mxu0 0
        %2081 = vmatpush1.bf16.msra.mxu0 0
        %2082 = vmatprep.subr.bf16.mxu0 0
        %2083 = vmatpush1.bf16.msra.mxu0 0
        %2084 = vmatprep.subr.bf16.mxu0 0
        %2085 = vmatpush1.bf16.msra.mxu0 0
        %2086 = vmatprep.subr.bf16.mxu0 0
        %2087 = vmatpush1.bf16.msra.mxu0 0
        %2088 = vmatprep.subr.bf16.mxu0 0
        %2089 = vmatpush1.bf16.msra.mxu0 0
        %2090 = vmatprep.subr.bf16.mxu0 0
        %2091 = vmatpush1.bf16.msra.mxu0 0
        %2092 = vmatprep.subr.bf16.mxu0 0
        %2093 = vmatpush1.bf16.msra.mxu0 %v931
        %2094 = vmatprep.subr.bf16.mxu0 0
        %2095 = vmatpush2.bf16.msra.mxu0 0
        %2096 = vmatprep.subr.bf16.mxu0 0
        %2097 = vmatpush2.bf16.msra.mxu0 0
        %2098 = vmatprep.subr.bf16.mxu0 0
        %2099 = vmatpush2.bf16.msra.mxu0 0
        %2100 = vmatprep.subr.bf16.mxu0 0
        %2101 = vmatpush2.bf16.msra.mxu0 0
        %2102 = vmatprep.subr.bf16.mxu0 0
        %2103 = vmatpush2.bf16.msra.mxu0 0
        %2104 = vmatprep.subr.bf16.mxu0 0
        %2105 = vmatpush2.bf16.msra.mxu0 0
        %2106 = vmatprep.subr.bf16.mxu0 0
        %2107 = vmatpush2.bf16.msra.mxu0 0
        %2108 = vmatprep.subr.bf16.mxu0 0
        %2109 = vmatpush2.bf16.msra.mxu0 0
        %2110 = vmatprep.mubr.bf16.mxu0 0
        %2111 = vmatmul.mubr.bf16.gmra.mxu0 %v2076
        %v2112 = vpop.f32.mrf.mxu0
        %v2113 = vadd.f32 0.0, %v2112
        %v2114 = vpop.f32.mrf.mxu0
        %v2115 = vpop.f32.mrf.mxu0
        %v2116 = vadd.f32 0.0, %v2115
        %v2117 = vpop.f32.mrf.mxu0
        %2118 = vdwg.mxu0
        %v2119 = vpack.c.bf16 %v2116, %v2113
        %2120 = vmatprep.subr.bf16.mxu0 0
        %2121 = vmatpush1.bf16.msra.mxu0 0
        %2122 = vmatprep.subr.bf16.mxu0 0
        %2123 = vmatpush1.bf16.msra.mxu0 0
        %2124 = vmatprep.subr.bf16.mxu0 0
        %2125 = vmatpush1.bf16.msra.mxu0 0
        %2126 = vmatprep.subr.bf16.mxu0 0
        %2127 = vmatpush1.bf16.msra.mxu0 0
        %2128 = vmatprep.subr.bf16.mxu0 0
        %2129 = vmatpush1.bf16.msra.mxu0 0
        %2130 = vmatprep.subr.bf16.mxu0 0
        %2131 = vmatpush1.bf16.msra.mxu0 0
        %2132 = vmatprep.subr.bf16.mxu0 0
        %2133 = vmatpush1.bf16.msra.mxu0 0
        %2134 = vmatprep.subr.bf16.mxu0 0
        %2135 = vmatpush1.bf16.msra.mxu0 %v2067
        %2136 = vmatprep.subr.bf16.mxu0 0
        %2137 = vmatpush2.bf16.msra.mxu0 0
        %2138 = vmatprep.subr.bf16.mxu0 0
        %2139 = vmatpush2.bf16.msra.mxu0 0
        %2140 = vmatprep.subr.bf16.mxu0 0
        %2141 = vmatpush2.bf16.msra.mxu0 0
        %2142 = vmatprep.subr.bf16.mxu0 0
        %2143 = vmatpush2.bf16.msra.mxu0 0
        %2144 = vmatprep.subr.bf16.mxu0 0
        %2145 = vmatpush2.bf16.msra.mxu0 0
        %2146 = vmatprep.subr.bf16.mxu0 0
        %2147 = vmatpush2.bf16.msra.mxu0 0
        %2148 = vmatprep.subr.bf16.mxu0 0
        %2149 = vmatpush2.bf16.msra.mxu0 0
        %2150 = vmatprep.subr.bf16.mxu0 0
        %2151 = vmatpush2.bf16.msra.mxu0 0
        %2152 = vmatprep.mubr.bf16.mxu0 0
        %2153 = vmatmul.mubr.bf16.gmra.mxu0 %v2076
        %v2154 = vpop.f32.mrf.mxu0
        %v2155 = vadd.f32 0.0, %v2154
        %v2156 = vpop.f32.mrf.mxu0
        %v2157 = vpop.f32.mrf.mxu0
        %v2158 = vadd.f32 0.0, %v2157
        %v2159 = vpop.f32.mrf.mxu0
        %2160 = vdwg.mxu0
        %v2161 = vpack.c.bf16 %v2158, %v2155
        %v2162 = vld [vmem:[%s16] sm:$0xf]
        %v2163 = vld [vmem:[%s16 + $0x4] sm:$0xf]
        %v2164 = vld [vmem:[%s16 + $0x8] sm:$0xf]
        %v2165 = vld [vmem:[%s16 + $0xc] sm:$0xf]
        %v2166 = vld [vmem:[%s16 + $0x10] sm:$0xf]
        %v2167 = vld [vmem:[%s16 + $0x14] sm:$0xf]
        %v2168 = vld [vmem:[%s16 + $0x18] sm:$0xf]
        %v2169 = vld [vmem:[%s16 + $0x1c] sm:$0xf]
        %v2170 = vld [vmem:[%s17] sm:$0xf]
        %v2171 = vld [vmem:[%s17 + $0x4] sm:$0xf]
        %v2172 = vld [vmem:[%s17 + $0x8] sm:$0xf]
        %v2173 = vld [vmem:[%s17 + $0xc] sm:$0xf]
        %v2174 = vld [vmem:[%s17 + $0x10] sm:$0xf]
        %v2175 = vld [vmem:[%s17 + $0x14] sm:$0xf]
        %v2176 = vld [vmem:[%s17 + $0x18] sm:$0xf]
        %v2177 = vld [vmem:[%s17 + $0x1c] sm:$0xf]
        %v2186 = vunpack.c.l.b16 %v2170
        %v2187 = vunpack.c.l.b16 %v2171
        %v2188 = vunpack.c.l.b16 %v2172
        %v2189 = vunpack.c.l.b16 %v2173
        %v2190 = vunpack.c.l.b16 %v2174
        %v2191 = vunpack.c.l.b16 %v2175
        %v2192 = vunpack.c.l.b16 %v2176
        %v2193 = vunpack.c.l.b16 %v2177
        %v2194 = vpack.c.b16 %v2187, %v2186
        %v2195 = vpack.c.b16 %v2189, %v2188
        %v2196 = vpack.c.b16 %v2191, %v2190
        %v2197 = vpack.c.b16 %v2193, %v2192
        %v2203 = vsel %vm1055, %v2161, 0
        %2205 = vmatprep.subr.bf16.mxu0 0
        %2206 = vmatpush1.bf16.msra.mxu0 0
        %2207 = vmatprep.subr.bf16.mxu0 0
        %2208 = vmatpush1.bf16.msra.mxu0 0
        %2209 = vmatprep.subr.bf16.mxu0 0
        %2210 = vmatpush1.bf16.msra.mxu0 0
        %2211 = vmatprep.subr.bf16.mxu0 0
        %2212 = vmatpush1.bf16.msra.mxu0 0
        %2213 = vmatprep.subr.bf16.mxu0 0
        %2214 = vmatpush1.bf16.msra.mxu0 %v2197
        %2215 = vmatprep.subr.bf16.mxu0 0
        %2216 = vmatpush1.bf16.msra.mxu0 %v2196
        %2217 = vmatprep.subr.bf16.mxu0 0
        %2218 = vmatpush1.bf16.msra.mxu0 %v2195
        %2219 = vmatprep.subr.bf16.mxu0 0
        %2220 = vmatpush1.bf16.msra.mxu0 %v2194
        %2221 = vmatprep.subr.bf16.mxu0 0
        %2222 = vmatpush2.bf16.msra.mxu0 0
        %2223 = vmatprep.subr.bf16.mxu0 0
        %2224 = vmatpush2.bf16.msra.mxu0 0
        %2225 = vmatprep.subr.bf16.mxu0 0
        %2226 = vmatpush2.bf16.msra.mxu0 0
        %2227 = vmatprep.subr.bf16.mxu0 0
        %2228 = vmatpush2.bf16.msra.mxu0 0
        %2229 = vmatprep.subr.bf16.mxu0 0
        %2230 = vmatpush2.bf16.msra.mxu0 0
        %2231 = vmatprep.subr.bf16.mxu0 0
        %2232 = vmatpush2.bf16.msra.mxu0 0
        %2233 = vmatprep.subr.bf16.mxu0 0
        %2234 = vmatpush2.bf16.msra.mxu0 0
        %2235 = vmatprep.subr.bf16.mxu0 0
        %2236 = vmatpush2.bf16.msra.mxu0 0
        %2237 = vmatprep.mubr.bf16.mxu0 0
        %2238 = vmatmul.mubr.bf16.gmra.mxu0 %v2203
        %v2239 = vpop.f32.mrf.mxu0
        %v2240 = vadd.f32 0.0, %v2239
        %v2241 = vpop.f32.mrf.mxu0
        %v2242 = vpop.f32.mrf.mxu0
        %v2243 = vadd.f32 0.0, %v2242
        %v2244 = vpop.f32.mrf.mxu0
        %2245 = vdwg.mxu0
        %v2254 = vunpack.c.l.b16 %v2162
        %v2255 = vunpack.c.l.b16 %v2163
        %v2256 = vunpack.c.l.b16 %v2164
        %v2257 = vunpack.c.l.b16 %v2165
        %v2258 = vunpack.c.l.b16 %v2166
        %v2259 = vunpack.c.l.b16 %v2167
        %v2260 = vunpack.c.l.b16 %v2168
        %v2261 = vunpack.c.l.b16 %v2169
        %v2262 = vpack.c.b16 %v2255, %v2254
        %v2263 = vpack.c.b16 %v2257, %v2256
        %v2264 = vpack.c.b16 %v2259, %v2258
        %v2265 = vpack.c.b16 %v2261, %v2260
        %v2271 = vsel %vm1055, %v2119, 0
        %2273 = vmatprep.subr.bf16.mxu0 0
        %2274 = vmatpush1.bf16.msra.mxu0 0
        %2275 = vmatprep.subr.bf16.mxu0 0
        %2276 = vmatpush1.bf16.msra.mxu0 0
        %2277 = vmatprep.subr.bf16.mxu0 0
        %2278 = vmatpush1.bf16.msra.mxu0 0
        %2279 = vmatprep.subr.bf16.mxu0 0
        %2280 = vmatpush1.bf16.msra.mxu0 0
        %2281 = vmatprep.subr.bf16.mxu0 0
        %2282 = vmatpush1.bf16.msra.mxu0 %v2265
        %2283 = vmatprep.subr.bf16.mxu0 0
        %2284 = vmatpush1.bf16.msra.mxu0 %v2264
        %2285 = vmatprep.subr.bf16.mxu0 0
        %2286 = vmatpush1.bf16.msra.mxu0 %v2263
        %2287 = vmatprep.subr.bf16.mxu0 0
        %2288 = vmatpush1.bf16.msra.mxu0 %v2262
        %2289 = vmatprep.subr.bf16.mxu0 0
        %2290 = vmatpush2.bf16.msra.mxu0 0
        %2291 = vmatprep.subr.bf16.mxu0 0
        %2292 = vmatpush2.bf16.msra.mxu0 0
        %2293 = vmatprep.subr.bf16.mxu0 0
        %2294 = vmatpush2.bf16.msra.mxu0 0
        %2295 = vmatprep.subr.bf16.mxu0 0
        %2296 = vmatpush2.bf16.msra.mxu0 0
        %2297 = vmatprep.subr.bf16.mxu0 0
        %2298 = vmatpush2.bf16.msra.mxu0 0
        %2299 = vmatprep.subr.bf16.mxu0 0
        %2300 = vmatpush2.bf16.msra.mxu0 0
        %2301 = vmatprep.subr.bf16.mxu0 0
        %2302 = vmatpush2.bf16.msra.mxu0 0
        %2303 = vmatprep.subr.bf16.mxu0 0
        %2304 = vmatpush2.bf16.msra.mxu0 0
        %2305 = vmatprep.mubr.bf16.mxu0 0
        %2306 = vmatmul.mubr.bf16.gmra.mxu0 %v2271
        %v2307 = vpop.f32.mrf.mxu0
        %v2308 = vadd.f32 %v2240, %v2307
        %v2309 = vpop.f32.mrf.mxu0
        %v2310 = vpop.f32.mrf.mxu0
        %v2311 = vadd.f32 %v2243, %v2310
        %v2312 = vpop.f32.mrf.mxu0
        %2313 = vdwg.mxu0
        %s2314 = scalar_lea.vmem %s16, 32
        %v2315 = vld [vmem:[%s2314] sm:$0xf]
        %v2316 = vld [vmem:[%s2314 + $0x4] sm:$0xf]
        %v2317 = vld [vmem:[%s2314 + $0x8] sm:$0xf]
        %v2318 = vld [vmem:[%s2314 + $0xc] sm:$0xf]
        %v2319 = vld [vmem:[%s2314 + $0x10] sm:$0xf]
        %v2320 = vld [vmem:[%s2314 + $0x14] sm:$0xf]
        %v2321 = vld [vmem:[%s2314 + $0x18] sm:$0xf]
        %v2322 = vld [vmem:[%s2314 + $0x1c] sm:$0xf]
        %s2323 = scalar_lea.vmem %s17, 32
        %v2324 = vld [vmem:[%s2323] sm:$0xf]
        %v2325 = vld [vmem:[%s2323 + $0x4] sm:$0xf]
        %v2326 = vld [vmem:[%s2323 + $0x8] sm:$0xf]
        %v2327 = vld [vmem:[%s2323 + $0xc] sm:$0xf]
        %v2328 = vld [vmem:[%s2323 + $0x10] sm:$0xf]
        %v2329 = vld [vmem:[%s2323 + $0x14] sm:$0xf]
        %v2330 = vld [vmem:[%s2323 + $0x18] sm:$0xf]
        %v2331 = vld [vmem:[%s2323 + $0x1c] sm:$0xf]
        %v2340 = vunpack.c.l.b16 %v2324
        %v2341 = vunpack.c.l.b16 %v2325
        %v2342 = vunpack.c.l.b16 %v2326
        %v2343 = vunpack.c.l.b16 %v2327
        %v2344 = vunpack.c.l.b16 %v2328
        %v2345 = vunpack.c.l.b16 %v2329
        %v2346 = vunpack.c.l.b16 %v2330
        %v2347 = vunpack.c.l.b16 %v2331
        %v2348 = vpack.c.b16 %v2341, %v2340
        %v2349 = vpack.c.b16 %v2343, %v2342
        %v2350 = vpack.c.b16 %v2345, %v2344
        %v2351 = vpack.c.b16 %v2347, %v2346
        %v2357 = vsel %vm1055, %v2067, 0
        %2359 = vmatprep.subr.bf16.mxu0 0
        %2360 = vmatpush1.bf16.msra.mxu0 0
        %2361 = vmatprep.subr.bf16.mxu0 0
        %2362 = vmatpush1.bf16.msra.mxu0 0
        %2363 = vmatprep.subr.bf16.mxu0 0
        %2364 = vmatpush1.bf16.msra.mxu0 0
        %2365 = vmatprep.subr.bf16.mxu0 0
        %2366 = vmatpush1.bf16.msra.mxu0 0
        %2367 = vmatprep.subr.bf16.mxu0 0
        %2368 = vmatpush1.bf16.msra.mxu0 %v2351
        %2369 = vmatprep.subr.bf16.mxu0 0
        %2370 = vmatpush1.bf16.msra.mxu0 %v2350
        %2371 = vmatprep.subr.bf16.mxu0 0
        %2372 = vmatpush1.bf16.msra.mxu0 %v2349
        %2373 = vmatprep.subr.bf16.mxu0 0
        %2374 = vmatpush1.bf16.msra.mxu0 %v2348
        %2375 = vmatprep.subr.bf16.mxu0 0
        %2376 = vmatpush2.bf16.msra.mxu0 0
        %2377 = vmatprep.subr.bf16.mxu0 0
        %2378 = vmatpush2.bf16.msra.mxu0 0
        %2379 = vmatprep.subr.bf16.mxu0 0
        %2380 = vmatpush2.bf16.msra.mxu0 0
        %2381 = vmatprep.subr.bf16.mxu0 0
        %2382 = vmatpush2.bf16.msra.mxu0 0
        %2383 = vmatprep.subr.bf16.mxu0 0
        %2384 = vmatpush2.bf16.msra.mxu0 0
        %2385 = vmatprep.subr.bf16.mxu0 0
        %2386 = vmatpush2.bf16.msra.mxu0 0
        %2387 = vmatprep.subr.bf16.mxu0 0
        %2388 = vmatpush2.bf16.msra.mxu0 0
        %2389 = vmatprep.subr.bf16.mxu0 0
        %2390 = vmatpush2.bf16.msra.mxu0 0
        %2391 = vmatprep.mubr.bf16.mxu0 0
        %2392 = vmatmul.mubr.bf16.gmra.mxu0 %v2357
        %v2393 = vpop.f32.mrf.mxu0
        %v2394 = vadd.f32 0.0, %v2393
        %v2395 = vpop.f32.mrf.mxu0
        %v2396 = vpop.f32.mrf.mxu0
        %v2397 = vadd.f32 0.0, %v2396
        %v2398 = vpop.f32.mrf.mxu0
        %2399 = vdwg.mxu0
        %v2408 = vunpack.c.l.b16 %v2315
        %v2409 = vunpack.c.l.b16 %v2316
        %v2410 = vunpack.c.l.b16 %v2317
        %v2411 = vunpack.c.l.b16 %v2318
        %v2412 = vunpack.c.l.b16 %v2319
        %v2413 = vunpack.c.l.b16 %v2320
        %v2414 = vunpack.c.l.b16 %v2321
        %v2415 = vunpack.c.l.b16 %v2322
        %v2416 = vpack.c.b16 %v2409, %v2408
        %v2417 = vpack.c.b16 %v2411, %v2410
        %v2418 = vpack.c.b16 %v2413, %v2412
        %v2419 = vpack.c.b16 %v2415, %v2414
        %v2425 = vsel %vm1055, %v931, 0
        %2427 = vmatprep.subr.bf16.mxu0 0
        %2428 = vmatpush1.bf16.msra.mxu0 0
        %2429 = vmatprep.subr.bf16.mxu0 0
        %2430 = vmatpush1.bf16.msra.mxu0 0
        %2431 = vmatprep.subr.bf16.mxu0 0
        %2432 = vmatpush1.bf16.msra.mxu0 0
        %2433 = vmatprep.subr.bf16.mxu0 0
        %2434 = vmatpush1.bf16.msra.mxu0 0
        %2435 = vmatprep.subr.bf16.mxu0 0
        %2436 = vmatpush1.bf16.msra.mxu0 %v2419
        %2437 = vmatprep.subr.bf16.mxu0 0
        %2438 = vmatpush1.bf16.msra.mxu0 %v2418
        %2439 = vmatprep.subr.bf16.mxu0 0
        %2440 = vmatpush1.bf16.msra.mxu0 %v2417
        %2441 = vmatprep.subr.bf16.mxu0 0
        %2442 = vmatpush1.bf16.msra.mxu0 %v2416
        %2443 = vmatprep.subr.bf16.mxu0 0
        %2444 = vmatpush2.bf16.msra.mxu0 0
        %2445 = vmatprep.subr.bf16.mxu0 0
        %2446 = vmatpush2.bf16.msra.mxu0 0
        %2447 = vmatprep.subr.bf16.mxu0 0
        %2448 = vmatpush2.bf16.msra.mxu0 0
        %2449 = vmatprep.subr.bf16.mxu0 0
        %2450 = vmatpush2.bf16.msra.mxu0 0
        %2451 = vmatprep.subr.bf16.mxu0 0
        %2452 = vmatpush2.bf16.msra.mxu0 0
        %2453 = vmatprep.subr.bf16.mxu0 0
        %2454 = vmatpush2.bf16.msra.mxu0 0
        %2455 = vmatprep.subr.bf16.mxu0 0
        %2456 = vmatpush2.bf16.msra.mxu0 0
        %2457 = vmatprep.subr.bf16.mxu0 0
        %2458 = vmatpush2.bf16.msra.mxu0 0
        %2459 = vmatprep.mubr.bf16.mxu0 0
        %2460 = vmatmul.mubr.bf16.gmra.mxu0 %v2425
        %v2461 = vpop.f32.mrf.mxu0
        %v2462 = vadd.f32 %v2394, %v2461
        %v2463 = vpop.f32.mrf.mxu0
        %v2464 = vpop.f32.mrf.mxu0
        %v2465 = vadd.f32 %v2397, %v2464
        %v2466 = vpop.f32.mrf.mxu0
        %2467 = vdwg.mxu0
        %v2468 = vadd.f32 %v2308, %v2462
        %v2469 = vadd.f32 %v2311, %v2465
        %s2470 = scalar_lea.vmem [#allocation6], 16
        %v2471 = vld [vmem:[%s2470] sm:$0xf]
        %v2472 = vld [vmem:[%s2470 + $0x4] sm:$0xf]
        %v2475 = vunpack.c.l.b16 %v2471
        %v2476 = vunpack.c.l.b16 %v2472
        %v2477 = vpack.c.b16 %v2476, %v2475
        %v2479 = vsel %vm933, %v2477, 0
        %2481 = vmatprep.subr.bf16.mxu0 0
        %2482 = vmatpush1.bf16.msra.mxu0 0
        %2483 = vmatprep.subr.bf16.mxu0 0
        %2484 = vmatpush1.bf16.msra.mxu0 0
        %2485 = vmatprep.subr.bf16.mxu0 0
        %2486 = vmatpush1.bf16.msra.mxu0 0
        %2487 = vmatprep.subr.bf16.mxu0 0
        %2488 = vmatpush1.bf16.msra.mxu0 0
        %2489 = vmatprep.subr.bf16.mxu0 0
        %2490 = vmatpush1.bf16.msra.mxu0 0
        %2491 = vmatprep.subr.bf16.mxu0 0
        %2492 = vmatpush1.bf16.msra.mxu0 0
        %2493 = vmatprep.subr.bf16.mxu0 0
        %2494 = vmatpush1.bf16.msra.mxu0 0
        %2495 = vmatprep.subr.bf16.mxu0 0
        %2496 = vmatpush1.bf16.msra.mxu0 %v931
        %2497 = vmatprep.subr.bf16.mxu0 0
        %2498 = vmatpush2.bf16.msra.mxu0 0
        %2499 = vmatprep.subr.bf16.mxu0 0
        %2500 = vmatpush2.bf16.msra.mxu0 0
        %2501 = vmatprep.subr.bf16.mxu0 0
        %2502 = vmatpush2.bf16.msra.mxu0 0
        %2503 = vmatprep.subr.bf16.mxu0 0
        %2504 = vmatpush2.bf16.msra.mxu0 0
        %2505 = vmatprep.subr.bf16.mxu0 0
        %2506 = vmatpush2.bf16.msra.mxu0 0
        %2507 = vmatprep.subr.bf16.mxu0 0
        %2508 = vmatpush2.bf16.msra.mxu0 0
        %2509 = vmatprep.subr.bf16.mxu0 0
        %2510 = vmatpush2.bf16.msra.mxu0 0
        %2511 = vmatprep.subr.bf16.mxu0 0
        %2512 = vmatpush2.bf16.msra.mxu0 0
        %2513 = vmatprep.mubr.bf16.mxu0 0
        %2514 = vmatmul.mubr.bf16.gmra.mxu0 %v2479
        %v2515 = vpop.f32.mrf.mxu0
        %v2516 = vadd.f32 0.0, %v2515
        %v2517 = vpop.f32.mrf.mxu0
        %v2518 = vpop.f32.mrf.mxu0
        %v2519 = vadd.f32 0.0, %v2518
        %v2520 = vpop.f32.mrf.mxu0
        %2521 = vdwg.mxu0
        %v2522 = vpack.c.bf16 %v2519, %v2516
        %2523 = vmatprep.subr.bf16.mxu0 0
        %2524 = vmatpush1.bf16.msra.mxu0 0
        %2525 = vmatprep.subr.bf16.mxu0 0
        %2526 = vmatpush1.bf16.msra.mxu0 0
        %2527 = vmatprep.subr.bf16.mxu0 0
        %2528 = vmatpush1.bf16.msra.mxu0 0
        %2529 = vmatprep.subr.bf16.mxu0 0
        %2530 = vmatpush1.bf16.msra.mxu0 0
        %2531 = vmatprep.subr.bf16.mxu0 0
        %2532 = vmatpush1.bf16.msra.mxu0 0
        %2533 = vmatprep.subr.bf16.mxu0 0
        %2534 = vmatpush1.bf16.msra.mxu0 0
        %2535 = vmatprep.subr.bf16.mxu0 0
        %2536 = vmatpush1.bf16.msra.mxu0 0
        %2537 = vmatprep.subr.bf16.mxu0 0
        %2538 = vmatpush1.bf16.msra.mxu0 %v2067
        %2539 = vmatprep.subr.bf16.mxu0 0
        %2540 = vmatpush2.bf16.msra.mxu0 0
        %2541 = vmatprep.subr.bf16.mxu0 0
        %2542 = vmatpush2.bf16.msra.mxu0 0
        %2543 = vmatprep.subr.bf16.mxu0 0
        %2544 = vmatpush2.bf16.msra.mxu0 0
        %2545 = vmatprep.subr.bf16.mxu0 0
        %2546 = vmatpush2.bf16.msra.mxu0 0
        %2547 = vmatprep.subr.bf16.mxu0 0
        %2548 = vmatpush2.bf16.msra.mxu0 0
        %2549 = vmatprep.subr.bf16.mxu0 0
        %2550 = vmatpush2.bf16.msra.mxu0 0
        %2551 = vmatprep.subr.bf16.mxu0 0
        %2552 = vmatpush2.bf16.msra.mxu0 0
        %2553 = vmatprep.subr.bf16.mxu0 0
        %2554 = vmatpush2.bf16.msra.mxu0 0
        %2555 = vmatprep.mubr.bf16.mxu0 0
        %2556 = vmatmul.mubr.bf16.gmra.mxu0 %v2479
        %v2557 = vpop.f32.mrf.mxu0
        %v2558 = vadd.f32 0.0, %v2557
        %v2559 = vpop.f32.mrf.mxu0
        %v2560 = vpop.f32.mrf.mxu0
        %v2561 = vadd.f32 0.0, %v2560
        %v2562 = vpop.f32.mrf.mxu0
        %2563 = vdwg.mxu0
        %v2564 = vpack.c.bf16 %v2561, %v2558
        %s2565 = scalar_lea.vmem %s16, 64
        %v2566 = vld [vmem:[%s2565] sm:$0xf]
        %v2567 = vld [vmem:[%s2565 + $0x4] sm:$0xf]
        %v2568 = vld [vmem:[%s2565 + $0x8] sm:$0xf]
        %v2569 = vld [vmem:[%s2565 + $0xc] sm:$0xf]
        %v2570 = vld [vmem:[%s2565 + $0x10] sm:$0xf]
        %v2571 = vld [vmem:[%s2565 + $0x14] sm:$0xf]
        %v2572 = vld [vmem:[%s2565 + $0x18] sm:$0xf]
        %v2573 = vld [vmem:[%s2565 + $0x1c] sm:$0xf]
        %s2574 = scalar_lea.vmem %s17, 64
        %v2575 = vld [vmem:[%s2574] sm:$0xf]
        %v2576 = vld [vmem:[%s2574 + $0x4] sm:$0xf]
        %v2577 = vld [vmem:[%s2574 + $0x8] sm:$0xf]
        %v2578 = vld [vmem:[%s2574 + $0xc] sm:$0xf]
        %v2579 = vld [vmem:[%s2574 + $0x10] sm:$0xf]
        %v2580 = vld [vmem:[%s2574 + $0x14] sm:$0xf]
        %v2581 = vld [vmem:[%s2574 + $0x18] sm:$0xf]
        %v2582 = vld [vmem:[%s2574 + $0x1c] sm:$0xf]
        %v2591 = vunpack.c.l.b16 %v2575
        %v2592 = vunpack.c.l.b16 %v2576
        %v2593 = vunpack.c.l.b16 %v2577
        %v2594 = vunpack.c.l.b16 %v2578
        %v2595 = vunpack.c.l.b16 %v2579
        %v2596 = vunpack.c.l.b16 %v2580
        %v2597 = vunpack.c.l.b16 %v2581
        %v2598 = vunpack.c.l.b16 %v2582
        %v2599 = vpack.c.b16 %v2592, %v2591
        %v2600 = vpack.c.b16 %v2594, %v2593
        %v2601 = vpack.c.b16 %v2596, %v2595
        %v2602 = vpack.c.b16 %v2598, %v2597
        %v2608 = vsel %vm1055, %v2564, 0
        %2610 = vmatprep.subr.bf16.mxu0 0
        %2611 = vmatpush1.bf16.msra.mxu0 0
        %2612 = vmatprep.subr.bf16.mxu0 0
        %2613 = vmatpush1.bf16.msra.mxu0 0
        %2614 = vmatprep.subr.bf16.mxu0 0
        %2615 = vmatpush1.bf16.msra.mxu0 0
        %2616 = vmatprep.subr.bf16.mxu0 0
        %2617 = vmatpush1.bf16.msra.mxu0 0
        %2618 = vmatprep.subr.bf16.mxu0 0
        %2619 = vmatpush1.bf16.msra.mxu0 %v2602
        %2620 = vmatprep.subr.bf16.mxu0 0
        %2621 = vmatpush1.bf16.msra.mxu0 %v2601
        %2622 = vmatprep.subr.bf16.mxu0 0
        %2623 = vmatpush1.bf16.msra.mxu0 %v2600
        %2624 = vmatprep.subr.bf16.mxu0 0
        %2625 = vmatpush1.bf16.msra.mxu0 %v2599
        %2626 = vmatprep.subr.bf16.mxu0 0
        %2627 = vmatpush2.bf16.msra.mxu0 0
        %2628 = vmatprep.subr.bf16.mxu0 0
        %2629 = vmatpush2.bf16.msra.mxu0 0
        %2630 = vmatprep.subr.bf16.mxu0 0
        %2631 = vmatpush2.bf16.msra.mxu0 0
        %2632 = vmatprep.subr.bf16.mxu0 0
        %2633 = vmatpush2.bf16.msra.mxu0 0
        %2634 = vmatprep.subr.bf16.mxu0 0
        %2635 = vmatpush2.bf16.msra.mxu0 0
        %2636 = vmatprep.subr.bf16.mxu0 0
        %2637 = vmatpush2.bf16.msra.mxu0 0
        %2638 = vmatprep.subr.bf16.mxu0 0
        %2639 = vmatpush2.bf16.msra.mxu0 0
        %2640 = vmatprep.subr.bf16.mxu0 0
        %2641 = vmatpush2.bf16.msra.mxu0 0
        %2642 = vmatprep.mubr.bf16.mxu0 0
        %2643 = vmatmul.mubr.bf16.gmra.mxu0 %v2608
        %v2644 = vpop.f32.mrf.mxu0
        %v2645 = vadd.f32 0.0, %v2644
        %v2646 = vpop.f32.mrf.mxu0
        %v2647 = vpop.f32.mrf.mxu0
        %v2648 = vadd.f32 0.0, %v2647
        %v2649 = vpop.f32.mrf.mxu0
        %2650 = vdwg.mxu0
        %v2659 = vunpack.c.l.b16 %v2566
        %v2660 = vunpack.c.l.b16 %v2567
        %v2661 = vunpack.c.l.b16 %v2568
        %v2662 = vunpack.c.l.b16 %v2569
        %v2663 = vunpack.c.l.b16 %v2570
        %v2664 = vunpack.c.l.b16 %v2571
        %v2665 = vunpack.c.l.b16 %v2572
        %v2666 = vunpack.c.l.b16 %v2573
        %v2667 = vpack.c.b16 %v2660, %v2659
        %v2668 = vpack.c.b16 %v2662, %v2661
        %v2669 = vpack.c.b16 %v2664, %v2663
        %v2670 = vpack.c.b16 %v2666, %v2665
        %v2676 = vsel %vm1055, %v2522, 0
        %2678 = vmatprep.subr.bf16.mxu0 0
        %2679 = vmatpush1.bf16.msra.mxu0 0
        %2680 = vmatprep.subr.bf16.mxu0 0
        %2681 = vmatpush1.bf16.msra.mxu0 0
        %2682 = vmatprep.subr.bf16.mxu0 0
        %2683 = vmatpush1.bf16.msra.mxu0 0
        %2684 = vmatprep.subr.bf16.mxu0 0
        %2685 = vmatpush1.bf16.msra.mxu0 0
        %2686 = vmatprep.subr.bf16.mxu0 0
        %2687 = vmatpush1.bf16.msra.mxu0 %v2670
        %2688 = vmatprep.subr.bf16.mxu0 0
        %2689 = vmatpush1.bf16.msra.mxu0 %v2669
        %2690 = vmatprep.subr.bf16.mxu0 0
        %2691 = vmatpush1.bf16.msra.mxu0 %v2668
        %2692 = vmatprep.subr.bf16.mxu0 0
        %2693 = vmatpush1.bf16.msra.mxu0 %v2667
        %2694 = vmatprep.subr.bf16.mxu0 0
        %2695 = vmatpush2.bf16.msra.mxu0 0
        %2696 = vmatprep.subr.bf16.mxu0 0
        %2697 = vmatpush2.bf16.msra.mxu0 0
        %2698 = vmatprep.subr.bf16.mxu0 0
        %2699 = vmatpush2.bf16.msra.mxu0 0
        %2700 = vmatprep.subr.bf16.mxu0 0
        %2701 = vmatpush2.bf16.msra.mxu0 0
        %2702 = vmatprep.subr.bf16.mxu0 0
        %2703 = vmatpush2.bf16.msra.mxu0 0
        %2704 = vmatprep.subr.bf16.mxu0 0
        %2705 = vmatpush2.bf16.msra.mxu0 0
        %2706 = vmatprep.subr.bf16.mxu0 0
        %2707 = vmatpush2.bf16.msra.mxu0 0
        %2708 = vmatprep.subr.bf16.mxu0 0
        %2709 = vmatpush2.bf16.msra.mxu0 0
        %2710 = vmatprep.mubr.bf16.mxu0 0
        %2711 = vmatmul.mubr.bf16.gmra.mxu0 %v2676
        %v2712 = vpop.f32.mrf.mxu0
        %v2713 = vadd.f32 %v2645, %v2712
        %v2714 = vpop.f32.mrf.mxu0
        %v2715 = vpop.f32.mrf.mxu0
        %v2716 = vadd.f32 %v2648, %v2715
        %v2717 = vpop.f32.mrf.mxu0
        %2718 = vdwg.mxu0
        %v2719 = vadd.f32 %v2468, %v2713
        %v2720 = vadd.f32 %v2469, %v2716
        %v2721 = vld [vmem:[%s18] sm:$0x1]
        %v2723 = vlaneseq
        %v2724 = vshrl.u32 %v2723, 7
        %v2725 = vsub.s32 0, %v2724
        %v2726 = vrot.slane %v2721, %v2725
        %v2728 = vmul.f32 %v2719, %v2726
        %v2729 = vmul.f32 %v2720, %v2726
        %v2730 = vld [vmem:[#allocation15] sm:$0x1]
        %v2732 = vlaneseq
        %v2733 = vshrl.u32 %v2732, 7
        %v2734 = vsub.s32 0, %v2733
        %v2735 = vrot.slane %v2730, %v2734
        %v2737 = vadd.f32 %v2728, %v2735
        %v2738 = vadd.f32 %v2729, %v2735
        %v2739 = vmax.f32 %v2737, 0.0
        %v2740 = vmax.f32 %v2738, 0.0
        %v2741 = vpack.c.bf16 %v2740, %v2739
        %2742 = vmatprep.subr.bf16.mxu0 0
        %2743 = vmatpush1.bf16.msra.mxu0 0
        %2744 = vmatprep.subr.bf16.mxu0 0
        %2745 = vmatpush1.bf16.msra.mxu0 0
        %2746 = vmatprep.subr.bf16.mxu0 0
        %2747 = vmatpush1.bf16.msra.mxu0 0
        %2748 = vmatprep.subr.bf16.mxu0 0
        %2749 = vmatpush1.bf16.msra.mxu0 0
        %2750 = vmatprep.subr.bf16.mxu0 0
        %2751 = vmatpush1.bf16.msra.mxu0 0
        %2752 = vmatprep.subr.bf16.mxu0 0
        %2753 = vmatpush1.bf16.msra.mxu0 0
        %2754 = vmatprep.subr.bf16.mxu0 0
        %2755 = vmatpush1.bf16.msra.mxu0 0
        %2756 = vmatprep.subr.bf16.mxu0 0
        %2757 = vmatpush1.bf16.msra.mxu0 %v2741
        %2758 = vmatprep.subr.bf16.mxu0 0
        %2759 = vmatpush2.bf16.msra.mxu0 0
        %2760 = vmatprep.subr.bf16.mxu0 0
        %2761 = vmatpush2.bf16.msra.mxu0 0
        %2762 = vmatprep.subr.bf16.mxu0 0
        %2763 = vmatpush2.bf16.msra.mxu0 0
        %2764 = vmatprep.subr.bf16.mxu0 0
        %2765 = vmatpush2.bf16.msra.mxu0 0
        %2766 = vmatprep.subr.bf16.mxu0 0
        %2767 = vmatpush2.bf16.msra.mxu0 0
        %2768 = vmatprep.subr.bf16.mxu0 0
        %2769 = vmatpush2.bf16.msra.mxu0 0
        %2770 = vmatprep.subr.bf16.mxu0 0
        %2771 = vmatpush2.bf16.msra.mxu0 0
        %2772 = vmatprep.subr.bf16.mxu0 0
        %2773 = vmatpush2.bf16.msra.mxu0 0
        %2774 = vmatprep.mubr.bf16.mxu0 0
        %2775 = vmatmul.mubr.bf16.gmra.mxu0 %v2076
        %v2776 = vpop.f32.mrf.mxu0
        %v2777 = vadd.f32 0.0, %v2776
        %v2778 = vpop.f32.mrf.mxu0
        %v2779 = vpop.f32.mrf.mxu0
        %v2780 = vadd.f32 0.0, %v2779
        %v2781 = vpop.f32.mrf.mxu0
        %2782 = vdwg.mxu0
        %v2783 = vpack.c.bf16 %v2780, %v2777
        %v2784 = vld [vmem:[%s20] sm:$0xf]
        %v2785 = vld [vmem:[%s20 + $0x4] sm:$0xf]
        %v2786 = vld [vmem:[%s20 + $0x8] sm:$0xf]
        %v2787 = vld [vmem:[%s20 + $0xc] sm:$0xf]
        %v2788 = vld [vmem:[%s20 + $0x10] sm:$0xf]
        %v2789 = vld [vmem:[%s20 + $0x14] sm:$0xf]
        %v2790 = vld [vmem:[%s20 + $0x18] sm:$0xf]
        %v2791 = vld [vmem:[%s20 + $0x1c] sm:$0xf]
        %s2792 = scalar_lea.vmem %s20, 32
        %v2793 = vld [vmem:[%s2792] sm:$0xf]
        %v2794 = vld [vmem:[%s2792 + $0x4] sm:$0xf]
        %v2795 = vld [vmem:[%s2792 + $0x8] sm:$0xf]
        %v2796 = vld [vmem:[%s2792 + $0xc] sm:$0xf]
        %v2797 = vld [vmem:[%s2792 + $0x10] sm:$0xf]
        %v2798 = vld [vmem:[%s2792 + $0x14] sm:$0xf]
        %v2799 = vld [vmem:[%s2792 + $0x18] sm:$0xf]
        %v2800 = vld [vmem:[%s2792 + $0x1c] sm:$0xf]
        %v2809 = vunpack.c.l.b16 %v2793
        %v2810 = vunpack.c.l.b16 %v2794
        %v2811 = vunpack.c.l.b16 %v2795
        %v2812 = vunpack.c.l.b16 %v2796
        %v2813 = vunpack.c.l.b16 %v2797
        %v2814 = vunpack.c.l.b16 %v2798
        %v2815 = vunpack.c.l.b16 %v2799
        %v2816 = vunpack.c.l.b16 %v2800
        %v2817 = vpack.c.b16 %v2810, %v2809
        %v2818 = vpack.c.b16 %v2812, %v2811
        %v2819 = vpack.c.b16 %v2814, %v2813
        %v2820 = vpack.c.b16 %v2816, %v2815
        %v2826 = vsel %vm1055, %v2741, 0
        %2828 = vmatprep.subr.bf16.mxu0 0
        %2829 = vmatpush1.bf16.msra.mxu0 0
        %2830 = vmatprep.subr.bf16.mxu0 0
        %2831 = vmatpush1.bf16.msra.mxu0 0
        %2832 = vmatprep.subr.bf16.mxu0 0
        %2833 = vmatpush1.bf16.msra.mxu0 0
        %2834 = vmatprep.subr.bf16.mxu0 0
        %2835 = vmatpush1.bf16.msra.mxu0 0
        %2836 = vmatprep.subr.bf16.mxu0 0
        %2837 = vmatpush1.bf16.msra.mxu0 %v2820
        %2838 = vmatprep.subr.bf16.mxu0 0
        %2839 = vmatpush1.bf16.msra.mxu0 %v2819
        %2840 = vmatprep.subr.bf16.mxu0 0
        %2841 = vmatpush1.bf16.msra.mxu0 %v2818
        %2842 = vmatprep.subr.bf16.mxu0 0
        %2843 = vmatpush1.bf16.msra.mxu0 %v2817
        %2844 = vmatprep.subr.bf16.mxu0 0
        %2845 = vmatpush2.bf16.msra.mxu0 0
        %2846 = vmatprep.subr.bf16.mxu0 0
        %2847 = vmatpush2.bf16.msra.mxu0 0
        %2848 = vmatprep.subr.bf16.mxu0 0
        %2849 = vmatpush2.bf16.msra.mxu0 0
        %2850 = vmatprep.subr.bf16.mxu0 0
        %2851 = vmatpush2.bf16.msra.mxu0 0
        %2852 = vmatprep.subr.bf16.mxu0 0
        %2853 = vmatpush2.bf16.msra.mxu0 0
        %2854 = vmatprep.subr.bf16.mxu0 0
        %2855 = vmatpush2.bf16.msra.mxu0 0
        %2856 = vmatprep.subr.bf16.mxu0 0
        %2857 = vmatpush2.bf16.msra.mxu0 0
        %2858 = vmatprep.subr.bf16.mxu0 0
        %2859 = vmatpush2.bf16.msra.mxu0 0
        %2860 = vmatprep.mubr.bf16.mxu0 0
        %2861 = vmatmul.mubr.bf16.gmra.mxu0 %v2826
        %v2862 = vpop.f32.mrf.mxu0
        %v2863 = vadd.f32 0.0, %v2862
        %v2864 = vpop.f32.mrf.mxu0
        %v2865 = vpop.f32.mrf.mxu0
        %v2866 = vadd.f32 0.0, %v2865
        %v2867 = vpop.f32.mrf.mxu0
        %2868 = vdwg.mxu0
        %v2877 = vunpack.c.l.b16 %v2784
        %v2878 = vunpack.c.l.b16 %v2785
        %v2879 = vunpack.c.l.b16 %v2786
        %v2880 = vunpack.c.l.b16 %v2787
        %v2881 = vunpack.c.l.b16 %v2788
        %v2882 = vunpack.c.l.b16 %v2789
        %v2883 = vunpack.c.l.b16 %v2790
        %v2884 = vunpack.c.l.b16 %v2791
        %v2885 = vpack.c.b16 %v2878, %v2877
        %v2886 = vpack.c.b16 %v2880, %v2879
        %v2887 = vpack.c.b16 %v2882, %v2881
        %v2888 = vpack.c.b16 %v2884, %v2883
        %v2894 = vsel %vm1055, %v2783, 0
        %2896 = vmatprep.subr.bf16.mxu0 0
        %2897 = vmatpush1.bf16.msra.mxu0 0
        %2898 = vmatprep.subr.bf16.mxu0 0
        %2899 = vmatpush1.bf16.msra.mxu0 0
        %2900 = vmatprep.subr.bf16.mxu0 0
        %2901 = vmatpush1.bf16.msra.mxu0 0
        %2902 = vmatprep.subr.bf16.mxu0 0
        %2903 = vmatpush1.bf16.msra.mxu0 0
        %2904 = vmatprep.subr.bf16.mxu0 0
        %2905 = vmatpush1.bf16.msra.mxu0 %v2888
        %2906 = vmatprep.subr.bf16.mxu0 0
        %2907 = vmatpush1.bf16.msra.mxu0 %v2887
        %2908 = vmatprep.subr.bf16.mxu0 0
        %2909 = vmatpush1.bf16.msra.mxu0 %v2886
        %2910 = vmatprep.subr.bf16.mxu0 0
        %2911 = vmatpush1.bf16.msra.mxu0 %v2885
        %2912 = vmatprep.subr.bf16.mxu0 0
        %2913 = vmatpush2.bf16.msra.mxu0 0
        %2914 = vmatprep.subr.bf16.mxu0 0
        %2915 = vmatpush2.bf16.msra.mxu0 0
        %2916 = vmatprep.subr.bf16.mxu0 0
        %2917 = vmatpush2.bf16.msra.mxu0 0
        %2918 = vmatprep.subr.bf16.mxu0 0
        %2919 = vmatpush2.bf16.msra.mxu0 0
        %2920 = vmatprep.subr.bf16.mxu0 0
        %2921 = vmatpush2.bf16.msra.mxu0 0
        %2922 = vmatprep.subr.bf16.mxu0 0
        %2923 = vmatpush2.bf16.msra.mxu0 0
        %2924 = vmatprep.subr.bf16.mxu0 0
        %2925 = vmatpush2.bf16.msra.mxu0 0
        %2926 = vmatprep.subr.bf16.mxu0 0
        %2927 = vmatpush2.bf16.msra.mxu0 0
        %2928 = vmatprep.mubr.bf16.mxu0 0
        %2929 = vmatmul.mubr.bf16.gmra.mxu0 %v2894
        %v2930 = vpop.f32.mrf.mxu0
        %v2931 = vadd.f32 %v2863, %v2930
        %v2932 = vpop.f32.mrf.mxu0
        %v2933 = vpop.f32.mrf.mxu0
        %v2934 = vadd.f32 %v2866, %v2933
        %v2935 = vpop.f32.mrf.mxu0
        %2936 = vdwg.mxu0
        %2937 = vmatprep.subr.bf16.mxu0 0
        %2938 = vmatpush1.bf16.msra.mxu0 0
        %2939 = vmatprep.subr.bf16.mxu0 0
        %2940 = vmatpush1.bf16.msra.mxu0 0
        %2941 = vmatprep.subr.bf16.mxu0 0
        %2942 = vmatpush1.bf16.msra.mxu0 0
        %2943 = vmatprep.subr.bf16.mxu0 0
        %2944 = vmatpush1.bf16.msra.mxu0 0
        %2945 = vmatprep.subr.bf16.mxu0 0
        %2946 = vmatpush1.bf16.msra.mxu0 0
        %2947 = vmatprep.subr.bf16.mxu0 0
        %2948 = vmatpush1.bf16.msra.mxu0 0
        %2949 = vmatprep.subr.bf16.mxu0 0
        %2950 = vmatpush1.bf16.msra.mxu0 0
        %2951 = vmatprep.subr.bf16.mxu0 0
        %2952 = vmatpush1.bf16.msra.mxu0 %v2741
        %2953 = vmatprep.subr.bf16.mxu0 0
        %2954 = vmatpush2.bf16.msra.mxu0 0
        %2955 = vmatprep.subr.bf16.mxu0 0
        %2956 = vmatpush2.bf16.msra.mxu0 0
        %2957 = vmatprep.subr.bf16.mxu0 0
        %2958 = vmatpush2.bf16.msra.mxu0 0
        %2959 = vmatprep.subr.bf16.mxu0 0
        %2960 = vmatpush2.bf16.msra.mxu0 0
        %2961 = vmatprep.subr.bf16.mxu0 0
        %2962 = vmatpush2.bf16.msra.mxu0 0
        %2963 = vmatprep.subr.bf16.mxu0 0
        %2964 = vmatpush2.bf16.msra.mxu0 0
        %2965 = vmatprep.subr.bf16.mxu0 0
        %2966 = vmatpush2.bf16.msra.mxu0 0
        %2967 = vmatprep.subr.bf16.mxu0 0
        %2968 = vmatpush2.bf16.msra.mxu0 0
        %2969 = vmatprep.mubr.bf16.mxu0 0
        %2970 = vmatmul.mubr.bf16.gmra.mxu0 %v2479
        %v2971 = vpop.f32.mrf.mxu0
        %v2972 = vadd.f32 0.0, %v2971
        %v2973 = vpop.f32.mrf.mxu0
        %v2974 = vpop.f32.mrf.mxu0
        %v2975 = vadd.f32 0.0, %v2974
        %v2976 = vpop.f32.mrf.mxu0
        %2977 = vdwg.mxu0
        %v2978 = vpack.c.bf16 %v2975, %v2972
        %s2979 = scalar_lea.vmem %s20, 64
        %v2980 = vld [vmem:[%s2979] sm:$0xf]
        %v2981 = vld [vmem:[%s2979 + $0x4] sm:$0xf]
        %v2982 = vld [vmem:[%s2979 + $0x8] sm:$0xf]
        %v2983 = vld [vmem:[%s2979 + $0xc] sm:$0xf]
        %v2984 = vld [vmem:[%s2979 + $0x10] sm:$0xf]
        %v2985 = vld [vmem:[%s2979 + $0x14] sm:$0xf]
        %v2986 = vld [vmem:[%s2979 + $0x18] sm:$0xf]
        %v2987 = vld [vmem:[%s2979 + $0x1c] sm:$0xf]
        %v2996 = vunpack.c.l.b16 %v2980
        %v2997 = vunpack.c.l.b16 %v2981
        %v2998 = vunpack.c.l.b16 %v2982
        %v2999 = vunpack.c.l.b16 %v2983
        %v3000 = vunpack.c.l.b16 %v2984
        %v3001 = vunpack.c.l.b16 %v2985
        %v3002 = vunpack.c.l.b16 %v2986
        %v3003 = vunpack.c.l.b16 %v2987
        %v3004 = vpack.c.b16 %v2997, %v2996
        %v3005 = vpack.c.b16 %v2999, %v2998
        %v3006 = vpack.c.b16 %v3001, %v3000
        %v3007 = vpack.c.b16 %v3003, %v3002
        %v3013 = vsel %vm1055, %v2978, 0
        %3015 = vmatprep.subr.bf16.mxu0 0
        %3016 = vmatpush1.bf16.msra.mxu0 0
        %3017 = vmatprep.subr.bf16.mxu0 0
        %3018 = vmatpush1.bf16.msra.mxu0 0
        %3019 = vmatprep.subr.bf16.mxu0 0
        %3020 = vmatpush1.bf16.msra.mxu0 0
        %3021 = vmatprep.subr.bf16.mxu0 0
        %3022 = vmatpush1.bf16.msra.mxu0 0
        %3023 = vmatprep.subr.bf16.mxu0 0
        %3024 = vmatpush1.bf16.msra.mxu0 %v3007
        %3025 = vmatprep.subr.bf16.mxu0 0
        %3026 = vmatpush1.bf16.msra.mxu0 %v3006
        %3027 = vmatprep.subr.bf16.mxu0 0
        %3028 = vmatpush1.bf16.msra.mxu0 %v3005
        %3029 = vmatprep.subr.bf16.mxu0 0
        %3030 = vmatpush1.bf16.msra.mxu0 %v3004
        %3031 = vmatprep.subr.bf16.mxu0 0
        %3032 = vmatpush2.bf16.msra.mxu0 0
        %3033 = vmatprep.subr.bf16.mxu0 0
        %3034 = vmatpush2.bf16.msra.mxu0 0
        %3035 = vmatprep.subr.bf16.mxu0 0
        %3036 = vmatpush2.bf16.msra.mxu0 0
        %3037 = vmatprep.subr.bf16.mxu0 0
        %3038 = vmatpush2.bf16.msra.mxu0 0
        %3039 = vmatprep.subr.bf16.mxu0 0
        %3040 = vmatpush2.bf16.msra.mxu0 0
        %3041 = vmatprep.subr.bf16.mxu0 0
        %3042 = vmatpush2.bf16.msra.mxu0 0
        %3043 = vmatprep.subr.bf16.mxu0 0
        %3044 = vmatpush2.bf16.msra.mxu0 0
        %3045 = vmatprep.subr.bf16.mxu0 0
        %3046 = vmatpush2.bf16.msra.mxu0 0
        %3047 = vmatprep.mubr.bf16.mxu0 0
        %3048 = vmatmul.mubr.bf16.gmra.mxu0 %v3013
        %v3049 = vpop.f32.mrf.mxu0
        %v3050 = vadd.f32 0.0, %v3049
        %v3051 = vpop.f32.mrf.mxu0
        %v3052 = vpop.f32.mrf.mxu0
        %v3053 = vadd.f32 0.0, %v3052
        %v3054 = vpop.f32.mrf.mxu0
        %3055 = vdwg.mxu0
        %v3056 = vadd.f32 %v2931, %v3050
        %v3057 = vadd.f32 %v2934, %v3053
        %v3058 = vld [vmem:[%s21] sm:$0x1]
        %v3060 = vlaneseq
        %v3061 = vshrl.u32 %v3060, 7
        %v3062 = vsub.s32 0, %v3061
        %v3063 = vrot.slane %v3058, %v3062
        %v3065 = vmul.f32 %v3056, %v3063
        %v3066 = vmul.f32 %v3057, %v3063
        %v3067 = vld [vmem:[#allocation16] sm:$0x1]
        %v3069 = vlaneseq
        %v3070 = vshrl.u32 %v3069, 7
        %v3071 = vsub.s32 0, %v3070
        %v3072 = vrot.slane %v3067, %v3071
        %v3074 = vadd.f32 %v3065, %v3072
        %v3075 = vadd.f32 %v3066, %v3072
        %v3076 = vmax.f32 %v3074, 0.0
        %v3077 = vmax.f32 %v3075, 0.0
        %v3078 = vpack.c.bf16 %v3077, %v3076
        %v3079 = vld [vmem:[#allocation18] sm:$0xf]
        %v3080 = vld [vmem:[#allocation18 + $0x4] sm:$0xf]
        %v3081 = vld [vmem:[#allocation18 + $0x8] sm:$0xf]
        %v3082 = vld [vmem:[#allocation18 + $0xc] sm:$0xf]
        %v3083 = vld [vmem:[#allocation18 + $0x10] sm:$0xf]
        %v3084 = vld [vmem:[#allocation18 + $0x14] sm:$0xf]
        %v3085 = vld [vmem:[#allocation18 + $0x18] sm:$0xf]
        %v3086 = vld [vmem:[#allocation18 + $0x1c] sm:$0xf]
        %v3087 = vld [vmem:[#allocation19] sm:$0x1]
        %v3089 = vlaneseq
        %v3090 = vshrl.u32 %v3089, 7
        %v3091 = vsub.s32 0, %v3090
        %v3092 = vrot.slane %v3087, %v3091
        %v3102 = vunpack.c.l.b16 %v3079
        %v3103 = vunpack.c.l.b16 %v3080
        %v3104 = vunpack.c.l.b16 %v3081
        %v3105 = vunpack.c.l.b16 %v3082
        %v3106 = vunpack.c.l.b16 %v3083
        %v3107 = vunpack.c.l.b16 %v3084
        %v3108 = vunpack.c.l.b16 %v3085
        %v3109 = vunpack.c.l.b16 %v3086
        %v3110 = vpack.c.b16 %v3103, %v3102
        %v3111 = vpack.c.b16 %v3105, %v3104
        %v3112 = vpack.c.b16 %v3107, %v3106
        %v3113 = vpack.c.b16 %v3109, %v3108
        %v3119 = vsel %vm1055, %v3078, 0
        %3121 = vmatprep.subr.bf16.mxu0 0
        %3122 = vmatpush1.bf16.msra.mxu0 0
        %3123 = vmatprep.subr.bf16.mxu0 0
        %3124 = vmatpush1.bf16.msra.mxu0 0
        %3125 = vmatprep.subr.bf16.mxu0 0
        %3126 = vmatpush1.bf16.msra.mxu0 0
        %3127 = vmatprep.subr.bf16.mxu0 0
        %3128 = vmatpush1.bf16.msra.mxu0 0
        %3129 = vmatprep.subr.bf16.mxu0 0
        %3130 = vmatpush1.bf16.msra.mxu0 %v3113
        %3131 = vmatprep.subr.bf16.mxu0 0
        %3132 = vmatpush1.bf16.msra.mxu0 %v3112
        %3133 = vmatprep.subr.bf16.mxu0 0
        %3134 = vmatpush1.bf16.msra.mxu0 %v3111
        %3135 = vmatprep.subr.bf16.mxu0 0
        %3136 = vmatpush1.bf16.msra.mxu0 %v3110
        %3137 = vmatprep.subr.bf16.mxu0 0
        %3138 = vmatpush2.bf16.msra.mxu0 0
        %3139 = vmatprep.subr.bf16.mxu0 0
        %3140 = vmatpush2.bf16.msra.mxu0 0
        %3141 = vmatprep.subr.bf16.mxu0 0
        %3142 = vmatpush2.bf16.msra.mxu0 0
        %3143 = vmatprep.subr.bf16.mxu0 0
        %3144 = vmatpush2.bf16.msra.mxu0 0
        %3145 = vmatprep.subr.bf16.mxu0 0
        %3146 = vmatpush2.bf16.msra.mxu0 0
        %3147 = vmatprep.subr.bf16.mxu0 0
        %3148 = vmatpush2.bf16.msra.mxu0 0
        %3149 = vmatprep.subr.bf16.mxu0 0
        %3150 = vmatpush2.bf16.msra.mxu0 0
        %3151 = vmatprep.subr.bf16.mxu0 0
        %3152 = vmatpush2.bf16.msra.mxu0 0
        %3153 = vmatprep.mubr.bf16.mxu0 0
        %3154 = vmatmul.mubr.bf16.gmra.mxu0 %v3119
        %v3155 = vpop.f32.mrf.mxu0
        %v3156 = vadd.f32 %v3092, %v3155
        %v3157 = vpop.f32.mrf.mxu0
        %v3158 = vpop.f32.mrf.mxu0
        %v3159 = vadd.f32 %v3092, %v3158
        %v3160 = vpop.f32.mrf.mxu0
        %3161 = vdwg.mxu0
        %3162 = vst.msk [vmem:[%s927] sm:$0xff] %vm1244, %v3156
        %3163 = vst.msk [vmem:[%s927 + $0x8] sm:$0xff] %vm1244, %v3159
        %p3164 = scmp.lt.s32.totalorder %s43, 1
        %s3165 = scalar_select %p3164, %s43, 1
        %s3166 = smul.addr %s3165, 2
        %s3167 = smul.addr %s3166, 8
        %s3168 = scalar_lea.vmem %s25, %s3167
        // Predicated region
        $region169: #{net_convert1_forward.1} parent=119 // pred_check
          %p3169 = pneg %p591
        $region170: #{net_convert1_forward.1} parent=119 // pred_check_branch
          %3171 = sbr.rel (%p3169) target = $region172
        $region171: #{net_convert1_forward.1} parent=119 // pred_region
          _
        $region172: #{net_convert1_forward.1} parent=119 // pred_fallthru
          _
      $region120: #{net_convert1_forward.1} parent=5 // pred_fallthru
        _
      %p3172 = scmp.le.s32.totalorder 2, %s38
      // Predicated region
      $region173: #{net_convert1_forward.1} parent=5 // pred_check
        %p3173 = pneg %p3172
      $region174: #{net_convert1_forward.1} parent=5 // pred_check_branch
        %3175 = sbr.rel (%p3173) target = $region176
      $region175: #{net_convert1_forward.1} parent=5 // pred_region
        %s3176 = ssub.s32 %s38, 2
        // Predicated region
        $region177: #{net_convert1_forward.1} parent=175 // pred_check
          %p3177 = pneg %p597
        $region178: #{net_convert1_forward.1} parent=175 // pred_check_branch
          %3179 = sbr.rel (%p3177) target = $region180
        $region179: #{net_convert1_forward.1} parent=175 // pred_region
          %p3180 = scmp.lt.s32.totalorder %s44, 1
          %s3181 = scalar_select %p3180, %s44, 1
          %s3182 = smul.addr %s3181, 2
          %s3183 = smul.addr %s3182, 8
          %s3184 = scalar_lea.vmem %s25, %s3183
        $region180: #{net_convert1_forward.1} parent=175 // pred_fallthru
          _
      $region176: #{net_convert1_forward.1} parent=5 // pred_fallthru
        _
    $region6: #{net_convert1_forward.1} parent=1 // loop_footer
      %s42 = sadd.s32 1, %s38
    $region7: #{net_convert1_forward.1} parent=1 // loop_footer_branch
      %37 = sbr.rel target = $region3
    $region8: #{net_convert1_forward.1} parent=1 // loop_exit
      _
    %3185 = vsyncpa [#allocation3], 1
    %s3186 = scalar_lea.sflag [#allocation3], 1
    %3187 = vsyncpa %s3186, 1
    %3188 = vsyncpa [#allocation5], 1
    %3189 = vsyncpa [#allocation8], 1
    %3190 = vsyncpa [#allocation11], 1
    %3191 = vsyncpa [#allocation14], 1
    %3192 = vsyncpa [#allocation17], 1
    %3193 = vsyncpa [#allocation20], 1

</llo_original>
